<compile_context>
chip_gen: v7x
topology: tpu7x:2x2x1
jax: 0.10.0
libtpu: 0.0.40
codegen_flags: <defaults>
</compile_context>

<pallas_src>
import functools

import jax
import jax.numpy as jnp
import numpy as np
from jax.experimental import pallas as pl
from jax.experimental.pallas import tpu as pltpu


def _layernorm(x, gamma, beta, eps):
    """LayerNorm over the last dim (f32), affine folded into one scale/shift."""
    mu = jnp.mean(x, axis=-1, keepdims=True)
    xc = x - mu
    var = jnp.mean(xc * xc, axis=-1, keepdims=True)
    inv = jax.lax.rsqrt(var + eps)
    return xc * (inv * gamma) + beta


def _erf(x, approx):
    # Abramowitz & Stegun 7.1.26 (max abs error ~1.5e-7).  exp + reciprocal go to
    # the EUP slot; everything else is VPU fma/select.
    p = 0.3275911
    a1, a2, a3, a4, a5 = 0.254829592, -0.284496736, 1.421413741, -1.453152027, 1.061405429
    ax = jnp.abs(x)
    t = pl.reciprocal(1.0 + p * ax, approx=approx)
    poly = ((((a5 * t + a4) * t + a3) * t + a2) * t + a1) * t
    r = 1.0 - poly * jnp.exp(-ax * ax)
    return jnp.where(x >= 0.0, r, -r)


def _gelu_exact(x, approx):
    # nn.GELU() default is the exact erf form (NOT the tanh approximation).
    return 0.5 * x * (1.0 + _erf(x * 0.7071067811865476, approx))


def block_kernel(x_ref, mask_ref, wqkv_ref, wproj_ref, wfc1_ref, wfc2_ref, vecs_ref,
                 *outs_and_scratch, num_heads, eps, approx, return_attn):
    """One batch tile (Bt rows of the batch) per grid step; whole Block stays in VMEM."""
    if return_attn:
        xout_ref, attn_ref, o_ref = outs_and_scratch
    else:
        (xout_ref, o_ref), attn_ref = outs_and_scratch, None

    bt, n, c = x_ref.shape
    hd = c // num_heads
    m = bt * n
    wdt = wqkv_ref.dtype                              # matmul operand dtype (bf16 or f32)

    # Packed per-channel vectors (single DMA): rows 0..5 are C-wide, row 6 is hidden-wide.
    g1 = vecs_ref[0:1, :c]
    b1 = vecs_ref[1:2, :c]
    g2 = vecs_ref[2:3, :c]
    b2 = vecs_ref[3:4, :c]
    bproj = vecs_ref[4:5, :c]
    bfc2 = vecs_ref[5:6, :c]
    bfc1 = vecs_ref[6:7, :wfc1_ref.shape[-1]]

    x = x_ref[...].reshape(m, c)                      # (Bt*N, C) f32

    # ---- LayerNorm 1 (f32) ----
    xn = _layernorm(x, g1, b1, eps)

    # ---- fused QKV projection: one (M, C) @ (C, 3C) MXU matmul; scale pre-folded into Q ----
    qkv = jnp.dot(xn.astype(wdt), wqkv_ref[...], preferred_element_type=jnp.float32)  # (M, 3C)

    # ---- key-padding mask as one additive bias (hoisted out of the head loop) ----
    # mask==1 -> -1e30 (finite, so max-subtract never produces -inf-(-inf)=NaN).
    mask_bias = mask_ref[...].astype(jnp.float32) * jnp.float32(-1e30)   # (Bt, 1, N)

    # ---- multi-head attention; (batch-in-tile x heads) statically unrolled ----
    for b in range(bt):
        r0 = b * n
        mb = mask_bias[b]                                               # (1, N) broadcasts over queries
        for h in range(num_heads):
            qh = qkv[r0:r0 + n, h * hd:(h + 1) * hd]                    # (N, hd), already scaled
            kh = qkv[r0:r0 + n, c + h * hd: c + (h + 1) * hd]
            vh = qkv[r0:r0 + n, 2 * c + h * hd: 2 * c + (h + 1) * hd]
            s = jnp.einsum('qd,kd->qk', qh.astype(wdt), kh.astype(wdt),
                           preferred_element_type=jnp.float32) + mb     # (N, N)
            s = s - jnp.max(s, axis=-1, keepdims=True)
            p = jnp.exp(s)
            inv = pl.reciprocal(jnp.sum(p, axis=-1, keepdims=True), approx=approx)  # (N,1) EUP
            a = p * inv                                                  # softmax over keys
            if attn_ref is not None:
                attn_ref[b, h] = a
            # write this head's output directly into the fused-output scratch (no concatenate)
            o_ref[r0:r0 + n, h * hd:(h + 1) * hd] = jnp.dot(
                a.astype(wdt), vh.astype(wdt), preferred_element_type=jnp.float32)

    # ---- output projection + residual (dropout / drop_path are identity in eval) ----
    o = o_ref[...]                                                       # (M, C) f32
    x1 = x + jnp.dot(o.astype(wdt), wproj_ref[...],
                     preferred_element_type=jnp.float32) + bproj

    # ---- LayerNorm 2 + MLP (fc1 -> exact GELU -> fc2) + residual ----
    x1n = _layernorm(x1, g2, b2, eps)
    h1 = jnp.dot(x1n.astype(wdt), wfc1_ref[...],
                 preferred_element_type=jnp.float32) + bfc1
    h1 = _gelu_exact(h1, approx)
    y2 = jnp.dot(h1.astype(wdt), wfc2_ref[...],
                 preferred_element_type=jnp.float32) + bfc2
    xout_ref[...] = (x1 + y2).reshape(bt, n, c)


def _pick_batch_tile(B, N, target_rows=256):
    """Grow the per-step batch tile while the MXU M-dim is under-filled, but keep at
    least two grid steps (v7x megacore) whenever the batch allows it."""
    bt = 1
    while (B % (bt * 2) == 0) and (bt * N < target_rows) and (B // (bt * 2) >= 2):
        bt *= 2
    return bt


def block_forward(x, mask, params, *, num_heads, eps=1e-5,
                  compute_dtype=jnp.bfloat16, batch_tile=None, return_attn=True):
    """x: (B, N, C) f32; mask: (B, N) bool (True = masked/ignored key position).

    Weights are stored (in, out) i.e. transposed relative to torch.nn.Linear.weight.
    Returns (x_out (B, N, C) f32, attn (B, H, N, N) f32 or None).
    """
    w_qkv, w_proj, b_proj, w_fc1, b_fc1, w_fc2, b_fc2, g1, b1, g2, b2 = params
    B, N, C = x.shape
    H = num_heads
    hidden = w_fc1.shape[-1]
    scale = (C // H) ** -0.5

    # Fold the 1/sqrt(hd) attention scale into the Q columns of the fused QKV weight
    # (free: removes H*N^2 VPU fmuls per batch element from the kernel).
    w_qkv_f = w_qkv.astype(jnp.float32).at[:, :C].multiply(scale)

    wdt = jnp.dtype(compute_dtype)
    exact = (wdt == jnp.dtype(jnp.float32))
    w_qkv_c = w_qkv_f.astype(wdt)
    w_proj_c = w_proj.astype(wdt)
    w_fc1_c = w_fc1.astype(wdt)
    w_fc2_c = w_fc2.astype(wdt)

    # Pack the seven small per-channel vectors into a single (8, W) f32 array:
    # one BlockSpec / DMA instead of seven padded-to-(8,128) tiles.
    W = max(C, hidden)
    vecs = jnp.zeros((8, W), jnp.float32)
    for i, v in enumerate((g1, b1, g2, b2, b_proj, b_fc2)):
        vecs = vecs.at[i, :C].set(v.reshape(-1).astype(jnp.float32))
    vecs = vecs.at[6, :hidden].set(b_fc1.reshape(-1).astype(jnp.float32))

    bt = batch_tile or _pick_batch_tile(B, N)
    assert B % bt == 0, "batch_tile must divide the batch"

    mask3 = mask.astype(jnp.int32).reshape(B, 1, N)

    kernel = functools.partial(block_kernel, num_heads=H, eps=eps,
                               approx=not exact, return_attn=return_attn)
    full2 = lambda b: (0, 0)   # weights / packed vecs: same block every step (no re-DMA)

    out_shapes = [jax.ShapeDtypeStruct((B, N, C), jnp.float32)]
    out_specs = [pl.BlockSpec((bt, N, C), lambda b: (b, 0, 0))]
    if return_attn:
        out_shapes.append(jax.ShapeDtypeStruct((B, H, N, N), jnp.float32))
        out_specs.append(pl.BlockSpec((bt, H, N, N), lambda b: (b, 0, 0, 0)))

    outs = pl.pallas_call(
        kernel,
        out_shape=tuple(out_shapes),
        grid=(B // bt,),
        in_specs=[
            pl.BlockSpec((bt, N, C), lambda b: (b, 0, 0)),   # x, per-batch-tile
            pl.BlockSpec((bt, 1, N), lambda b: (b, 0, 0)),   # key-padding mask
            pl.BlockSpec((C, 3 * C), full2),                 # fused QKV weight (scale folded)
            pl.BlockSpec((C, C), full2),                     # attn proj weight
            pl.BlockSpec((C, hidden), full2),                # fc1 weight
            pl.BlockSpec((hidden, C), full2),                # fc2 weight
            pl.BlockSpec((8, W), full2),                     # packed LN params + biases
        ],
        out_specs=tuple(out_specs),
        scratch_shapes=[pltpu.VMEM((bt * N, C), jnp.float32)],   # fused attention output
        compiler_params=pltpu.CompilerParams(
            dimension_semantics=("parallel",)),              # batch tiles -> v7x megacore
    )(x.astype(jnp.float32), mask3, w_qkv_c, w_proj_c, w_fc1_c, w_fc2_c, vecs)

    if return_attn:
        x_out, attn = outs
        return x_out, attn
    x_out = outs[0] if isinstance(outs, (tuple, list)) else outs
    return x_out, None


def block_reference(x, mask, params, *, num_heads, eps=1e-5):
    """Pure-JAX f32 reference mirroring the PyTorch Block.forward (eval mode)."""
    w_qkv, w_proj, b_proj, w_fc1, b_fc1, w_fc2, b_fc2, g1, b1, g2, b2 = params
    B, N, C = x.shape
    H = num_heads
    hd = C // H
    scale = hd ** -0.5

    def ln(v, g, b):
        mu = v.mean(-1, keepdims=True)
        var = ((v - mu) ** 2).mean(-1, keepdims=True)
        return (v - mu) * jax.lax.rsqrt(var + eps) * g + b

    xn = ln(x, g1, b1)
    qkv = (xn @ w_qkv).reshape(B, N, 3, H, hd).transpose(2, 0, 3, 1, 4)
    q, k, v = qkv[0], qkv[1], qkv[2]                               # (B, H, N, hd)
    s = jnp.einsum('bhqd,bhkd->bhqk', q, k) * scale
    s = jnp.where(mask[:, None, None, :], -jnp.inf, s)
    s = s - s.max(-1, keepdims=True)
    p = jnp.exp(s)
    attn = p / p.sum(-1, keepdims=True)
    o = jnp.einsum('bhqk,bhkd->bqhd', attn, v).reshape(B, N, C)
    x1 = x + o @ w_proj + b_proj
    x1n = ln(x1, g2, b2)
    h1 = jax.nn.gelu(x1n @ w_fc1 + b_fc1, approximate=False)
    return x1 + h1 @ w_fc2 + b_fc2, attn


if __name__ == "__main__":
    # Small but lane-dense shapes (C, hidden multiples of 128): dim=128, heads=4, mlp_ratio=4.
    B, N, C, H = 2, 32, 128, 4
    hidden = 4 * C

    key = jax.random.PRNGKey(0)
    ks = jax.random.split(key, 12)
    std = 0.05
    x = jax.random.normal(ks[0], (B, N, C), jnp.float32)
    # key-padding mask: True = masked key (never a fully-masked row)
    mask = jnp.zeros((B, N), dtype=bool).at[0, -5:].set(True).at[1, 7].set(True)

    # Weights stored (in, out) == torch Linear weight transposed; qkv_bias=False (module default).
    w_qkv = std * jax.random.normal(ks[1], (C, 3 * C), jnp.float32)
    w_proj = std * jax.random.normal(ks[2], (C, C), jnp.float32)
    b_proj = std * jax.random.normal(ks[3], (1, C), jnp.float32)
    w_fc1 = std * jax.random.normal(ks[4], (C, hidden), jnp.float32)
    b_fc1 = std * jax.random.normal(ks[5], (1, hidden), jnp.float32)
    w_fc2 = std * jax.random.normal(ks[6], (hidden, C), jnp.float32)
    b_fc2 = std * jax.random.normal(ks[7], (1, C), jnp.float32)
    g1 = 1.0 + 0.1 * jax.random.normal(ks[8], (1, C), jnp.float32)
    b1 = 0.1 * jax.random.normal(ks[9], (1, C), jnp.float32)
    g2 = 1.0 + 0.1 * jax.random.normal(ks[10], (1, C), jnp.float32)
    b2 = 0.1 * jax.random.normal(ks[11], (1, C), jnp.float32)
    params = (w_qkv, w_proj, b_proj, w_fc1, b_fc1, w_fc2, b_fc2, g1, b1, g2, b2)

    with jax.default_matmul_precision("highest"):
        ref_out, ref_attn = block_reference(x, mask, params, num_heads=H)

    # Fast path: bf16 MXU operands, approx EUP reciprocals (v6e/v7x configuration).
    out, attn = block_forward(x, mask, params, num_heads=H)
    jax.block_until_ready(out)
    jax.block_until_ready(attn)
    np.testing.assert_allclose(np.asarray(out), np.asarray(ref_out), rtol=5e-2, atol=5e-2)
    np.testing.assert_allclose(np.asarray(attn), np.asarray(ref_attn), rtol=1e-1, atol=2e-2)

    # Exact path: f32 matmuls + exact reciprocals, verifies module semantics tightly.
    out32, attn32 = block_forward(x, mask, params, num_heads=H, compute_dtype=jnp.float32)
    jax.block_until_ready(out32)
    np.testing.assert_allclose(np.asarray(out32), np.asarray(ref_out), rtol=2e-4, atol=2e-4)
    np.testing.assert_allclose(np.asarray(attn32), np.asarray(ref_attn), rtol=2e-4, atol=2e-4)

    # attn-optional path (skips the H*N^2 HBM writeback when the maps are not needed).
    out_na, none_attn = block_forward(x, mask, params, num_heads=H, return_attn=False)
    jax.block_until_ready(out_na)
    assert none_attn is None
    np.testing.assert_allclose(np.asarray(out_na), np.asarray(out), rtol=1e-6, atol=1e-6)

    assert out.shape == (B, N, C) and attn.shape == (B, H, N, N)
    print("KERNEL_OK")
</pallas_src>

<mosaic_0001>
module attributes {stable_mosaic.version = 11 : i64} {
  func.func @block_kernel(%arg0: i32, %arg1: memref<1x32x128xf32, #tpu.memory_space<vmem>>, %arg2: memref<1x1x32xi32, #tpu.memory_space<vmem>>, %arg3: memref<128x384xbf16, #tpu.memory_space<vmem>>, %arg4: memref<128x128xbf16, #tpu.memory_space<vmem>>, %arg5: memref<128x512xbf16, #tpu.memory_space<vmem>>, %arg6: memref<512x128xbf16, #tpu.memory_space<vmem>>, %arg7: memref<8x512xf32, #tpu.memory_space<vmem>>, %arg8: memref<1x32x128xf32, #tpu.memory_space<vmem>>, %arg9: memref<1x4x32x32xf32, #tpu.memory_space<vmem>>, %arg10: memref<32x128xf32, #tpu.memory_space<vmem>>) attributes {dimension_semantics = [#tpu.dimension_semantics<parallel>], iteration_bounds = array<i64: 2>, scalar_prefetch = 0 : i64, scratch_operands = 1 : i64, tpu.core_type = #tpu.core_type<tc>, window_params = [{transform_indices = @transform_0, window_bounds = array<i64: 1, 32, 128>}, {transform_indices = @transform_1, window_bounds = array<i64: 1, 1, 32>}, {pipeline_mode = #tpu.pipeline_mode<synchronous>, transform_indices = @transform_2, window_bounds = array<i64: 128, 384>}, {pipeline_mode = #tpu.pipeline_mode<synchronous>, transform_indices = @transform_3, window_bounds = array<i64: 128, 128>}, {pipeline_mode = #tpu.pipeline_mode<synchronous>, transform_indices = @transform_4, window_bounds = array<i64: 128, 512>}, {pipeline_mode = #tpu.pipeline_mode<synchronous>, transform_indices = @transform_5, window_bounds = array<i64: 512, 128>}, {pipeline_mode = #tpu.pipeline_mode<synchronous>, transform_indices = @transform_6, window_bounds = array<i64: 8, 512>}, {transform_indices = @transform_7, window_bounds = array<i64: 1, 32, 128>}, {transform_indices = @transform_8, window_bounds = array<i64: 1, 4, 32, 32>}]} {
    %c0 = arith.constant 0 : index
    %c0_0 = arith.constant 0 : index
    %0 = vector.load %arg7[%c0, %c0_0] : memref<8x512xf32, #tpu.memory_space<vmem>>, vector<1x128xf32>
    %c1 = arith.constant 1 : index
    %c0_1 = arith.constant 0 : index
    %1 = vector.load %arg7[%c1, %c0_1] : memref<8x512xf32, #tpu.memory_space<vmem>>, vector<1x128xf32>
    %c2 = arith.constant 2 : index
    %c0_2 = arith.constant 0 : index
    %2 = vector.load %arg7[%c2, %c0_2] : memref<8x512xf32, #tpu.memory_space<vmem>>, vector<1x128xf32>
    %c3 = arith.constant 3 : index
    %c0_3 = arith.constant 0 : index
    %3 = vector.load %arg7[%c3, %c0_3] : memref<8x512xf32, #tpu.memory_space<vmem>>, vector<1x128xf32>
    %c4 = arith.constant 4 : index
    %c0_4 = arith.constant 0 : index
    %4 = vector.load %arg7[%c4, %c0_4] : memref<8x512xf32, #tpu.memory_space<vmem>>, vector<1x128xf32>
    %c5 = arith.constant 5 : index
    %c0_5 = arith.constant 0 : index
    %5 = vector.load %arg7[%c5, %c0_5] : memref<8x512xf32, #tpu.memory_space<vmem>>, vector<1x128xf32>
    %c6 = arith.constant 6 : index
    %c0_6 = arith.constant 0 : index
    %6 = vector.load %arg7[%c6, %c0_6] : memref<8x512xf32, #tpu.memory_space<vmem>>, vector<1x512xf32>
    %c0_7 = arith.constant 0 : index
    %c0_8 = arith.constant 0 : index
    %c0_9 = arith.constant 0 : index
    %7 = vector.load %arg1[%c0_7, %c0_8, %c0_9] : memref<1x32x128xf32, #tpu.memory_space<vmem>>, vector<1x32x128xf32>
    %8 = vector.shape_cast %7 : vector<1x32x128xf32> to vector<32x128xf32>
    %cst = arith.constant dense<0.000000e+00> : vector<32xf32>
    %9 = vector.multi_reduction <add>, %8, %cst [1] : vector<32x128xf32> to vector<32xf32>
    %10 = vector.shape_cast %9 : vector<32xf32> to vector<32x1xf32>
    %cst_10 = arith.constant 1.280000e+02 : f32
    %11 = vector.broadcast %cst_10 : f32 to vector<32x1xf32>
    %12 = arith.divf %10, %11 : vector<32x1xf32>
    %13 = vector.broadcast %12 : vector<32x1xf32> to vector<32x128xf32>
    %14 = arith.subf %8, %13 : vector<32x128xf32>
    %15 = arith.mulf %14, %14 : vector<32x128xf32>
    %cst_11 = arith.constant dense<0.000000e+00> : vector<32xf32>
    %16 = vector.multi_reduction <add>, %15, %cst_11 [1] : vector<32x128xf32> to vector<32xf32>
    %17 = vector.shape_cast %16 : vector<32xf32> to vector<32x1xf32>
    %cst_12 = arith.constant 1.280000e+02 : f32
    %18 = vector.broadcast %cst_12 : f32 to vector<32x1xf32>
    %19 = arith.divf %17, %18 : vector<32x1xf32>
    %cst_13 = arith.constant 9.99999974E-6 : f32
    %20 = vector.broadcast %cst_13 : f32 to vector<32x1xf32>
    %21 = arith.addf %19, %20 : vector<32x1xf32>
    %22 = math.rsqrt %21 : vector<32x1xf32>
    %23 = vector.broadcast %22 : vector<32x1xf32> to vector<32x128xf32>
    %24 = vector.broadcast %0 : vector<1x128xf32> to vector<32x128xf32>
    %25 = arith.mulf %23, %24 : vector<32x128xf32>
    %26 = arith.mulf %14, %25 : vector<32x128xf32>
    %27 = vector.broadcast %1 : vector<1x128xf32> to vector<32x128xf32>
    %28 = arith.addf %26, %27 : vector<32x128xf32>
    %29 = arith.truncf %28 : vector<32x128xf32> to vector<32x128xbf16>
    %c0_14 = arith.constant 0 : index
    %c0_15 = arith.constant 0 : index
    %30 = vector.load %arg3[%c0_14, %c0_15] : memref<128x384xbf16, #tpu.memory_space<vmem>>, vector<128x384xbf16>
    %cst_16 = arith.constant dense<0.000000e+00> : vector<32x384xf32>
    %31 = tpu.matmul %29, %30, %cst_16 {dimension_numbers = #tpu.dot_dimension_numbers<[1], [0], [0], [1], [0, 0, 1, 1], [], []>} : vector<32x128xbf16>, vector<128x384xbf16>, vector<32x384xf32> -> vector<32x384xf32>
    %c0_17 = arith.constant 0 : index
    %c0_18 = arith.constant 0 : index
    %c0_19 = arith.constant 0 : index
    %32 = vector.load %arg2[%c0_17, %c0_18, %c0_19] : memref<1x1x32xi32, #tpu.memory_space<vmem>>, vector<1x1x32xi32>
    %33 = arith.sitofp %32 : vector<1x1x32xi32> to vector<1x1x32xf32>
    %cst_20 = arith.constant -1.000000e+30 : f32
    %34 = vector.broadcast %cst_20 : f32 to vector<1x1x32xf32>
    %35 = arith.mulf %33, %34 : vector<1x1x32xf32>
    %36 = vector.shape_cast %35 : vector<1x1x32xf32> to vector<1x32xf32>
    %37 = vector.extract_strided_slice %31 {offsets = [0, 0], sizes = [32, 32], strides = [1, 1]} : vector<32x384xf32> to vector<32x32xf32>
    %38 = vector.extract_strided_slice %31 {offsets = [0, 128], sizes = [32, 32], strides = [1, 1]} : vector<32x384xf32> to vector<32x32xf32>
    %39 = vector.extract_strided_slice %31 {offsets = [0, 256], sizes = [32, 32], strides = [1, 1]} : vector<32x384xf32> to vector<32x32xf32>
    %40 = arith.truncf %37 : vector<32x32xf32> to vector<32x32xbf16>
    %41 = arith.truncf %38 : vector<32x32xf32> to vector<32x32xbf16>
    "tpu.trace_start"() <{level = 10 : i32, message = "qd,kd->qk"}> : () -> ()
    %cst_21 = arith.constant dense<0.000000e+00> : vector<32x32xf32>
    %42 = tpu.matmul %40, %41, %cst_21 {dimension_numbers = #tpu.dot_dimension_numbers<[1], [1], [0], [0], [0, 0, 1, 0], [], []>} : vector<32x32xbf16>, vector<32x32xbf16>, vector<32x32xf32> -> vector<32x32xf32>
    "tpu.trace_stop"() : () -> ()
    %43 = vector.broadcast %36 : vector<1x32xf32> to vector<32x32xf32>
    %44 = arith.addf %42, %43 : vector<32x32xf32>
    %cst_22 = arith.constant dense<0xFF800000> : vector<32xf32>
    %45 = vector.multi_reduction <maximumf>, %44, %cst_22 [1] : vector<32x32xf32> to vector<32xf32>
    %46 = vector.shape_cast %45 : vector<32xf32> to vector<32x1xf32>
    %47 = vector.broadcast %46 : vector<32x1xf32> to vector<32x32xf32>
    %48 = arith.subf %44, %47 : vector<32x32xf32>
    %49 = math.exp %48 : vector<32x32xf32>
    %cst_23 = arith.constant dense<0.000000e+00> : vector<32xf32>
    %50 = vector.multi_reduction <add>, %49, %cst_23 [1] : vector<32x32xf32> to vector<32xf32>
    %51 = vector.shape_cast %50 : vector<32xf32> to vector<32x1xf32>
    %52 = tpu.reciprocal %51 {approx = true} : vector<32x1xf32> -> vector<32x1xf32>
    %53 = vector.broadcast %52 : vector<32x1xf32> to vector<32x32xf32>
    %54 = arith.mulf %49, %53 : vector<32x32xf32>
    %c0_24 = arith.constant 0 : index
    %c0_25 = arith.constant 0 : index
    %c0_26 = arith.constant 0 : index
    %c0_27 = arith.constant 0 : index
    %55 = vector.load %arg9[%c0_24, %c0_25, %c0_26, %c0_27] : memref<1x4x32x32xf32, #tpu.memory_space<vmem>>, vector<1x1x32x32xf32>
    %56 = vector.shape_cast %55 : vector<1x1x32x32xf32> to vector<32x32xf32>
    %57 = vector.shape_cast %54 : vector<32x32xf32> to vector<1x1x32x32xf32>
    tpu.vector_store %arg9[%c0_24, %c0_25, %c0_26, %c0_27], %57 {strides = array<i32>} : memref<1x4x32x32xf32, #tpu.memory_space<vmem>>, vector<1x1x32x32xf32>,
    %58 = arith.truncf %54 : vector<32x32xf32> to vector<32x32xbf16>
    %59 = arith.truncf %39 : vector<32x32xf32> to vector<32x32xbf16>
    %cst_28 = arith.constant dense<0.000000e+00> : vector<32x32xf32>
    %60 = tpu.matmul %58, %59, %cst_28 {dimension_numbers = #tpu.dot_dimension_numbers<[1], [0], [0], [1], [0, 0, 1, 1], [], []>} : vector<32x32xbf16>, vector<32x32xbf16>, vector<32x32xf32> -> vector<32x32xf32>
    %c0_29 = arith.constant 0 : index
    %c0_30 = arith.constant 0 : index
    %61 = vector.load %arg10[%c0_29, %c0_30] : memref<32x128xf32, #tpu.memory_space<vmem>>, vector<32x32xf32>
    tpu.vector_store %arg10[%c0_29, %c0_30], %60 {strides = array<i32>} : memref<32x128xf32, #tpu.memory_space<vmem>>, vector<32x32xf32>,
    %62 = vector.extract_strided_slice %31 {offsets = [0, 32], sizes = [32, 32], strides = [1, 1]} : vector<32x384xf32> to vector<32x32xf32>
    %63 = vector.extract_strided_slice %31 {offsets = [0, 160], sizes = [32, 32], strides = [1, 1]} : vector<32x384xf32> to vector<32x32xf32>
    %64 = vector.extract_strided_slice %31 {offsets = [0, 288], sizes = [32, 32], strides = [1, 1]} : vector<32x384xf32> to vector<32x32xf32>
    %65 = arith.truncf %62 : vector<32x32xf32> to vector<32x32xbf16>
    %66 = arith.truncf %63 : vector<32x32xf32> to vector<32x32xbf16>
    "tpu.trace_start"() <{level = 10 : i32, message = "qd,kd->qk"}> : () -> ()
    %cst_31 = arith.constant dense<0.000000e+00> : vector<32x32xf32>
    %67 = tpu.matmul %65, %66, %cst_31 {dimension_numbers = #tpu.dot_dimension_numbers<[1], [1], [0], [0], [0, 0, 1, 0], [], []>} : vector<32x32xbf16>, vector<32x32xbf16>, vector<32x32xf32> -> vector<32x32xf32>
    "tpu.trace_stop"() : () -> ()
    %68 = vector.broadcast %36 : vector<1x32xf32> to vector<32x32xf32>
    %69 = arith.addf %67, %68 : vector<32x32xf32>
    %cst_32 = arith.constant dense<0xFF800000> : vector<32xf32>
    %70 = vector.multi_reduction <maximumf>, %69, %cst_32 [1] : vector<32x32xf32> to vector<32xf32>
    %71 = vector.shape_cast %70 : vector<32xf32> to vector<32x1xf32>
    %72 = vector.broadcast %71 : vector<32x1xf32> to vector<32x32xf32>
    %73 = arith.subf %69, %72 : vector<32x32xf32>
    %74 = math.exp %73 : vector<32x32xf32>
    %cst_33 = arith.constant dense<0.000000e+00> : vector<32xf32>
    %75 = vector.multi_reduction <add>, %74, %cst_33 [1] : vector<32x32xf32> to vector<32xf32>
    %76 = vector.shape_cast %75 : vector<32xf32> to vector<32x1xf32>
    %77 = tpu.reciprocal %76 {approx = true} : vector<32x1xf32> -> vector<32x1xf32>
    %78 = vector.broadcast %77 : vector<32x1xf32> to vector<32x32xf32>
    %79 = arith.mulf %74, %78 : vector<32x32xf32>
    %c0_34 = arith.constant 0 : index
    %c1_35 = arith.constant 1 : index
    %c0_36 = arith.constant 0 : index
    %c0_37 = arith.constant 0 : index
    %80 = vector.load %arg9[%c0_34, %c1_35, %c0_36, %c0_37] : memref<1x4x32x32xf32, #tpu.memory_space<vmem>>, vector<1x1x32x32xf32>
    %81 = vector.shape_cast %80 : vector<1x1x32x32xf32> to vector<32x32xf32>
    %82 = vector.shape_cast %79 : vector<32x32xf32> to vector<1x1x32x32xf32>
    tpu.vector_store %arg9[%c0_34, %c1_35, %c0_36, %c0_37], %82 {strides = array<i32>} : memref<1x4x32x32xf32, #tpu.memory_space<vmem>>, vector<1x1x32x32xf32>,
    %83 = arith.truncf %79 : vector<32x32xf32> to vector<32x32xbf16>
    %84 = arith.truncf %64 : vector<32x32xf32> to vector<32x32xbf16>
    %cst_38 = arith.constant dense<0.000000e+00> : vector<32x32xf32>
    %85 = tpu.matmul %83, %84, %cst_38 {dimension_numbers = #tpu.dot_dimension_numbers<[1], [0], [0], [1], [0, 0, 1, 1], [], []>} : vector<32x32xbf16>, vector<32x32xbf16>, vector<32x32xf32> -> vector<32x32xf32>
    %c0_39 = arith.constant 0 : index
    %c32 = arith.constant 32 : index
    %86 = vector.load %arg10[%c0_39, %c32] : memref<32x128xf32, #tpu.memory_space<vmem>>, vector<32x32xf32>
    tpu.vector_store %arg10[%c0_39, %c32], %85 {strides = array<i32>} : memref<32x128xf32, #tpu.memory_space<vmem>>, vector<32x32xf32>,
    %87 = vector.extract_strided_slice %31 {offsets = [0, 64], sizes = [32, 32], strides = [1, 1]} : vector<32x384xf32> to vector<32x32xf32>
    %88 = vector.extract_strided_slice %31 {offsets = [0, 192], sizes = [32, 32], strides = [1, 1]} : vector<32x384xf32> to vector<32x32xf32>
    %89 = vector.extract_strided_slice %31 {offsets = [0, 320], sizes = [32, 32], strides = [1, 1]} : vector<32x384xf32> to vector<32x32xf32>
    %90 = arith.truncf %87 : vector<32x32xf32> to vector<32x32xbf16>
    %91 = arith.truncf %88 : vector<32x32xf32> to vector<32x32xbf16>
    "tpu.trace_start"() <{level = 10 : i32, message = "qd,kd->qk"}> : () -> ()
    %cst_40 = arith.constant dense<0.000000e+00> : vector<32x32xf32>
    %92 = tpu.matmul %90, %91, %cst_40 {dimension_numbers = #tpu.dot_dimension_numbers<[1], [1], [0], [0], [0, 0, 1, 0], [], []>} : vector<32x32xbf16>, vector<32x32xbf16>, vector<32x32xf32> -> vector<32x32xf32>
    "tpu.trace_stop"() : () -> ()
    %93 = vector.broadcast %36 : vector<1x32xf32> to vector<32x32xf32>
    %94 = arith.addf %92, %93 : vector<32x32xf32>
    %cst_41 = arith.constant dense<0xFF800000> : vector<32xf32>
    %95 = vector.multi_reduction <maximumf>, %94, %cst_41 [1] : vector<32x32xf32> to vector<32xf32>
    %96 = vector.shape_cast %95 : vector<32xf32> to vector<32x1xf32>
    %97 = vector.broadcast %96 : vector<32x1xf32> to vector<32x32xf32>
    %98 = arith.subf %94, %97 : vector<32x32xf32>
    %99 = math.exp %98 : vector<32x32xf32>
    %cst_42 = arith.constant dense<0.000000e+00> : vector<32xf32>
    %100 = vector.multi_reduction <add>, %99, %cst_42 [1] : vector<32x32xf32> to vector<32xf32>
    %101 = vector.shape_cast %100 : vector<32xf32> to vector<32x1xf32>
    %102 = tpu.reciprocal %101 {approx = true} : vector<32x1xf32> -> vector<32x1xf32>
    %103 = vector.broadcast %102 : vector<32x1xf32> to vector<32x32xf32>
    %104 = arith.mulf %99, %103 : vector<32x32xf32>
    %c0_43 = arith.constant 0 : index
    %c2_44 = arith.constant 2 : index
    %c0_45 = arith.constant 0 : index
    %c0_46 = arith.constant 0 : index
    %105 = vector.load %arg9[%c0_43, %c2_44, %c0_45, %c0_46] : memref<1x4x32x32xf32, #tpu.memory_space<vmem>>, vector<1x1x32x32xf32>
    %106 = vector.shape_cast %105 : vector<1x1x32x32xf32> to vector<32x32xf32>
    %107 = vector.shape_cast %104 : vector<32x32xf32> to vector<1x1x32x32xf32>
    tpu.vector_store %arg9[%c0_43, %c2_44, %c0_45, %c0_46], %107 {strides = array<i32>} : memref<1x4x32x32xf32, #tpu.memory_space<vmem>>, vector<1x1x32x32xf32>,
    %108 = arith.truncf %104 : vector<32x32xf32> to vector<32x32xbf16>
    %109 = arith.truncf %89 : vector<32x32xf32> to vector<32x32xbf16>
    %cst_47 = arith.constant dense<0.000000e+00> : vector<32x32xf32>
    %110 = tpu.matmul %108, %109, %cst_47 {dimension_numbers = #tpu.dot_dimension_numbers<[1], [0], [0], [1], [0, 0, 1, 1], [], []>} : vector<32x32xbf16>, vector<32x32xbf16>, vector<32x32xf32> -> vector<32x32xf32>
    %c0_48 = arith.constant 0 : index
    %c64 = arith.constant 64 : index
    %111 = vector.load %arg10[%c0_48, %c64] : memref<32x128xf32, #tpu.memory_space<vmem>>, vector<32x32xf32>
    tpu.vector_store %arg10[%c0_48, %c64], %110 {strides = array<i32>} : memref<32x128xf32, #tpu.memory_space<vmem>>, vector<32x32xf32>,
    %112 = vector.extract_strided_slice %31 {offsets = [0, 96], sizes = [32, 32], strides = [1, 1]} : vector<32x384xf32> to vector<32x32xf32>
    %113 = vector.extract_strided_slice %31 {offsets = [0, 224], sizes = [32, 32], strides = [1, 1]} : vector<32x384xf32> to vector<32x32xf32>
    %114 = vector.extract_strided_slice %31 {offsets = [0, 352], sizes = [32, 32], strides = [1, 1]} : vector<32x384xf32> to vector<32x32xf32>
    %115 = arith.truncf %112 : vector<32x32xf32> to vector<32x32xbf16>
    %116 = arith.truncf %113 : vector<32x32xf32> to vector<32x32xbf16>
    "tpu.trace_start"() <{level = 10 : i32, message = "qd,kd->qk"}> : () -> ()
    %cst_49 = arith.constant dense<0.000000e+00> : vector<32x32xf32>
    %117 = tpu.matmul %115, %116, %cst_49 {dimension_numbers = #tpu.dot_dimension_numbers<[1], [1], [0], [0], [0, 0, 1, 0], [], []>} : vector<32x32xbf16>, vector<32x32xbf16>, vector<32x32xf32> -> vector<32x32xf32>
    "tpu.trace_stop"() : () -> ()
    %118 = vector.broadcast %36 : vector<1x32xf32> to vector<32x32xf32>
    %119 = arith.addf %117, %118 : vector<32x32xf32>
    %cst_50 = arith.constant dense<0xFF800000> : vector<32xf32>
    %120 = vector.multi_reduction <maximumf>, %119, %cst_50 [1] : vector<32x32xf32> to vector<32xf32>
    %121 = vector.shape_cast %120 : vector<32xf32> to vector<32x1xf32>
    %122 = vector.broadcast %121 : vector<32x1xf32> to vector<32x32xf32>
    %123 = arith.subf %119, %122 : vector<32x32xf32>
    %124 = math.exp %123 : vector<32x32xf32>
    %cst_51 = arith.constant dense<0.000000e+00> : vector<32xf32>
    %125 = vector.multi_reduction <add>, %124, %cst_51 [1] : vector<32x32xf32> to vector<32xf32>
    %126 = vector.shape_cast %125 : vector<32xf32> to vector<32x1xf32>
    %127 = tpu.reciprocal %126 {approx = true} : vector<32x1xf32> -> vector<32x1xf32>
    %128 = vector.broadcast %127 : vector<32x1xf32> to vector<32x32xf32>
    %129 = arith.mulf %124, %128 : vector<32x32xf32>
    %c0_52 = arith.constant 0 : index
    %c3_53 = arith.constant 3 : index
    %c0_54 = arith.constant 0 : index
    %c0_55 = arith.constant 0 : index
    %130 = vector.load %arg9[%c0_52, %c3_53, %c0_54, %c0_55] : memref<1x4x32x32xf32, #tpu.memory_space<vmem>>, vector<1x1x32x32xf32>
    %131 = vector.shape_cast %130 : vector<1x1x32x32xf32> to vector<32x32xf32>
    %132 = vector.shape_cast %129 : vector<32x32xf32> to vector<1x1x32x32xf32>
    tpu.vector_store %arg9[%c0_52, %c3_53, %c0_54, %c0_55], %132 {strides = array<i32>} : memref<1x4x32x32xf32, #tpu.memory_space<vmem>>, vector<1x1x32x32xf32>,
    %133 = arith.truncf %129 : vector<32x32xf32> to vector<32x32xbf16>
    %134 = arith.truncf %114 : vector<32x32xf32> to vector<32x32xbf16>
    %cst_56 = arith.constant dense<0.000000e+00> : vector<32x32xf32>
    %135 = tpu.matmul %133, %134, %cst_56 {dimension_numbers = #tpu.dot_dimension_numbers<[1], [0], [0], [1], [0, 0, 1, 1], [], []>} : vector<32x32xbf16>, vector<32x32xbf16>, vector<32x32xf32> -> vector<32x32xf32>
    %c0_57 = arith.constant 0 : index
    %c96 = arith.constant 96 : index
    %136 = vector.load %arg10[%c0_57, %c96] : memref<32x128xf32, #tpu.memory_space<vmem>>, vector<32x32xf32>
    tpu.vector_store %arg10[%c0_57, %c96], %135 {strides = array<i32>} : memref<32x128xf32, #tpu.memory_space<vmem>>, vector<32x32xf32>,
    %c0_58 = arith.constant 0 : index
    %c0_59 = arith.constant 0 : index
    %137 = vector.load %arg10[%c0_58, %c0_59] : memref<32x128xf32, #tpu.memory_space<vmem>>, vector<32x128xf32>
    %138 = arith.truncf %137 : vector<32x128xf32> to vector<32x128xbf16>
    %c0_60 = arith.constant 0 : index
    %c0_61 = arith.constant 0 : index
    %139 = vector.load %arg4[%c0_60, %c0_61] : memref<128x128xbf16, #tpu.memory_space<vmem>>, vector<128x128xbf16>
    %cst_62 = arith.constant dense<0.000000e+00> : vector<32x128xf32>
    %140 = tpu.matmul %138, %139, %cst_62 {dimension_numbers = #tpu.dot_dimension_numbers<[1], [0], [0], [1], [0, 0, 1, 1], [], []>} : vector<32x128xbf16>, vector<128x128xbf16>, vector<32x128xf32> -> vector<32x128xf32>
    %141 = arith.addf %8, %140 : vector<32x128xf32>
    %142 = vector.broadcast %4 : vector<1x128xf32> to vector<32x128xf32>
    %143 = arith.addf %141, %142 : vector<32x128xf32>
    %cst_63 = arith.constant dense<0.000000e+00> : vector<32xf32>
    %144 = vector.multi_reduction <add>, %143, %cst_63 [1] : vector<32x128xf32> to vector<32xf32>
    %145 = vector.shape_cast %144 : vector<32xf32> to vector<32x1xf32>
    %cst_64 = arith.constant 1.280000e+02 : f32
    %146 = vector.broadcast %cst_64 : f32 to vector<32x1xf32>
    %147 = arith.divf %145, %146 : vector<32x1xf32>
    %148 = vector.broadcast %147 : vector<32x1xf32> to vector<32x128xf32>
    %149 = arith.subf %143, %148 : vector<32x128xf32>
    %150 = arith.mulf %149, %149 : vector<32x128xf32>
    %cst_65 = arith.constant dense<0.000000e+00> : vector<32xf32>
    %151 = vector.multi_reduction <add>, %150, %cst_65 [1] : vector<32x128xf32> to vector<32xf32>
    %152 = vector.shape_cast %151 : vector<32xf32> to vector<32x1xf32>
    %cst_66 = arith.constant 1.280000e+02 : f32
    %153 = vector.broadcast %cst_66 : f32 to vector<32x1xf32>
    %154 = arith.divf %152, %153 : vector<32x1xf32>
    %cst_67 = arith.constant 9.99999974E-6 : f32
    %155 = vector.broadcast %cst_67 : f32 to vector<32x1xf32>
    %156 = arith.addf %154, %155 : vector<32x1xf32>
    %157 = math.rsqrt %156 : vector<32x1xf32>
    %158 = vector.broadcast %157 : vector<32x1xf32> to vector<32x128xf32>
    %159 = vector.broadcast %2 : vector<1x128xf32> to vector<32x128xf32>
    %160 = arith.mulf %158, %159 : vector<32x128xf32>
    %161 = arith.mulf %149, %160 : vector<32x128xf32>
    %162 = vector.broadcast %3 : vector<1x128xf32> to vector<32x128xf32>
    %163 = arith.addf %161, %162 : vector<32x128xf32>
    %164 = arith.truncf %163 : vector<32x128xf32> to vector<32x128xbf16>
    %c0_68 = arith.constant 0 : index
    %c0_69 = arith.constant 0 : index
    %165 = vector.load %arg5[%c0_68, %c0_69] : memref<128x512xbf16, #tpu.memory_space<vmem>>, vector<128x512xbf16>
    %cst_70 = arith.constant dense<0.000000e+00> : vector<32x512xf32>
    %166 = tpu.matmul %164, %165, %cst_70 {dimension_numbers = #tpu.dot_dimension_numbers<[1], [0], [0], [1], [0, 0, 1, 1], [], []>} : vector<32x128xbf16>, vector<128x512xbf16>, vector<32x512xf32> -> vector<32x512xf32>
    %167 = vector.broadcast %6 : vector<1x512xf32> to vector<32x512xf32>
    %168 = arith.addf %166, %167 : vector<32x512xf32>
    %cst_71 = arith.constant 5.000000e-01 : f32
    %169 = vector.broadcast %cst_71 : f32 to vector<32x512xf32>
    %170 = arith.mulf %169, %168 : vector<32x512xf32>
    %cst_72 = arith.constant 0.707106769 : f32
    %171 = vector.broadcast %cst_72 : f32 to vector<32x512xf32>
    %172 = arith.mulf %168, %171 : vector<32x512xf32>
    %173 = math.absf %172 : vector<32x512xf32>
    %cst_73 = arith.constant 0.327591091 : f32
    %174 = vector.broadcast %cst_73 : f32 to vector<32x512xf32>
    %175 = arith.mulf %174, %173 : vector<32x512xf32>
    %cst_74 = arith.constant 1.000000e+00 : f32
    %176 = vector.broadcast %cst_74 : f32 to vector<32x512xf32>
    %177 = arith.addf %176, %175 : vector<32x512xf32>
    %178 = tpu.reciprocal %177 {approx = true} : vector<32x512xf32> -> vector<32x512xf32>
    %cst_75 = arith.constant 1.06140542 : f32
    %179 = vector.broadcast %cst_75 : f32 to vector<32x512xf32>
    %180 = arith.mulf %179, %178 : vector<32x512xf32>
    %cst_76 = arith.constant -1.45315206 : f32
    %181 = vector.broadcast %cst_76 : f32 to vector<32x512xf32>
    %182 = arith.addf %180, %181 : vector<32x512xf32>
    %183 = arith.mulf %182, %178 : vector<32x512xf32>
    %cst_77 = arith.constant 1.42141378 : f32
    %184 = vector.broadcast %cst_77 : f32 to vector<32x512xf32>
    %185 = arith.addf %183, %184 : vector<32x512xf32>
    %186 = arith.mulf %185, %178 : vector<32x512xf32>
    %cst_78 = arith.constant -0.284496725 : f32
    %187 = vector.broadcast %cst_78 : f32 to vector<32x512xf32>
    %188 = arith.addf %186, %187 : vector<32x512xf32>
    %189 = arith.mulf %188, %178 : vector<32x512xf32>
    %cst_79 = arith.constant 0.254829586 : f32
    %190 = vector.broadcast %cst_79 : f32 to vector<32x512xf32>
    %191 = arith.addf %189, %190 : vector<32x512xf32>
    %192 = arith.mulf %191, %178 : vector<32x512xf32>
    %cst_80 = arith.constant 0.000000e+00 : f32
    %193 = vector.broadcast %cst_80 : f32 to vector<32x512xf32>
    %194 = arith.subf %193, %173 : vector<32x512xf32>
    %195 = arith.mulf %194, %173 : vector<32x512xf32>
    %196 = math.exp %195 : vector<32x512xf32>
    %197 = arith.mulf %192, %196 : vector<32x512xf32>
    %cst_81 = arith.constant 1.000000e+00 : f32
    %198 = vector.broadcast %cst_81 : f32 to vector<32x512xf32>
    %199 = arith.subf %198, %197 : vector<32x512xf32>
    %cst_82 = arith.constant 0.000000e+00 : f32
    %200 = vector.broadcast %cst_82 : f32 to vector<32x512xf32>
    %201 = arith.cmpf oge, %172, %200 : vector<32x512xf32>
    %cst_83 = arith.constant 0.000000e+00 : f32
    %202 = vector.broadcast %cst_83 : f32 to vector<32x512xf32>
    %203 = arith.subf %202, %199 : vector<32x512xf32>
    %204 = arith.select %201, %199, %203 : vector<32x512xi1>, vector<32x512xf32>
    %cst_84 = arith.constant 1.000000e+00 : f32
    %205 = vector.broadcast %cst_84 : f32 to vector<32x512xf32>
    %206 = arith.addf %205, %204 : vector<32x512xf32>
    %207 = arith.mulf %170, %206 : vector<32x512xf32>
    %208 = arith.truncf %207 : vector<32x512xf32> to vector<32x512xbf16>
    %c0_85 = arith.constant 0 : index
    %c0_86 = arith.constant 0 : index
    %209 = vector.load %arg6[%c0_85, %c0_86] : memref<512x128xbf16, #tpu.memory_space<vmem>>, vector<512x128xbf16>
    %cst_87 = arith.constant dense<0.000000e+00> : vector<32x128xf32>
    %210 = tpu.matmul %208, %209, %cst_87 {dimension_numbers = #tpu.dot_dimension_numbers<[1], [0], [0], [1], [0, 0, 1, 1], [], []>} : vector<32x512xbf16>, vector<512x128xbf16>, vector<32x128xf32> -> vector<32x128xf32>
    %211 = vector.broadcast %5 : vector<1x128xf32> to vector<32x128xf32>
    %212 = arith.addf %210, %211 : vector<32x128xf32>
    %213 = arith.addf %143, %212 : vector<32x128xf32>
    %214 = vector.shape_cast %213 : vector<32x128xf32> to vector<1x32x128xf32>
    %c0_88 = arith.constant 0 : index
    %c0_89 = arith.constant 0 : index
    %c0_90 = arith.constant 0 : index
    %215 = vector.load %arg8[%c0_88, %c0_89, %c0_90] : memref<1x32x128xf32, #tpu.memory_space<vmem>>, vector<1x32x128xf32>
    tpu.vector_store %arg8[%c0_88, %c0_89, %c0_90], %214 {strides = array<i32>} : memref<1x32x128xf32, #tpu.memory_space<vmem>>, vector<1x32x128xf32>,
    return
  }
  func.func @transform_0(%arg0: i32) -> (i32, i32, i32) {
    %c0_i32 = arith.constant 0 : i32
    %c0_i32_0 = arith.constant 0 : i32
    %c0_i32_1 = arith.constant 0 : i32
    return %arg0, %c0_i32, %c0_i32_0 : i32, i32, i32
  }
  func.func @transform_1(%arg0: i32) -> (i32, i32, i32) {
    %c0_i32 = arith.constant 0 : i32
    %c0_i32_0 = arith.constant 0 : i32
    %c0_i32_1 = arith.constant 0 : i32
    return %arg0, %c0_i32, %c0_i32_0 : i32, i32, i32
  }
  func.func @transform_2(%arg0: i32) -> (i32, i32) {
    %c0_i32 = arith.constant 0 : i32
    %c0_i32_0 = arith.constant 0 : i32
    %c0_i32_1 = arith.constant 0 : i32
    return %c0_i32, %c0_i32_0 : i32, i32
  }
  func.func @transform_3(%arg0: i32) -> (i32, i32) {
    %c0_i32 = arith.constant 0 : i32
    %c0_i32_0 = arith.constant 0 : i32
    %c0_i32_1 = arith.constant 0 : i32
    return %c0_i32, %c0_i32_0 : i32, i32
  }
  func.func @transform_4(%arg0: i32) -> (i32, i32) {
    %c0_i32 = arith.constant 0 : i32
    %c0_i32_0 = arith.constant 0 : i32
    %c0_i32_1 = arith.constant 0 : i32
    return %c0_i32, %c0_i32_0 : i32, i32
  }
  func.func @transform_5(%arg0: i32) -> (i32, i32) {
    %c0_i32 = arith.constant 0 : i32
    %c0_i32_0 = arith.constant 0 : i32
    %c0_i32_1 = arith.constant 0 : i32
    return %c0_i32, %c0_i32_0 : i32, i32
  }
  func.func @transform_6(%arg0: i32) -> (i32, i32) {
    %c0_i32 = arith.constant 0 : i32
    %c0_i32_0 = arith.constant 0 : i32
    %c0_i32_1 = arith.constant 0 : i32
    return %c0_i32, %c0_i32_0 : i32, i32
  }
  func.func @transform_7(%arg0: i32) -> (i32, i32, i32) {
    %c0_i32 = arith.constant 0 : i32
    %c0_i32_0 = arith.constant 0 : i32
    %c0_i32_1 = arith.constant 0 : i32
    return %arg0, %c0_i32, %c0_i32_0 : i32, i32, i32
  }
  func.func @transform_8(%arg0: i32) -> (i32, i32, i32, i32) {
    %c0_i32 = arith.constant 0 : i32
    %c0_i32_0 = arith.constant 0 : i32
    %c0_i32_1 = arith.constant 0 : i32
    %c0_i32_2 = arith.constant 0 : i32
    return %arg0, %c0_i32, %c0_i32_0, %c0_i32_1 : i32, i32, i32, i32
  }
}

</mosaic_0001>

<llo_original>
// kernel: tpu_custom_call.1
$region0: #{tpu_custom_call.1}
  #allocation0 [shape = 'u32[]', space=smem, size = 0x4, offset = 0x4, fixed_abs, tag = 'smem constant byte address 0x4 - core index']
  #allocation1 [shape = 'u32[144,128]{1,0:T(1,128)}', space=vmem, size = 0x12000, scoped, tag = 'internal scratch']
  #allocation2 [shape = 'f32[32,128]{1,0:T(8,128)}', space=vmem, size = 0x4000, scoped, tag = 'scratch operand']
  %s0 = inlined_call_operand.hbm [shape: f32[2,32,128], index: 0, kind: input, shape index: {}]
  %s1 = inlined_call_operand.vmem [shape: s32[2,1,32], index: 1, kind: input, shape index: {}]
  %s2 = inlined_call_operand.hbm [shape: bf16[128,384], index: 2, kind: input, shape index: {}]
  %s3 = inlined_call_operand.hbm [shape: bf16[128,128], index: 3, kind: input, shape index: {}]
  %s4 = inlined_call_operand.hbm [shape: bf16[128,512], index: 4, kind: input, shape index: {}]
  %s5 = inlined_call_operand.hbm [shape: bf16[512,128], index: 5, kind: input, shape index: {}]
  %s6 = inlined_call_operand.hbm [shape: f32[8,512], index: 6, kind: input, shape index: {}]
  %s7 = inlined_call_operand.hbm [shape: f32[2,32,128], index: 7, kind: output, shape index: {0}]
  %s8 = inlined_call_operand.hbm [shape: f32[2,4,32,32], index: 8, kind: output, shape index: {1}]
  %9 = xla_tuple %s7, %s8
  %s10 = sld [smem:[#allocation0]]
  $region93: #{tpu_custom_call.1} parent=0
    _
  %s12 = ssub.s32 1, %s10
  %s13 = scalar_select 0, %s12, %s10
  $region1: #{tpu_custom_call.1} parent=0
    #allocation3 [shape = 'u8[32768]{0}', space=vmem, size = 0x8000, scoped, tag = 'input window, operand 0']
    #allocation4 [shape = 's32[2]{0}', space=sflag, size = 0x8, scoped, tag = 'scoped memory for tpu_custom_call.1']
    #allocation5 [shape = 's32[2]{0}', space=sflag, size = 0x8, scoped, tag = 'scoped memory for tpu_custom_call.1']
    #allocation6 [shape = 'u8[98304]{0}', space=vmem, size = 0x18000, scoped, tag = 'input window, operand 2, single buffered']
    #allocation7 [shape = 's32[1]{0}', space=sflag, size = 0x4, scoped, tag = 'scoped memory for tpu_custom_call.1']
    #allocation8 [shape = 'u8[32768]{0}', space=vmem, size = 0x8000, scoped, tag = 'input window, operand 3, single buffered']
    #allocation9 [shape = 'u8[131072]{0}', space=vmem, size = 0x20000, scoped, tag = 'input window, operand 4, single buffered']
    #allocation10 [shape = 's32[1]{0}', space=sflag, size = 0x4, scoped, tag = 'scoped memory for tpu_custom_call.1']
    #allocation11 [shape = 'u8[131072]{0}', space=vmem, size = 0x20000, scoped, tag = 'input window, operand 5, single buffered']
    #allocation12 [shape = 'u8[16384]{0}', space=vmem, size = 0x4000, scoped, tag = 'input window, operand 6, single buffered']
    #allocation13 [shape = 's32[1]{0}', space=sflag, size = 0x4, scoped, tag = 'scoped memory for tpu_custom_call.1']
    #allocation14 [shape = 'u8[32768]{0}', space=vmem, size = 0x8000, scoped, tag = 'output window, operand 0']
    #allocation15 [shape = 'u8[131072]{0}', space=vmem, size = 0x20000, scoped, tag = 'output window, operand 1']
    #allocation16 [shape = 's32[2]{0}', space=sflag, size = 0x8, scoped, tag = 'scoped memory for tpu_custom_call.1']
    %14 = vsyncpa [#allocation4], 0
    %s15 = scalar_lea.sflag [#allocation4], 1
    %16 = vsyncpa %s15, 0
    %17 = vsyncpa [#allocation7], 0
    %18 = vsyncpa [#allocation10], 0
    %19 = vsyncpa [#allocation13], 0
    %20 = vsyncpa [#allocation5], 0
    %s21 = scalar_lea.sflag [#allocation5], 1
    %22 = vsyncpa %s21, 0
    %23 = vsyncpa [#allocation16], 0
    %s24 = scalar_lea.sflag [#allocation16], 1
    %25 = vsyncpa %s24, 0
    loop: start=0, step=1, limit=4
    $region2: #{tpu_custom_call.1} parent=1 // loop_pre_header
      _
    $region3: #{tpu_custom_call.1} parent=1 // loop_header
      %s27 = sphi 0, %s31
      %p28 = scmp.ge.s32.totalorder %s27, 4
      %s37 = sphi 0, %s39
      %s40 = sphi 0, %s37
      %s41 = sphi 0, %s40
      %s57 = sphi 0, %s41
      %s63 = sphi 0, %s65
      %s66 = sphi 0, %s63
      %s67 = sphi 0, %s66
      %s83 = sphi 0, %s67
      %s87 = sphi 0, %s87
      %s89 = sphi 0, %s87
      %s90 = sphi 0, %s89
      %s104 = sphi 0, %s90
      %s108 = sphi 0, %s108
      %s110 = sphi 0, %s108
      %s111 = sphi 0, %s110
      %s125 = sphi 0, %s111
      %s129 = sphi 0, %s129
      %s131 = sphi 0, %s129
      %s132 = sphi 0, %s131
      %s146 = sphi 0, %s132
      %s150 = sphi 0, %s150
      %s152 = sphi 0, %s150
      %s153 = sphi 0, %s152
      %s167 = sphi 0, %s153
      %s171 = sphi 0, %s171
      %s173 = sphi 0, %s171
      %s174 = sphi 0, %s173
      %s188 = sphi 0, %s174
      %s194 = sphi 0, %s196
      %s197 = sphi 0, %s194
      %s198 = sphi 0, %s197
      %s214 = sphi 0, %s198
      %s220 = sphi 0, %s222
      %s223 = sphi 0, %s220
      %s224 = sphi 0, %s223
      %s240 = sphi 0, %s224
    $region4: #{tpu_custom_call.1} parent=1 // loop_header_branch
      %30 = sbr.rel (%p28) target = $region8
    $region5: #{tpu_custom_call.1} parent=1 // loop_body
      %s32 = ssub.s32 %s27, 1
      %s33 = ssub.s32 %s27, 2
      %s34 = sadd.s32 %s27, 1
      %s35 = ssub.s32 %s27, %s34
      %p36 = scmp.eq.s32.totalorder %s35, 0
      %s38 = sadd.s32 %s37, 1
      %s39 = scalar_select %p36, %s37, %s38
      %p42 = pneg %p36
      %p43 = scmp.eq.s32.totalorder %s27, 1
      %p44 = por %p42, %p43
      %p45 = scmp.ne.s32.totalorder %s37, %s40
      %p46 = scmp.eq.s32.totalorder %s27, 0
      %p47 = por %p45, %p46
      %p48 = scmp.ne.s32.totalorder %s37, %s40
      %p49 = scmp.eq.s32.totalorder %s32, 1
      %p50 = por %p48, %p49
      %p51 = scmp.ne.s32.totalorder %s40, %s41
      %p52 = scmp.eq.s32.totalorder %s32, 0
      %p53 = por %p51, %p52
      %p54 = scmp.ne.s32.totalorder %s40, %s41
      %p55 = scmp.eq.s32.totalorder %s33, 1
      %p56 = por %p54, %p55
      %p58 = scmp.ne.s32.totalorder %s41, %s57
      %p59 = scmp.eq.s32.totalorder %s33, 0
      %p60 = por %p58, %p59
      %s61 = ssub.s32 %s27, %s34
      %p62 = scmp.eq.s32.totalorder %s61, 0
      %s64 = sadd.s32 %s63, 1
      %s65 = scalar_select %p62, %s63, %s64
      %p68 = pneg %p62
      %p69 = scmp.eq.s32.totalorder %s27, 1
      %p70 = por %p68, %p69
      %p71 = scmp.ne.s32.totalorder %s63, %s66
      %p72 = scmp.eq.s32.totalorder %s27, 0
      %p73 = por %p71, %p72
      %p74 = scmp.ne.s32.totalorder %s63, %s66
      %p75 = scmp.eq.s32.totalorder %s32, 1
      %p76 = por %p74, %p75
      %p77 = scmp.ne.s32.totalorder %s66, %s67
      %p78 = scmp.eq.s32.totalorder %s32, 0
      %p79 = por %p77, %p78
      %p80 = scmp.ne.s32.totalorder %s66, %s67
      %p81 = scmp.eq.s32.totalorder %s33, 1
      %p82 = por %p80, %p81
      %p84 = scmp.ne.s32.totalorder %s67, %s83
      %p85 = scmp.eq.s32.totalorder %s33, 0
      %p86 = por %p84, %p85
      %s88 = sadd.s32 %s87, 1
      %p91 = scmp.eq.s32.totalorder %s27, 1
      %p92 = scmp.ne.s32.totalorder %s87, %s89
      %p93 = scmp.eq.s32.totalorder %s27, 0
      %p94 = por %p92, %p93
      %p95 = scmp.ne.s32.totalorder %s87, %s89
      %p96 = scmp.eq.s32.totalorder %s32, 1
      %p97 = por %p95, %p96
      %p98 = scmp.ne.s32.totalorder %s89, %s90
      %p99 = scmp.eq.s32.totalorder %s32, 0
      %p100 = por %p98, %p99
      %p101 = scmp.ne.s32.totalorder %s89, %s90
      %p102 = scmp.eq.s32.totalorder %s33, 1
      %p103 = por %p101, %p102
      %p105 = scmp.ne.s32.totalorder %s90, %s104
      %p106 = scmp.eq.s32.totalorder %s33, 0
      %p107 = por %p105, %p106
      %s109 = sadd.s32 %s108, 1
      %p112 = scmp.eq.s32.totalorder %s27, 1
      %p113 = scmp.ne.s32.totalorder %s108, %s110
      %p114 = scmp.eq.s32.totalorder %s27, 0
      %p115 = por %p113, %p114
      %p116 = scmp.ne.s32.totalorder %s108, %s110
      %p117 = scmp.eq.s32.totalorder %s32, 1
      %p118 = por %p116, %p117
      %p119 = scmp.ne.s32.totalorder %s110, %s111
      %p120 = scmp.eq.s32.totalorder %s32, 0
      %p121 = por %p119, %p120
      %p122 = scmp.ne.s32.totalorder %s110, %s111
      %p123 = scmp.eq.s32.totalorder %s33, 1
      %p124 = por %p122, %p123
      %p126 = scmp.ne.s32.totalorder %s111, %s125
      %p127 = scmp.eq.s32.totalorder %s33, 0
      %p128 = por %p126, %p127
      %s130 = sadd.s32 %s129, 1
      %p133 = scmp.eq.s32.totalorder %s27, 1
      %p134 = scmp.ne.s32.totalorder %s129, %s131
      %p135 = scmp.eq.s32.totalorder %s27, 0
      %p136 = por %p134, %p135
      %p137 = scmp.ne.s32.totalorder %s129, %s131
      %p138 = scmp.eq.s32.totalorder %s32, 1
      %p139 = por %p137, %p138
      %p140 = scmp.ne.s32.totalorder %s131, %s132
      %p141 = scmp.eq.s32.totalorder %s32, 0
      %p142 = por %p140, %p141
      %p143 = scmp.ne.s32.totalorder %s131, %s132
      %p144 = scmp.eq.s32.totalorder %s33, 1
      %p145 = por %p143, %p144
      %p147 = scmp.ne.s32.totalorder %s132, %s146
      %p148 = scmp.eq.s32.totalorder %s33, 0
      %p149 = por %p147, %p148
      %s151 = sadd.s32 %s150, 1
      %p154 = scmp.eq.s32.totalorder %s27, 1
      %p155 = scmp.ne.s32.totalorder %s150, %s152
      %p156 = scmp.eq.s32.totalorder %s27, 0
      %p157 = por %p155, %p156
      %p158 = scmp.ne.s32.totalorder %s150, %s152
      %p159 = scmp.eq.s32.totalorder %s32, 1
      %p160 = por %p158, %p159
      %p161 = scmp.ne.s32.totalorder %s152, %s153
      %p162 = scmp.eq.s32.totalorder %s32, 0
      %p163 = por %p161, %p162
      %p164 = scmp.ne.s32.totalorder %s152, %s153
      %p165 = scmp.eq.s32.totalorder %s33, 1
      %p166 = por %p164, %p165
      %p168 = scmp.ne.s32.totalorder %s153, %s167
      %p169 = scmp.eq.s32.totalorder %s33, 0
      %p170 = por %p168, %p169
      %s172 = sadd.s32 %s171, 1
      %p175 = scmp.eq.s32.totalorder %s27, 1
      %p176 = scmp.ne.s32.totalorder %s171, %s173
      %p177 = scmp.eq.s32.totalorder %s27, 0
      %p178 = por %p176, %p177
      %p179 = scmp.ne.s32.totalorder %s171, %s173
      %p180 = scmp.eq.s32.totalorder %s32, 1
      %p181 = por %p179, %p180
      %p182 = scmp.ne.s32.totalorder %s173, %s174
      %p183 = scmp.eq.s32.totalorder %s32, 0
      %p184 = por %p182, %p183
      %p185 = scmp.ne.s32.totalorder %s173, %s174
      %p186 = scmp.eq.s32.totalorder %s33, 1
      %p187 = por %p185, %p186
      %p189 = scmp.ne.s32.totalorder %s174, %s188
      %p190 = scmp.eq.s32.totalorder %s33, 0
      %p191 = por %p189, %p190
      %s192 = ssub.s32 %s27, %s34
      %p193 = scmp.eq.s32.totalorder %s192, 0
      %s195 = sadd.s32 %s194, 1
      %s196 = scalar_select %p193, %s194, %s195
      %p199 = pneg %p193
      %p200 = scmp.eq.s32.totalorder %s27, 1
      %p201 = por %p199, %p200
      %p202 = scmp.ne.s32.totalorder %s194, %s197
      %p203 = scmp.eq.s32.totalorder %s27, 0
      %p204 = por %p202, %p203
      %p205 = scmp.ne.s32.totalorder %s194, %s197
      %p206 = scmp.eq.s32.totalorder %s32, 1
      %p207 = por %p205, %p206
      %p208 = scmp.ne.s32.totalorder %s197, %s198
      %p209 = scmp.eq.s32.totalorder %s32, 0
      %p210 = por %p208, %p209
      %p211 = scmp.ne.s32.totalorder %s197, %s198
      %p212 = scmp.eq.s32.totalorder %s33, 1
      %p213 = por %p211, %p212
      %p215 = scmp.ne.s32.totalorder %s198, %s214
      %p216 = scmp.eq.s32.totalorder %s33, 0
      %p217 = por %p215, %p216
      %s218 = ssub.s32 %s27, %s34
      %p219 = scmp.eq.s32.totalorder %s218, 0
      %s221 = sadd.s32 %s220, 1
      %s222 = scalar_select %p219, %s220, %s221
      %p225 = pneg %p219
      %p226 = scmp.eq.s32.totalorder %s27, 1
      %p227 = por %p225, %p226
      %p228 = scmp.ne.s32.totalorder %s220, %s223
      %p229 = scmp.eq.s32.totalorder %s27, 0
      %p230 = por %p228, %p229
      %p231 = scmp.ne.s32.totalorder %s220, %s223
      %p232 = scmp.eq.s32.totalorder %s32, 1
      %p233 = por %p231, %p232
      %p234 = scmp.ne.s32.totalorder %s223, %s224
      %p235 = scmp.eq.s32.totalorder %s32, 0
      %p236 = por %p234, %p235
      %p237 = scmp.ne.s32.totalorder %s223, %s224
      %p238 = scmp.eq.s32.totalorder %s33, 1
      %p239 = por %p237, %p238
      %p241 = scmp.ne.s32.totalorder %s224, %s240
      %p242 = scmp.eq.s32.totalorder %s33, 0
      %p243 = por %p241, %p242
      %p244 = scmp.le.s32.totalorder 1, %s27
      %p245 = scmp.lt.s32.totalorder %s27, 3
      %p246 = pnand %p244, %p245
      %p247 = pneg %p246
      // Predicated region
      $region9: #{tpu_custom_call.1} parent=5 // pred_check
        _
      $region10: #{tpu_custom_call.1} parent=5 // pred_check_branch
        %249 = sbr.rel (%p246) target = $region12
      $region11: #{tpu_custom_call.1} parent=5 // pred_region
        %s250 = ssub.s32 %s27, 1
        // Predicated region
        $region13: #{tpu_custom_call.1} parent=11 // pred_check
          %p251 = pneg %p100
        $region14: #{tpu_custom_call.1} parent=11 // pred_check_branch
          %253 = sbr.rel (%p251) target = $region16
        $region15: #{tpu_custom_call.1} parent=11 // pred_region
          %s255 = ssub.s32 3072, 3072
          %256 = vsyncadd [#allocation7], %s255
          %s257 = sshll.u32 [#allocation6], 4
          %s258 = int_to_ptr.vmem [resolvable:$true] %s257
          %263 = dma.hbm_to_vmem [thread:$0]  %s2, 3072, %s258, [#allocation7], 192, 192, 12
        $region16: #{tpu_custom_call.1} parent=11 // pred_fallthru
          _
        // Predicated region
        $region17: #{tpu_custom_call.1} parent=11 // pred_check
          %p264 = pneg %p121
        $region18: #{tpu_custom_call.1} parent=11 // pred_check_branch
          %266 = sbr.rel (%p264) target = $region20
        $region19: #{tpu_custom_call.1} parent=11 // pred_region
          %s268 = ssub.s32 1024, 1024
          %269 = vsyncadd [#allocation7], %s268
          %s270 = sshll.u32 [#allocation8], 4
          %s271 = int_to_ptr.vmem [resolvable:$true] %s270
          %276 = dma.hbm_to_vmem [thread:$0]  %s3, 1024, %s271, [#allocation7], 64, 64, 4
        $region20: #{tpu_custom_call.1} parent=11 // pred_fallthru
          _
        // Predicated region
        $region21: #{tpu_custom_call.1} parent=11 // pred_check
          %p277 = pneg %p142
        $region22: #{tpu_custom_call.1} parent=11 // pred_check_branch
          %279 = sbr.rel (%p277) target = $region24
        $region23: #{tpu_custom_call.1} parent=11 // pred_region
          %s281 = ssub.s32 4096, 4096
          %282 = vsyncadd [#allocation10], %s281
          %s283 = sshll.u32 [#allocation9], 4
          %s284 = int_to_ptr.vmem [resolvable:$true] %s283
          %289 = dma.hbm_to_vmem [thread:$0]  %s4, 4096, %s284, [#allocation10], 256, 256, 16
        $region24: #{tpu_custom_call.1} parent=11 // pred_fallthru
          _
        // Predicated region
        $region25: #{tpu_custom_call.1} parent=11 // pred_check
          %p290 = pneg %p163
        $region26: #{tpu_custom_call.1} parent=11 // pred_check_branch
          %292 = sbr.rel (%p290) target = $region28
        $region27: #{tpu_custom_call.1} parent=11 // pred_region
          %s294 = ssub.s32 4096, 4096
          %295 = vsyncadd [#allocation10], %s294
          %s296 = sshll.u32 [#allocation11], 4
          %s297 = int_to_ptr.vmem [resolvable:$true] %s296
          %302 = dma.hbm_to_vmem [thread:$0]  %s5, 4096, %s297, [#allocation10], 64, 64, 4
        $region28: #{tpu_custom_call.1} parent=11 // pred_fallthru
          _
        // Predicated region
        $region29: #{tpu_custom_call.1} parent=11 // pred_check
          %p303 = pneg %p184
        $region30: #{tpu_custom_call.1} parent=11 // pred_check_branch
          %305 = sbr.rel (%p303) target = $region32
        $region31: #{tpu_custom_call.1} parent=11 // pred_region
          %s307 = ssub.s32 512, 512
          %308 = vsyncadd [#allocation13], %s307
          %s310 = sshll.u32 [#allocation12], 4
          %s311 = int_to_ptr.vmem [resolvable:$true] %s310
          %313 = dma.hbm_to_vmem [thread:$0]  %s6, 512, %s311, [#allocation13]
        $region32: #{tpu_custom_call.1} parent=11 // pred_fallthru
          _
      $region12: #{tpu_custom_call.1} parent=5 // pred_fallthru
        _
      %p314 = scmp.lt.s32.totalorder %s27, 2
      // Predicated region
      $region33: #{tpu_custom_call.1} parent=5 // pred_check
        %p315 = pneg %p314
      $region34: #{tpu_custom_call.1} parent=5 // pred_check_branch
        %317 = sbr.rel (%p315) target = $region36
      $region35: #{tpu_custom_call.1} parent=5 // pred_region
        // Predicated region
        $region37: #{tpu_custom_call.1} parent=35 // pred_check
          %p318 = pneg %p47
        $region38: #{tpu_custom_call.1} parent=35 // pred_check_branch
          %320 = sbr.rel (%p318) target = $region40
        $region39: #{tpu_custom_call.1} parent=35 // pred_region
          %s321 = sand.u32 %s37, 1
          %s322 = scalar_lea.sflag [#allocation4], %s321
          %s323 = sand.u32 %s37, 1
          %s324 = smul.addr %s323, 32
          %s325 = scalar_lea.vmem [#allocation3], %s324
          %s327 = ssub.s32 512, 512
          %328 = vsyncadd %s322, %s327
          %s329 = smul.addr %s27, 4
          %s330 = smul.addr %s329, 128
          %s331 = scalar_lea.hbm %s0, %s330
          %s332 = sshll.u32 %s325, 4
          %s333 = int_to_ptr.vmem [resolvable:$true] %s332
          %338 = dma.hbm_to_vmem [thread:$0]  %s331, 512, %s333, %s322, 128, 128, 8
        $region40: #{tpu_custom_call.1} parent=35 // pred_fallthru
          _
        // Predicated region
        $region41: #{tpu_custom_call.1} parent=35 // pred_check
          %p339 = pneg %p73
        $region42: #{tpu_custom_call.1} parent=35 // pred_check_branch
          %341 = sbr.rel (%p339) target = $region44
        $region43: #{tpu_custom_call.1} parent=35 // pred_region
          %p342 = scmp.lt.s32.totalorder %s27, 1
          %s343 = scalar_select %p342, %s27, 1
          %s344 = scalar_lea.vmem %s1, %s343
        $region44: #{tpu_custom_call.1} parent=35 // pred_fallthru
          _
      $region36: #{tpu_custom_call.1} parent=5 // pred_fallthru
        _
      %p345 = scmp.le.s32.totalorder 1, %s27
      %p346 = scmp.lt.s32.totalorder %s27, 3
      %p347 = pnand %p345, %p346
      %p348 = pneg %p347
      // Predicated region
      $region45: #{tpu_custom_call.1} parent=5 // pred_check
        _
      $region46: #{tpu_custom_call.1} parent=5 // pred_check_branch
        %350 = sbr.rel (%p347) target = $region48
      $region47: #{tpu_custom_call.1} parent=5 // pred_region
        %s351 = ssub.s32 %s27, 1
        %s352 = sand.u32 %s40, 1
        %s353 = scalar_lea.sflag [#allocation4], %s352
        %s354 = sand.u32 %s40, 1
        %s355 = smul.addr %s354, 32
        %s356 = scalar_lea.vmem [#allocation3], %s355
        // Predicated region
        $region49: #{tpu_custom_call.1} parent=47 // pred_check
          %p357 = pneg %p53
        $region50: #{tpu_custom_call.1} parent=47 // pred_check_branch
          %359 = sbr.rel (%p357) target = $region52
        $region51: #{tpu_custom_call.1} parent=47 // pred_region
          %360 = dma.done %s353, 512
        $region52: #{tpu_custom_call.1} parent=47 // pred_fallthru
          _
        // Predicated region
        $region53: #{tpu_custom_call.1} parent=47 // pred_check
          %p361 = pneg %p100
        $region54: #{tpu_custom_call.1} parent=47 // pred_check_branch
          %363 = sbr.rel (%p361) target = $region56
        $region55: #{tpu_custom_call.1} parent=47 // pred_region
          %364 = dma.done [#allocation7], 3072
        $region56: #{tpu_custom_call.1} parent=47 // pred_fallthru
          _
        // Predicated region
        $region57: #{tpu_custom_call.1} parent=47 // pred_check
          %p365 = pneg %p121
        $region58: #{tpu_custom_call.1} parent=47 // pred_check_branch
          %367 = sbr.rel (%p365) target = $region60
        $region59: #{tpu_custom_call.1} parent=47 // pred_region
          %368 = dma.done [#allocation7], 1024
        $region60: #{tpu_custom_call.1} parent=47 // pred_fallthru
          _
        // Predicated region
        $region61: #{tpu_custom_call.1} parent=47 // pred_check
          %p369 = pneg %p142
        $region62: #{tpu_custom_call.1} parent=47 // pred_check_branch
          %371 = sbr.rel (%p369) target = $region64
        $region63: #{tpu_custom_call.1} parent=47 // pred_region
          %372 = dma.done [#allocation10], 4096
        $region64: #{tpu_custom_call.1} parent=47 // pred_fallthru
          _
        // Predicated region
        $region65: #{tpu_custom_call.1} parent=47 // pred_check
          %p373 = pneg %p163
        $region66: #{tpu_custom_call.1} parent=47 // pred_check_branch
          %375 = sbr.rel (%p373) target = $region68
        $region67: #{tpu_custom_call.1} parent=47 // pred_region
          %376 = dma.done [#allocation10], 4096
        $region68: #{tpu_custom_call.1} parent=47 // pred_fallthru
          _
        // Predicated region
        $region69: #{tpu_custom_call.1} parent=47 // pred_check
          %p377 = pneg %p184
        $region70: #{tpu_custom_call.1} parent=47 // pred_check_branch
          %379 = sbr.rel (%p377) target = $region72
        $region71: #{tpu_custom_call.1} parent=47 // pred_region
          %380 = dma.done [#allocation13], 512
        $region72: #{tpu_custom_call.1} parent=47 // pred_fallthru
          _
        %s381 = sand.u32 %s40, 1
        %s382 = scalar_lea.sflag [#allocation4], %s381
        %s383 = sand.u32 %s40, 1
        %s384 = smul.addr %s383, 32
        %s385 = scalar_lea.vmem [#allocation3], %s384
        %p386 = pneg %p53
        %p387 = pneg %p50
        %p388 = scmp.lt.s32.totalorder %s32, 1
        %s389 = scalar_select %p388, %s32, 1
        %s390 = scalar_lea.vmem %s1, %s389
        %p391 = pneg %p79
        %p392 = pneg %p76
        %p393 = pneg %p100
        %p394 = pneg %p97
        %p395 = pneg %p121
        %p396 = pneg %p118
        %p397 = pneg %p142
        %p398 = pneg %p139
        %p399 = pneg %p163
        %p400 = pneg %p160
        %p401 = pneg %p184
        %p402 = pneg %p181
        %p403 = pneg %p210
        %p404 = pneg %p207
        %s405 = sand.u32 %s197, 1
        %s406 = scalar_lea.sflag [#allocation5], %s405
        %s407 = sand.u32 %s197, 1
        %s408 = smul.addr %s407, 32
        %s409 = scalar_lea.vmem [#allocation14], %s408
        %p410 = pneg %p236
        %p411 = pneg %p233
        %s412 = sand.u32 %s223, 1
        %s413 = scalar_lea.sflag [#allocation16], %s412
        %s414 = sand.u32 %s223, 1
        %s415 = smul.addr %s414, 128
        %s416 = scalar_lea.vmem [#allocation15], %s415
        %p417 = scmp.lt.s32.totalorder %s32, 1
        %s418 = scalar_select %p417, %s32, 1
        %s419 = scalar_lea.vmem %s1, %s418
        %v421 = vld [vmem:[#allocation12] ss:$0 sm:$0xff]
        %v422 = vld [vmem:[#allocation12 + $0x1] ss:$0 sm:$0xff]
        %v423 = vld [vmem:[#allocation12 + $0x2] ss:$0 sm:$0xff]
        %v424 = vld [vmem:[#allocation12 + $0x3] ss:$0 sm:$0xff]
        %v425 = vld [vmem:[#allocation12 + $0x4] ss:$0 sm:$0xff]
        %v426 = vld [vmem:[#allocation12 + $0x5] ss:$0 sm:$0xff]
        %s427 = scalar_lea.vmem [#allocation12], 6
        %v428 = vld [vmem:[%s427] ss:$8 sm:$0xf]
        %v429 = vld [vmem:[%s356] sm:$0xff]
        %v430 = vld [vmem:[%s356 + $0x8] sm:$0xff]
        %v431 = vld [vmem:[%s356 + $0x10] sm:$0xff]
        %v432 = vld [vmem:[%s356 + $0x18] sm:$0xff]
        %433 = vadd.xlane.f32.xlu0 %v429
        %v434 = vpop.xlane.xlu0 %433
        %435 = vadd.xlane.f32.xlu0 %v430
        %v436 = vpop.xlane.xlu0 %435
        %437 = vadd.xlane.f32.xlu0 %v431
        %v438 = vpop.xlane.xlu0 %437
        %439 = vadd.xlane.f32.xlu0 %v432
        %v440 = vpop.xlane.xlu0 %439
        %v441 = vrcp.pop 128.0
        %v442 = vmul.f32 %v434, %v441
        %v443 = vmul.f32 %v436, %v441
        %v444 = vmul.f32 %v438, %v441
        %v445 = vmul.f32 %v440, %v441
        %v446 = vsub.f32 %v429, %v442
        %v447 = vsub.f32 %v430, %v443
        %v448 = vsub.f32 %v431, %v444
        %v449 = vsub.f32 %v432, %v445
        %v450 = vmul.f32 %v446, %v446
        %v451 = vmul.f32 %v447, %v447
        %v452 = vmul.f32 %v448, %v448
        %v453 = vmul.f32 %v449, %v449
        %454 = vadd.xlane.f32.xlu0 %v450
        %v455 = vpop.xlane.xlu0 %454
        %456 = vadd.xlane.f32.xlu0 %v451
        %v457 = vpop.xlane.xlu0 %456
        %458 = vadd.xlane.f32.xlu0 %v452
        %v459 = vpop.xlane.xlu0 %458
        %460 = vadd.xlane.f32.xlu0 %v453
        %v461 = vpop.xlane.xlu0 %460
        %v462 = vmul.f32 %v455, %v441
        %v463 = vmul.f32 %v457, %v441
        %v464 = vmul.f32 %v459, %v441
        %v465 = vmul.f32 %v461, %v441
        %v466 = vadd.f32 %v462, 1e-05
        %v467 = vadd.f32 %v463, 1e-05
        %v468 = vadd.f32 %v464, 1e-05
        %v469 = vadd.f32 %v465, 1e-05
        %v470 = vrsqrt.pop %v466
        %v471 = vrsqrt.pop %v467
        %v472 = vrsqrt.pop %v468
        %v473 = vrsqrt.pop %v469
        %v474 = vmul.f32 %v470, %v421
        %v475 = vmul.f32 %v471, %v421
        %v476 = vmul.f32 %v472, %v421
        %v477 = vmul.f32 %v473, %v421
        %v478 = vmul.f32 %v446, %v474
        %v479 = vmul.f32 %v447, %v475
        %v480 = vmul.f32 %v448, %v476
        %v481 = vmul.f32 %v449, %v477
        %v482 = vadd.f32 %v478, %v422
        %v483 = vadd.f32 %v479, %v422
        %v484 = vadd.f32 %v480, %v422
        %v485 = vadd.f32 %v481, %v422
        %v486 = vpack.c.bf16 %v483, %v482
        %v487 = vpack.c.bf16 %v485, %v484
        %v488 = vld [vmem:[#allocation6] sm:$0xff]
        %v489 = vld [vmem:[#allocation6 + $0x8] sm:$0xf]
        %v490 = vld [vmem:[#allocation6 + $0xc] sm:$0xff]
        %v491 = vld [vmem:[#allocation6 + $0x14] sm:$0xf]
        %v492 = vld [vmem:[#allocation6 + $0x18] sm:$0xff]
        %v493 = vld [vmem:[#allocation6 + $0x20] sm:$0xf]
        %v494 = vld [vmem:[#allocation6 + $0x24] sm:$0xff]
        %v495 = vld [vmem:[#allocation6 + $0x2c] sm:$0xf]
        %v496 = vld [vmem:[#allocation6 + $0x30] sm:$0xff]
        %v497 = vld [vmem:[#allocation6 + $0x38] sm:$0xf]
        %v498 = vld [vmem:[#allocation6 + $0x3c] sm:$0xff]
        %v499 = vld [vmem:[#allocation6 + $0x44] sm:$0xf]
        %v500 = vld [vmem:[#allocation6 + $0x48] sm:$0xff]
        %v501 = vld [vmem:[#allocation6 + $0x50] sm:$0xf]
        %v502 = vld [vmem:[#allocation6 + $0x54] sm:$0xff]
        %v503 = vld [vmem:[#allocation6 + $0x5c] sm:$0xf]
        %v504 = vld [vmem:[#allocation6 + $0x60] sm:$0xff]
        %v505 = vld [vmem:[#allocation6 + $0x68] sm:$0xf]
        %v506 = vld [vmem:[#allocation6 + $0x6c] sm:$0xff]
        %v507 = vld [vmem:[#allocation6 + $0x74] sm:$0xf]
        %v508 = vld [vmem:[#allocation6 + $0x78] sm:$0xff]
        %v509 = vld [vmem:[#allocation6 + $0x80] sm:$0xf]
        %v510 = vld [vmem:[#allocation6 + $0x84] sm:$0xff]
        %v511 = vld [vmem:[#allocation6 + $0x8c] sm:$0xf]
        %v512 = vld [vmem:[#allocation6 + $0x90] sm:$0xff]
        %v513 = vld [vmem:[#allocation6 + $0x98] sm:$0xf]
        %v514 = vld [vmem:[#allocation6 + $0x9c] sm:$0xff]
        %v515 = vld [vmem:[#allocation6 + $0xa4] sm:$0xf]
        %v516 = vld [vmem:[#allocation6 + $0xa8] sm:$0xff]
        %v517 = vld [vmem:[#allocation6 + $0xb0] sm:$0xf]
        %v518 = vld [vmem:[#allocation6 + $0xb4] sm:$0xff]
        %v519 = vld [vmem:[#allocation6 + $0xbc] sm:$0xf]
        %v552 = vunpack.c.l.b16 %v488
        %v553 = vunpack.c.h.b16 %v488
        %v554 = vunpack.c.l.b16 %v489
        %v555 = vunpack.c.l.b16 %v490
        %v556 = vunpack.c.h.b16 %v490
        %v557 = vunpack.c.l.b16 %v491
        %v558 = vunpack.c.l.b16 %v492
        %v559 = vunpack.c.h.b16 %v492
        %v560 = vunpack.c.l.b16 %v493
        %v561 = vunpack.c.l.b16 %v494
        %v562 = vunpack.c.h.b16 %v494
        %v563 = vunpack.c.l.b16 %v495
        %v564 = vunpack.c.l.b16 %v496
        %v565 = vunpack.c.h.b16 %v496
        %v566 = vunpack.c.l.b16 %v497
        %v567 = vunpack.c.l.b16 %v498
        %v568 = vunpack.c.h.b16 %v498
        %v569 = vunpack.c.l.b16 %v499
        %v570 = vunpack.c.l.b16 %v500
        %v571 = vunpack.c.h.b16 %v500
        %v572 = vunpack.c.l.b16 %v501
        %v573 = vunpack.c.l.b16 %v502
        %v574 = vunpack.c.h.b16 %v502
        %v575 = vunpack.c.l.b16 %v503
        %v576 = vunpack.c.l.b16 %v504
        %v577 = vunpack.c.h.b16 %v504
        %v578 = vunpack.c.l.b16 %v505
        %v579 = vunpack.c.l.b16 %v506
        %v580 = vunpack.c.h.b16 %v506
        %v581 = vunpack.c.l.b16 %v507
        %v582 = vunpack.c.l.b16 %v508
        %v583 = vunpack.c.h.b16 %v508
        %v584 = vunpack.c.l.b16 %v509
        %v585 = vunpack.c.l.b16 %v510
        %v586 = vunpack.c.h.b16 %v510
        %v587 = vunpack.c.l.b16 %v511
        %v588 = vunpack.c.l.b16 %v512
        %v589 = vunpack.c.h.b16 %v512
        %v590 = vunpack.c.l.b16 %v513
        %v591 = vunpack.c.l.b16 %v514
        %v592 = vunpack.c.h.b16 %v514
        %v593 = vunpack.c.l.b16 %v515
        %v594 = vunpack.c.l.b16 %v516
        %v595 = vunpack.c.h.b16 %v516
        %v596 = vunpack.c.l.b16 %v517
        %v597 = vunpack.c.l.b16 %v518
        %v598 = vunpack.c.h.b16 %v518
        %v599 = vunpack.c.l.b16 %v519
        %v600 = vpack.c.b16 %v555, %v552
        %v601 = vpack.c.b16 %v556, %v553
        %v602 = vpack.c.b16 %v557, %v554
        %v603 = vpack.c.b16 %v561, %v558
        %v604 = vpack.c.b16 %v562, %v559
        %v605 = vpack.c.b16 %v563, %v560
        %v606 = vpack.c.b16 %v567, %v564
        %v607 = vpack.c.b16 %v568, %v565
        %v608 = vpack.c.b16 %v569, %v566
        %v609 = vpack.c.b16 %v573, %v570
        %v610 = vpack.c.b16 %v574, %v571
        %v611 = vpack.c.b16 %v575, %v572
        %v612 = vpack.c.b16 %v579, %v576
        %v613 = vpack.c.b16 %v580, %v577
        %v614 = vpack.c.b16 %v581, %v578
        %v615 = vpack.c.b16 %v585, %v582
        %v616 = vpack.c.b16 %v586, %v583
        %v617 = vpack.c.b16 %v587, %v584
        %v618 = vpack.c.b16 %v591, %v588
        %v619 = vpack.c.b16 %v592, %v589
        %v620 = vpack.c.b16 %v593, %v590
        %v621 = vpack.c.b16 %v597, %v594
        %v622 = vpack.c.b16 %v598, %v595
        %v623 = vpack.c.b16 %v599, %v596
        %648 = vmatprep.subr.bf16.mxu0 %v601
        %649 = vmatpush1.bf16.msra.mxu0 %v600
        %650 = vmatprep.subr.bf16.mxu0 %v604
        %651 = vmatpush1.bf16.msra.mxu0 %v603
        %652 = vmatprep.subr.bf16.mxu0 %v607
        %653 = vmatpush1.bf16.msra.mxu0 %v606
        %654 = vmatprep.subr.bf16.mxu0 %v610
        %655 = vmatpush1.bf16.msra.mxu0 %v609
        %656 = vmatprep.subr.bf16.mxu0 %v613
        %657 = vmatpush1.bf16.msra.mxu0 %v612
        %658 = vmatprep.subr.bf16.mxu0 %v616
        %659 = vmatpush1.bf16.msra.mxu0 %v615
        %660 = vmatprep.subr.bf16.mxu0 %v619
        %661 = vmatpush1.bf16.msra.mxu0 %v618
        %662 = vmatprep.subr.bf16.mxu0 %v622
        %663 = vmatpush1.bf16.msra.mxu0 %v621
        %664 = vmatprep.subr.bf16.mxu0 0
        %665 = vmatpush1.bf16.msra.mxu0 0
        %666 = vmatprep.subr.bf16.mxu0 0
        %667 = vmatpush1.bf16.msra.mxu0 0
        %668 = vmatprep.subr.bf16.mxu0 0
        %669 = vmatpush1.bf16.msra.mxu0 0
        %670 = vmatprep.subr.bf16.mxu0 0
        %671 = vmatpush1.bf16.msra.mxu0 0
        %672 = vmatprep.subr.bf16.mxu0 0
        %673 = vmatpush1.bf16.msra.mxu0 0
        %674 = vmatprep.subr.bf16.mxu0 0
        %675 = vmatpush1.bf16.msra.mxu0 0
        %676 = vmatprep.subr.bf16.mxu0 0
        %677 = vmatpush1.bf16.msra.mxu0 0
        %678 = vmatprep.subr.bf16.mxu0 0
        %679 = vmatpush1.bf16.msra.mxu0 0
        %680 = vmatprep.mubr.bf16.mxu0 0
        %681 = vmatmul.mubr.bf16.gmra.mrb[0].mxu0 %v486
        %v682 = vpop.f32.mrb[0].mxu0
        %v683 = vadd.f32 0.0, %v682
        %v684 = vpop.f32.mrb[0].mxu0
        %v685 = vadd.f32 0.0, %v684
        %v686 = vpop.f32.mrb[0].mxu0
        %v687 = vadd.f32 0.0, %v686
        %v688 = vpop.f32.mrb[0].mxu0
        %v689 = vadd.f32 0.0, %v688
        %690 = vmatprep.mubr.bf16.mxu0 0
        %691 = vmatmul.mubr.bf16.gmra.mrb[0].mxu0 %v487
        %v692 = vpop.f32.mrb[0].mxu0
        %v693 = vadd.f32 0.0, %v692
        %v694 = vpop.f32.mrb[0].mxu0
        %v695 = vadd.f32 0.0, %v694
        %v696 = vpop.f32.mrb[0].mxu0
        %v697 = vadd.f32 0.0, %v696
        %v698 = vpop.f32.mrb[0].mxu0
        %v699 = vadd.f32 0.0, %v698
        %700 = vdwg.mxu0
        %701 = vmatprep.subr.bf16.mxu0 0
        %702 = vmatpush1.bf16.msra.mxu0 %v602
        %703 = vmatprep.subr.bf16.mxu0 0
        %704 = vmatpush1.bf16.msra.mxu0 %v605
        %705 = vmatprep.subr.bf16.mxu0 0
        %706 = vmatpush1.bf16.msra.mxu0 %v608
        %707 = vmatprep.subr.bf16.mxu0 0
        %708 = vmatpush1.bf16.msra.mxu0 %v611
        %709 = vmatprep.subr.bf16.mxu0 0
        %710 = vmatpush1.bf16.msra.mxu0 %v614
        %711 = vmatprep.subr.bf16.mxu0 0
        %712 = vmatpush1.bf16.msra.mxu0 %v617
        %713 = vmatprep.subr.bf16.mxu0 0
        %714 = vmatpush1.bf16.msra.mxu0 %v620
        %715 = vmatprep.subr.bf16.mxu0 0
        %716 = vmatpush1.bf16.msra.mxu0 %v623
        %717 = vmatprep.subr.bf16.mxu0 0
        %718 = vmatpush1.bf16.msra.mxu0 0
        %719 = vmatprep.subr.bf16.mxu0 0
        %720 = vmatpush1.bf16.msra.mxu0 0
        %721 = vmatprep.subr.bf16.mxu0 0
        %722 = vmatpush1.bf16.msra.mxu0 0
        %723 = vmatprep.subr.bf16.mxu0 0
        %724 = vmatpush1.bf16.msra.mxu0 0
        %725 = vmatprep.subr.bf16.mxu0 0
        %726 = vmatpush1.bf16.msra.mxu0 0
        %727 = vmatprep.subr.bf16.mxu0 0
        %728 = vmatpush1.bf16.msra.mxu0 0
        %729 = vmatprep.subr.bf16.mxu0 0
        %730 = vmatpush1.bf16.msra.mxu0 0
        %731 = vmatprep.subr.bf16.mxu0 0
        %732 = vmatpush1.bf16.msra.mxu0 0
        %733 = vmatprep.mubr.bf16.mxu0 0
        %734 = vmatmul.mubr.bf16.gmra.mrb[0].mxu0 %v486
        %v735 = vpop.f32.mrb[0].mxu0
        %v736 = vadd.f32 0.0, %v735
        %v737 = vpop.f32.mrb[0].mxu0
        %v738 = vpop.f32.mrb[0].mxu0
        %v739 = vadd.f32 0.0, %v738
        %v740 = vpop.f32.mrb[0].mxu0
        %741 = vmatprep.mubr.bf16.mxu0 0
        %742 = vmatmul.mubr.bf16.gmra.mrb[0].mxu0 %v487
        %v743 = vpop.f32.mrb[0].mxu0
        %v744 = vadd.f32 0.0, %v743
        %v745 = vpop.f32.mrb[0].mxu0
        %v746 = vpop.f32.mrb[0].mxu0
        %v747 = vadd.f32 0.0, %v746
        %v748 = vpop.f32.mrb[0].mxu0
        %749 = vdwg.mxu0
        %v750 = vld [vmem:[%s419] sm:$0x1]
        %v751 = vcvt.s32.f32 %v750
        %v752 = vmul.f32 %v751, -1e+30
        %v753 = vpack.c.bf16 %v687, %v683
        %v754 = vpack.c.bf16 %v697, %v693
        %v755 = vpack.c.bf16 %v689, %v685
        %v756 = vpack.c.bf16 %v699, %v695
        %v758 = vlaneseq
        %v759 = vshrl.u32 %v758, 7
        %v760 = vsub.s32 0, %v759
        %v761 = vrot.slane %v752, %v760
        %vm763 = vcmask 261120
        %v765 = vsel %vm763, %v753, 0
        %v768 = vsel %vm763, %v754, 0
        %v771 = vsel %vm763, %v755, 0
        %v774 = vsel %vm763, %v756, 0
        %776 = vmatprep.subr.bf16.mxu0 0
        %777 = vmatpush1.bf16.xpose.msra.mxu0 %v771
        %778 = vmatprep.subr.bf16.mxu0 0
        %779 = vmatpush1.bf16.xpose.msra.mxu0 %v774
        %780 = vmatprep.subr.bf16.mxu0 0
        %781 = vmatpush1.bf16.xpose.msra.mxu0 0
        %782 = vmatprep.subr.bf16.mxu0 0
        %783 = vmatpush1.bf16.xpose.msra.mxu0 0
        %784 = vmatprep.subr.bf16.mxu0 0
        %785 = vmatpush1.bf16.xpose.msra.mxu0 0
        %786 = vmatprep.subr.bf16.mxu0 0
        %787 = vmatpush1.bf16.xpose.msra.mxu0 0
        %788 = vmatprep.subr.bf16.mxu0 0
        %789 = vmatpush1.bf16.xpose.msra.mxu0 0
        %790 = vmatprep.subr.bf16.mxu0 0
        %791 = vmatpush1.bf16.xpose.msra.mxu0 0
        %792 = vmatprep.subr.bf16.mxu0 0
        %793 = vmatpush1.bf16.xpose.msra.mxu0 0
        %794 = vmatprep.subr.bf16.mxu0 0
        %795 = vmatpush1.bf16.xpose.msra.mxu0 0
        %796 = vmatprep.subr.bf16.mxu0 0
        %797 = vmatpush1.bf16.xpose.msra.mxu0 0
        %798 = vmatprep.subr.bf16.mxu0 0
        %799 = vmatpush1.bf16.xpose.msra.mxu0 0
        %800 = vmatprep.subr.bf16.mxu0 0
        %801 = vmatpush1.bf16.xpose.msra.mxu0 0
        %802 = vmatprep.subr.bf16.mxu0 0
        %803 = vmatpush1.bf16.xpose.msra.mxu0 0
        %804 = vmatprep.subr.bf16.mxu0 0
        %805 = vmatpush1.bf16.xpose.msra.mxu0 0
        %806 = vmatprep.subr.bf16.mxu0 0
        %807 = vmatpush1.bf16.xpose.msra.mxu0 0
        %808 = vmatprep.mubr.bf16.mxu0 0
        %809 = vmatmul.mubr.bf16.gmra.mrb[0].mxu0 %v765
        %v810 = vpop.f32.mrb[0].mxu0
        %v811 = vadd.f32 %v761, %v810
        %v812 = vpop.f32.mrb[0].mxu0
        %v813 = vpop.f32.mrb[0].mxu0
        %v814 = vadd.f32 %v761, %v813
        %v815 = vpop.f32.mrb[0].mxu0
        %816 = vmatprep.mubr.bf16.mxu0 0
        %817 = vmatmul.mubr.bf16.gmra.mrb[0].mxu0 %v768
        %v818 = vpop.f32.mrb[0].mxu0
        %v819 = vadd.f32 %v761, %v818
        %v820 = vpop.f32.mrb[0].mxu0
        %v821 = vpop.f32.mrb[0].mxu0
        %v822 = vadd.f32 %v761, %v821
        %v823 = vpop.f32.mrb[0].mxu0
        %824 = vdwg.mxu0
        %v825 = vsel %vm763, %v811, -inf
        %826 = vmax.xlane.f32.xlu0 %v825
        %v827 = vpop.xlane.xlu0 %826
        %v828 = vsel %vm763, %v814, -inf
        %829 = vmax.xlane.f32.xlu0 %v828
        %v830 = vpop.xlane.xlu0 %829
        %v831 = vsel %vm763, %v819, -inf
        %832 = vmax.xlane.f32.xlu0 %v831
        %v833 = vpop.xlane.xlu0 %832
        %v834 = vsel %vm763, %v822, -inf
        %835 = vmax.xlane.f32.xlu0 %v834
        %v836 = vpop.xlane.xlu0 %835
        %v837 = vsub.f32 %v811, %v827
        %v838 = vsub.f32 %v814, %v830
        %v839 = vsub.f32 %v819, %v833
        %v840 = vsub.f32 %v822, %v836
        %v841 = vmul.f32 %v837, 1.442695
        %v842 = vpow.pop %v841
        %v843 = vmul.f32 %v838, 1.442695
        %v844 = vpow.pop %v843
        %v845 = vmul.f32 %v839, 1.442695
        %v846 = vpow.pop %v845
        %v847 = vmul.f32 %v840, 1.442695
        %v848 = vpow.pop %v847
        %v849 = vsel %vm763, %v842, 0.0
        %850 = vadd.xlane.f32.xlu0 %v849
        %v851 = vpop.xlane.xlu0 %850
        %v852 = vsel %vm763, %v844, 0.0
        %853 = vadd.xlane.f32.xlu0 %v852
        %v854 = vpop.xlane.xlu0 %853
        %v855 = vsel %vm763, %v846, 0.0
        %856 = vadd.xlane.f32.xlu0 %v855
        %v857 = vpop.xlane.xlu0 %856
        %v858 = vsel %vm763, %v848, 0.0
        %859 = vadd.xlane.f32.xlu0 %v858
        %v860 = vpop.xlane.xlu0 %859
        %v861 = vrcp.pop %v851
        %v862 = vrcp.pop %v854
        %v863 = vrcp.pop %v857
        %v864 = vrcp.pop %v860
        %v865 = vmul.f32 %v842, %v861
        %v866 = vmul.f32 %v844, %v862
        %v867 = vmul.f32 %v846, %v863
        %v868 = vmul.f32 %v848, %v864
        %869 = vst.msk [vmem:[%s416] sm:$0xff] %vm763, %v865
        %870 = vst.msk [vmem:[%s416 + $0x8] sm:$0xff] %vm763, %v866
        %871 = vst.msk [vmem:[%s416 + $0x10] sm:$0xff] %vm763, %v867
        %872 = vst.msk [vmem:[%s416 + $0x18] sm:$0xff] %vm763, %v868
        %v873 = vpack.c.bf16 %v866, %v865
        %v874 = vpack.c.bf16 %v868, %v867
        %v875 = vpack.c.bf16 %v739, %v736
        %v876 = vpack.c.bf16 %v747, %v744
        %v878 = vsel %vm763, %v873, 0
        %v881 = vsel %vm763, %v874, 0
        %883 = vmatprep.subr.bf16.mxu0 0
        %884 = vmatpush1.bf16.msra.mxu0 %v875
        %885 = vmatprep.subr.bf16.mxu0 0
        %886 = vmatpush1.bf16.msra.mxu0 %v876
        %887 = vmatprep.subr.bf16.mxu0 0
        %888 = vmatpush1.bf16.msra.mxu0 0
        %889 = vmatprep.subr.bf16.mxu0 0
        %890 = vmatpush1.bf16.msra.mxu0 0
        %891 = vmatprep.subr.bf16.mxu0 0
        %892 = vmatpush1.bf16.msra.mxu0 0
        %893 = vmatprep.subr.bf16.mxu0 0
        %894 = vmatpush1.bf16.msra.mxu0 0
        %895 = vmatprep.subr.bf16.mxu0 0
        %896 = vmatpush1.bf16.msra.mxu0 0
        %897 = vmatprep.subr.bf16.mxu0 0
        %898 = vmatpush1.bf16.msra.mxu0 0
        %899 = vmatprep.subr.bf16.mxu0 0
        %900 = vmatpush1.bf16.msra.mxu0 0
        %901 = vmatprep.subr.bf16.mxu0 0
        %902 = vmatpush1.bf16.msra.mxu0 0
        %903 = vmatprep.subr.bf16.mxu0 0
        %904 = vmatpush1.bf16.msra.mxu0 0
        %905 = vmatprep.subr.bf16.mxu0 0
        %906 = vmatpush1.bf16.msra.mxu0 0
        %907 = vmatprep.subr.bf16.mxu0 0
        %908 = vmatpush1.bf16.msra.mxu0 0
        %909 = vmatprep.subr.bf16.mxu0 0
        %910 = vmatpush1.bf16.msra.mxu0 0
        %911 = vmatprep.subr.bf16.mxu0 0
        %912 = vmatpush1.bf16.msra.mxu0 0
        %913 = vmatprep.subr.bf16.mxu0 0
        %914 = vmatpush1.bf16.msra.mxu0 0
        %915 = vmatprep.mubr.bf16.mxu0 0
        %916 = vmatmul.mubr.bf16.gmra.mrb[0].mxu0 %v878
        %v917 = vpop.f32.mrb[0].mxu0
        %v918 = vadd.f32 0.0, %v917
        %v919 = vpop.f32.mrb[0].mxu0
        %v920 = vpop.f32.mrb[0].mxu0
        %v921 = vadd.f32 0.0, %v920
        %v922 = vpop.f32.mrb[0].mxu0
        %923 = vmatprep.mubr.bf16.mxu0 0
        %924 = vmatmul.mubr.bf16.gmra.mrb[0].mxu0 %v881
        %v925 = vpop.f32.mrb[0].mxu0
        %v926 = vadd.f32 0.0, %v925
        %v927 = vpop.f32.mrb[0].mxu0
        %v928 = vpop.f32.mrb[0].mxu0
        %v929 = vadd.f32 0.0, %v928
        %v930 = vpop.f32.mrb[0].mxu0
        %931 = vdwg.mxu0
        %932 = vst.msk [vmem:[#allocation2] sm:$0xff] %vm763, %v918
        %933 = vst.msk [vmem:[#allocation2 + $0x8] sm:$0xff] %vm763, %v921
        %934 = vst.msk [vmem:[#allocation2 + $0x10] sm:$0xff] %vm763, %v926
        %935 = vst.msk [vmem:[#allocation2 + $0x18] sm:$0xff] %vm763, %v929
        %938 = vrot.lane.b32.xlu0 %v753, 96
        %v939 = vpop.permute.xlu0 %938
        %940 = vrot.lane.b32.xlu0 %v754, 96
        %v941 = vpop.permute.xlu0 %940
        %944 = vrot.lane.b32.xlu0 %v755, 96
        %v945 = vpop.permute.xlu0 %944
        %946 = vrot.lane.b32.xlu0 %v756, 96
        %v947 = vpop.permute.xlu0 %946
        %v949 = vsel %vm763, %v939, 0
        %v952 = vsel %vm763, %v941, 0
        %v955 = vsel %vm763, %v945, 0
        %v958 = vsel %vm763, %v947, 0
        %960 = vmatprep.subr.bf16.mxu0 0
        %961 = vmatpush1.bf16.xpose.msra.mxu0 %v955
        %962 = vmatprep.subr.bf16.mxu0 0
        %963 = vmatpush1.bf16.xpose.msra.mxu0 %v958
        %964 = vmatprep.subr.bf16.mxu0 0
        %965 = vmatpush1.bf16.xpose.msra.mxu0 0
        %966 = vmatprep.subr.bf16.mxu0 0
        %967 = vmatpush1.bf16.xpose.msra.mxu0 0
        %968 = vmatprep.subr.bf16.mxu0 0
        %969 = vmatpush1.bf16.xpose.msra.mxu0 0
        %970 = vmatprep.subr.bf16.mxu0 0
        %971 = vmatpush1.bf16.xpose.msra.mxu0 0
        %972 = vmatprep.subr.bf16.mxu0 0
        %973 = vmatpush1.bf16.xpose.msra.mxu0 0
        %974 = vmatprep.subr.bf16.mxu0 0
        %975 = vmatpush1.bf16.xpose.msra.mxu0 0
        %976 = vmatprep.subr.bf16.mxu0 0
        %977 = vmatpush1.bf16.xpose.msra.mxu0 0
        %978 = vmatprep.subr.bf16.mxu0 0
        %979 = vmatpush1.bf16.xpose.msra.mxu0 0
        %980 = vmatprep.subr.bf16.mxu0 0
        %981 = vmatpush1.bf16.xpose.msra.mxu0 0
        %982 = vmatprep.subr.bf16.mxu0 0
        %983 = vmatpush1.bf16.xpose.msra.mxu0 0
        %984 = vmatprep.subr.bf16.mxu0 0
        %985 = vmatpush1.bf16.xpose.msra.mxu0 0
        %986 = vmatprep.subr.bf16.mxu0 0
        %987 = vmatpush1.bf16.xpose.msra.mxu0 0
        %988 = vmatprep.subr.bf16.mxu0 0
        %989 = vmatpush1.bf16.xpose.msra.mxu0 0
        %990 = vmatprep.subr.bf16.mxu0 0
        %991 = vmatpush1.bf16.xpose.msra.mxu0 0
        %992 = vmatprep.mubr.bf16.mxu0 0
        %993 = vmatmul.mubr.bf16.gmra.mrb[0].mxu0 %v949
        %v994 = vpop.f32.mrb[0].mxu0
        %v995 = vadd.f32 %v761, %v994
        %v996 = vpop.f32.mrb[0].mxu0
        %v997 = vpop.f32.mrb[0].mxu0
        %v998 = vadd.f32 %v761, %v997
        %v999 = vpop.f32.mrb[0].mxu0
        %1000 = vmatprep.mubr.bf16.mxu0 0
        %1001 = vmatmul.mubr.bf16.gmra.mrb[0].mxu0 %v952
        %v1002 = vpop.f32.mrb[0].mxu0
        %v1003 = vadd.f32 %v761, %v1002
        %v1004 = vpop.f32.mrb[0].mxu0
        %v1005 = vpop.f32.mrb[0].mxu0
        %v1006 = vadd.f32 %v761, %v1005
        %v1007 = vpop.f32.mrb[0].mxu0
        %1008 = vdwg.mxu0
        %v1009 = vsel %vm763, %v995, -inf
        %1010 = vmax.xlane.f32.xlu0 %v1009
        %v1011 = vpop.xlane.xlu0 %1010
        %v1012 = vsel %vm763, %v998, -inf
        %1013 = vmax.xlane.f32.xlu0 %v1012
        %v1014 = vpop.xlane.xlu0 %1013
        %v1015 = vsel %vm763, %v1003, -inf
        %1016 = vmax.xlane.f32.xlu0 %v1015
        %v1017 = vpop.xlane.xlu0 %1016
        %v1018 = vsel %vm763, %v1006, -inf
        %1019 = vmax.xlane.f32.xlu0 %v1018
        %v1020 = vpop.xlane.xlu0 %1019
        %v1021 = vsub.f32 %v995, %v1011
        %v1022 = vsub.f32 %v998, %v1014
        %v1023 = vsub.f32 %v1003, %v1017
        %v1024 = vsub.f32 %v1006, %v1020
        %v1025 = vmul.f32 %v1021, 1.442695
        %v1026 = vpow.pop %v1025
        %v1027 = vmul.f32 %v1022, 1.442695
        %v1028 = vpow.pop %v1027
        %v1029 = vmul.f32 %v1023, 1.442695
        %v1030 = vpow.pop %v1029
        %v1031 = vmul.f32 %v1024, 1.442695
        %v1032 = vpow.pop %v1031
        %v1033 = vsel %vm763, %v1026, 0.0
        %1034 = vadd.xlane.f32.xlu0 %v1033
        %v1035 = vpop.xlane.xlu0 %1034
        %v1036 = vsel %vm763, %v1028, 0.0
        %1037 = vadd.xlane.f32.xlu0 %v1036
        %v1038 = vpop.xlane.xlu0 %1037
        %v1039 = vsel %vm763, %v1030, 0.0
        %1040 = vadd.xlane.f32.xlu0 %v1039
        %v1041 = vpop.xlane.xlu0 %1040
        %v1042 = vsel %vm763, %v1032, 0.0
        %1043 = vadd.xlane.f32.xlu0 %v1042
        %v1044 = vpop.xlane.xlu0 %1043
        %v1045 = vrcp.pop %v1035
        %v1046 = vrcp.pop %v1038
        %v1047 = vrcp.pop %v1041
        %v1048 = vrcp.pop %v1044
        %v1049 = vmul.f32 %v1026, %v1045
        %v1050 = vmul.f32 %v1028, %v1046
        %v1051 = vmul.f32 %v1030, %v1047
        %v1052 = vmul.f32 %v1032, %v1048
        %s1053 = scalar_lea.vmem %s416, 32 [#allocation15]
        %1054 = vst.msk [vmem:[%s1053] sm:$0xff] %vm763, %v1049
        %1055 = vst.msk [vmem:[%s1053 + $0x8] sm:$0xff] %vm763, %v1050
        %1056 = vst.msk [vmem:[%s1053 + $0x10] sm:$0xff] %vm763, %v1051
        %1057 = vst.msk [vmem:[%s1053 + $0x18] sm:$0xff] %vm763, %v1052
        %v1058 = vpack.c.bf16 %v1050, %v1049
        %v1059 = vpack.c.bf16 %v1052, %v1051
        %1062 = vrot.lane.b32.xlu0 %v875, 96
        %v1063 = vpop.permute.xlu0 %1062
        %1064 = vrot.lane.b32.xlu0 %v876, 96
        %v1065 = vpop.permute.xlu0 %1064
        %v1069 = vsel %vm763, %v1058, 0
        %v1072 = vsel %vm763, %v1059, 0
        %1074 = vmatprep.subr.bf16.mxu0 0
        %1075 = vmatpush1.bf16.msra.mxu0 %v1063
        %1076 = vmatprep.subr.bf16.mxu0 0
        %1077 = vmatpush1.bf16.msra.mxu0 %v1065
        %1078 = vmatprep.subr.bf16.mxu0 0
        %1079 = vmatpush1.bf16.msra.mxu0 0
        %1080 = vmatprep.subr.bf16.mxu0 0
        %1081 = vmatpush1.bf16.msra.mxu0 0
        %1082 = vmatprep.subr.bf16.mxu0 0
        %1083 = vmatpush1.bf16.msra.mxu0 0
        %1084 = vmatprep.subr.bf16.mxu0 0
        %1085 = vmatpush1.bf16.msra.mxu0 0
        %1086 = vmatprep.subr.bf16.mxu0 0
        %1087 = vmatpush1.bf16.msra.mxu0 0
        %1088 = vmatprep.subr.bf16.mxu0 0
        %1089 = vmatpush1.bf16.msra.mxu0 0
        %1090 = vmatprep.subr.bf16.mxu0 0
        %1091 = vmatpush1.bf16.msra.mxu0 0
        %1092 = vmatprep.subr.bf16.mxu0 0
        %1093 = vmatpush1.bf16.msra.mxu0 0
        %1094 = vmatprep.subr.bf16.mxu0 0
        %1095 = vmatpush1.bf16.msra.mxu0 0
        %1096 = vmatprep.subr.bf16.mxu0 0
        %1097 = vmatpush1.bf16.msra.mxu0 0
        %1098 = vmatprep.subr.bf16.mxu0 0
        %1099 = vmatpush1.bf16.msra.mxu0 0
        %1100 = vmatprep.subr.bf16.mxu0 0
        %1101 = vmatpush1.bf16.msra.mxu0 0
        %1102 = vmatprep.subr.bf16.mxu0 0
        %1103 = vmatpush1.bf16.msra.mxu0 0
        %1104 = vmatprep.subr.bf16.mxu0 0
        %1105 = vmatpush1.bf16.msra.mxu0 0
        %1106 = vmatprep.mubr.bf16.mxu0 0
        %1107 = vmatmul.mubr.bf16.gmra.mrb[0].mxu0 %v1069
        %v1108 = vpop.f32.mrb[0].mxu0
        %v1109 = vadd.f32 0.0, %v1108
        %v1110 = vpop.f32.mrb[0].mxu0
        %v1111 = vpop.f32.mrb[0].mxu0
        %v1112 = vadd.f32 0.0, %v1111
        %v1113 = vpop.f32.mrb[0].mxu0
        %1114 = vmatprep.mubr.bf16.mxu0 0
        %1115 = vmatmul.mubr.bf16.gmra.mrb[0].mxu0 %v1072
        %v1116 = vpop.f32.mrb[0].mxu0
        %v1117 = vadd.f32 0.0, %v1116
        %v1118 = vpop.f32.mrb[0].mxu0
        %v1119 = vpop.f32.mrb[0].mxu0
        %v1120 = vadd.f32 0.0, %v1119
        %v1121 = vpop.f32.mrb[0].mxu0
        %1122 = vdwg.mxu0
        %1127 = vrot.lane.b32.xlu0 %v1109, 32
        %v1128 = vpop.permute.xlu0 %1127
        %1129 = vrot.lane.b32.xlu0 %v1112, 32
        %v1130 = vpop.permute.xlu0 %1129
        %1131 = vrot.lane.b32.xlu0 %v1117, 32
        %v1132 = vpop.permute.xlu0 %1131
        %1133 = vrot.lane.b32.xlu0 %v1120, 32
        %v1134 = vpop.permute.xlu0 %1133
        %vm1139 = vcmask 523520
        %1140 = vst.msk [vmem:[#allocation2] sm:$0xff] %vm1139, %v1128
        %1141 = vst.msk [vmem:[#allocation2 + $0x8] sm:$0xff] %vm1139, %v1130
        %1142 = vst.msk [vmem:[#allocation2 + $0x10] sm:$0xff] %vm1139, %v1132
        %1143 = vst.msk [vmem:[#allocation2 + $0x18] sm:$0xff] %vm1139, %v1134
        %1144 = vrot.lane.b32.xlu0 %v753, 64
        %v1145 = vpop.permute.xlu0 %1144
        %1146 = vrot.lane.b32.xlu0 %v754, 64
        %v1147 = vpop.permute.xlu0 %1146
        %1148 = vrot.lane.b32.xlu0 %v755, 64
        %v1149 = vpop.permute.xlu0 %1148
        %1150 = vrot.lane.b32.xlu0 %v756, 64
        %v1151 = vpop.permute.xlu0 %1150
        %v1153 = vsel %vm763, %v1145, 0
        %v1156 = vsel %vm763, %v1147, 0
        %v1159 = vsel %vm763, %v1149, 0
        %v1162 = vsel %vm763, %v1151, 0
        %1164 = vmatprep.subr.bf16.mxu0 0
        %1165 = vmatpush1.bf16.xpose.msra.mxu0 %v1159
        %1166 = vmatprep.subr.bf16.mxu0 0
        %1167 = vmatpush1.bf16.xpose.msra.mxu0 %v1162
        %1168 = vmatprep.subr.bf16.mxu0 0
        %1169 = vmatpush1.bf16.xpose.msra.mxu0 0
        %1170 = vmatprep.subr.bf16.mxu0 0
        %1171 = vmatpush1.bf16.xpose.msra.mxu0 0
        %1172 = vmatprep.subr.bf16.mxu0 0
        %1173 = vmatpush1.bf16.xpose.msra.mxu0 0
        %1174 = vmatprep.subr.bf16.mxu0 0
        %1175 = vmatpush1.bf16.xpose.msra.mxu0 0
        %1176 = vmatprep.subr.bf16.mxu0 0
        %1177 = vmatpush1.bf16.xpose.msra.mxu0 0
        %1178 = vmatprep.subr.bf16.mxu0 0
        %1179 = vmatpush1.bf16.xpose.msra.mxu0 0
        %1180 = vmatprep.subr.bf16.mxu0 0
        %1181 = vmatpush1.bf16.xpose.msra.mxu0 0
        %1182 = vmatprep.subr.bf16.mxu0 0
        %1183 = vmatpush1.bf16.xpose.msra.mxu0 0
        %1184 = vmatprep.subr.bf16.mxu0 0
        %1185 = vmatpush1.bf16.xpose.msra.mxu0 0
        %1186 = vmatprep.subr.bf16.mxu0 0
        %1187 = vmatpush1.bf16.xpose.msra.mxu0 0
        %1188 = vmatprep.subr.bf16.mxu0 0
        %1189 = vmatpush1.bf16.xpose.msra.mxu0 0
        %1190 = vmatprep.subr.bf16.mxu0 0
        %1191 = vmatpush1.bf16.xpose.msra.mxu0 0
        %1192 = vmatprep.subr.bf16.mxu0 0
        %1193 = vmatpush1.bf16.xpose.msra.mxu0 0
        %1194 = vmatprep.subr.bf16.mxu0 0
        %1195 = vmatpush1.bf16.xpose.msra.mxu0 0
        %1196 = vmatprep.mubr.bf16.mxu0 0
        %1197 = vmatmul.mubr.bf16.gmra.mrb[0].mxu0 %v1153
        %v1198 = vpop.f32.mrb[0].mxu0
        %v1199 = vadd.f32 %v761, %v1198
        %v1200 = vpop.f32.mrb[0].mxu0
        %v1201 = vpop.f32.mrb[0].mxu0
        %v1202 = vadd.f32 %v761, %v1201
        %v1203 = vpop.f32.mrb[0].mxu0
        %1204 = vmatprep.mubr.bf16.mxu0 0
        %1205 = vmatmul.mubr.bf16.gmra.mrb[0].mxu0 %v1156
        %v1206 = vpop.f32.mrb[0].mxu0
        %v1207 = vadd.f32 %v761, %v1206
        %v1208 = vpop.f32.mrb[0].mxu0
        %v1209 = vpop.f32.mrb[0].mxu0
        %v1210 = vadd.f32 %v761, %v1209
        %v1211 = vpop.f32.mrb[0].mxu0
        %1212 = vdwg.mxu0
        %v1213 = vsel %vm763, %v1199, -inf
        %1214 = vmax.xlane.f32.xlu0 %v1213
        %v1215 = vpop.xlane.xlu0 %1214
        %v1216 = vsel %vm763, %v1202, -inf
        %1217 = vmax.xlane.f32.xlu0 %v1216
        %v1218 = vpop.xlane.xlu0 %1217
        %v1219 = vsel %vm763, %v1207, -inf
        %1220 = vmax.xlane.f32.xlu0 %v1219
        %v1221 = vpop.xlane.xlu0 %1220
        %v1222 = vsel %vm763, %v1210, -inf
        %1223 = vmax.xlane.f32.xlu0 %v1222
        %v1224 = vpop.xlane.xlu0 %1223
        %v1225 = vsub.f32 %v1199, %v1215
        %v1226 = vsub.f32 %v1202, %v1218
        %v1227 = vsub.f32 %v1207, %v1221
        %v1228 = vsub.f32 %v1210, %v1224
        %v1229 = vmul.f32 %v1225, 1.442695
        %v1230 = vpow.pop %v1229
        %v1231 = vmul.f32 %v1226, 1.442695
        %v1232 = vpow.pop %v1231
        %v1233 = vmul.f32 %v1227, 1.442695
        %v1234 = vpow.pop %v1233
        %v1235 = vmul.f32 %v1228, 1.442695
        %v1236 = vpow.pop %v1235
        %v1237 = vsel %vm763, %v1230, 0.0
        %1238 = vadd.xlane.f32.xlu0 %v1237
        %v1239 = vpop.xlane.xlu0 %1238
        %v1240 = vsel %vm763, %v1232, 0.0
        %1241 = vadd.xlane.f32.xlu0 %v1240
        %v1242 = vpop.xlane.xlu0 %1241
        %v1243 = vsel %vm763, %v1234, 0.0
        %1244 = vadd.xlane.f32.xlu0 %v1243
        %v1245 = vpop.xlane.xlu0 %1244
        %v1246 = vsel %vm763, %v1236, 0.0
        %1247 = vadd.xlane.f32.xlu0 %v1246
        %v1248 = vpop.xlane.xlu0 %1247
        %v1249 = vrcp.pop %v1239
        %v1250 = vrcp.pop %v1242
        %v1251 = vrcp.pop %v1245
        %v1252 = vrcp.pop %v1248
        %v1253 = vmul.f32 %v1230, %v1249
        %v1254 = vmul.f32 %v1232, %v1250
        %v1255 = vmul.f32 %v1234, %v1251
        %v1256 = vmul.f32 %v1236, %v1252
        %s1257 = scalar_lea.vmem %s416, 64 [#allocation15]
        %1258 = vst.msk [vmem:[%s1257] sm:$0xff] %vm763, %v1253
        %1259 = vst.msk [vmem:[%s1257 + $0x8] sm:$0xff] %vm763, %v1254
        %1260 = vst.msk [vmem:[%s1257 + $0x10] sm:$0xff] %vm763, %v1255
        %1261 = vst.msk [vmem:[%s1257 + $0x18] sm:$0xff] %vm763, %v1256
        %v1262 = vpack.c.bf16 %v1254, %v1253
        %v1263 = vpack.c.bf16 %v1256, %v1255
        %1264 = vrot.lane.b32.xlu0 %v875, 64
        %v1265 = vpop.permute.xlu0 %1264
        %1266 = vrot.lane.b32.xlu0 %v876, 64
        %v1267 = vpop.permute.xlu0 %1266
        %v1271 = vsel %vm763, %v1262, 0
        %v1274 = vsel %vm763, %v1263, 0
        %1276 = vmatprep.subr.bf16.mxu0 0
        %1277 = vmatpush1.bf16.msra.mxu0 %v1265
        %1278 = vmatprep.subr.bf16.mxu0 0
        %1279 = vmatpush1.bf16.msra.mxu0 %v1267
        %1280 = vmatprep.subr.bf16.mxu0 0
        %1281 = vmatpush1.bf16.msra.mxu0 0
        %1282 = vmatprep.subr.bf16.mxu0 0
        %1283 = vmatpush1.bf16.msra.mxu0 0
        %1284 = vmatprep.subr.bf16.mxu0 0
        %1285 = vmatpush1.bf16.msra.mxu0 0
        %1286 = vmatprep.subr.bf16.mxu0 0
        %1287 = vmatpush1.bf16.msra.mxu0 0
        %1288 = vmatprep.subr.bf16.mxu0 0
        %1289 = vmatpush1.bf16.msra.mxu0 0
        %1290 = vmatprep.subr.bf16.mxu0 0
        %1291 = vmatpush1.bf16.msra.mxu0 0
        %1292 = vmatprep.subr.bf16.mxu0 0
        %1293 = vmatpush1.bf16.msra.mxu0 0
        %1294 = vmatprep.subr.bf16.mxu0 0
        %1295 = vmatpush1.bf16.msra.mxu0 0
        %1296 = vmatprep.subr.bf16.mxu0 0
        %1297 = vmatpush1.bf16.msra.mxu0 0
        %1298 = vmatprep.subr.bf16.mxu0 0
        %1299 = vmatpush1.bf16.msra.mxu0 0
        %1300 = vmatprep.subr.bf16.mxu0 0
        %1301 = vmatpush1.bf16.msra.mxu0 0
        %1302 = vmatprep.subr.bf16.mxu0 0
        %1303 = vmatpush1.bf16.msra.mxu0 0
        %1304 = vmatprep.subr.bf16.mxu0 0
        %1305 = vmatpush1.bf16.msra.mxu0 0
        %1306 = vmatprep.subr.bf16.mxu0 0
        %1307 = vmatpush1.bf16.msra.mxu0 0
        %1308 = vmatprep.mubr.bf16.mxu0 0
        %1309 = vmatmul.mubr.bf16.gmra.mrb[0].mxu0 %v1271
        %v1310 = vpop.f32.mrb[0].mxu0
        %v1311 = vadd.f32 0.0, %v1310
        %v1312 = vpop.f32.mrb[0].mxu0
        %v1313 = vpop.f32.mrb[0].mxu0
        %v1314 = vadd.f32 0.0, %v1313
        %v1315 = vpop.f32.mrb[0].mxu0
        %1316 = vmatprep.mubr.bf16.mxu0 0
        %1317 = vmatmul.mubr.bf16.gmra.mrb[0].mxu0 %v1274
        %v1318 = vpop.f32.mrb[0].mxu0
        %v1319 = vadd.f32 0.0, %v1318
        %v1320 = vpop.f32.mrb[0].mxu0
        %v1321 = vpop.f32.mrb[0].mxu0
        %v1322 = vadd.f32 0.0, %v1321
        %v1323 = vpop.f32.mrb[0].mxu0
        %1324 = vdwg.mxu0
        %1329 = vrot.lane.b32.xlu0 %v1311, 64
        %v1330 = vpop.permute.xlu0 %1329
        %1331 = vrot.lane.b32.xlu0 %v1314, 64
        %v1332 = vpop.permute.xlu0 %1331
        %1333 = vrot.lane.b32.xlu0 %v1319, 64
        %v1334 = vpop.permute.xlu0 %1333
        %1335 = vrot.lane.b32.xlu0 %v1322, 64
        %v1336 = vpop.permute.xlu0 %1335
        %vm1341 = vcmask 785920
        %1342 = vst.msk [vmem:[#allocation2] sm:$0xff] %vm1341, %v1330
        %1343 = vst.msk [vmem:[#allocation2 + $0x8] sm:$0xff] %vm1341, %v1332
        %1344 = vst.msk [vmem:[#allocation2 + $0x10] sm:$0xff] %vm1341, %v1334
        %1345 = vst.msk [vmem:[#allocation2 + $0x18] sm:$0xff] %vm1341, %v1336
        %1346 = vrot.lane.b32.xlu0 %v753, 32
        %v1347 = vpop.permute.xlu0 %1346
        %1348 = vrot.lane.b32.xlu0 %v754, 32
        %v1349 = vpop.permute.xlu0 %1348
        %1350 = vrot.lane.b32.xlu0 %v755, 32
        %v1351 = vpop.permute.xlu0 %1350
        %1352 = vrot.lane.b32.xlu0 %v756, 32
        %v1353 = vpop.permute.xlu0 %1352
        %v1355 = vsel %vm763, %v1347, 0
        %v1358 = vsel %vm763, %v1349, 0
        %v1361 = vsel %vm763, %v1351, 0
        %v1364 = vsel %vm763, %v1353, 0
        %1366 = vmatprep.subr.bf16.mxu0 0
        %1367 = vmatpush1.bf16.xpose.msra.mxu0 %v1361
        %1368 = vmatprep.subr.bf16.mxu0 0
        %1369 = vmatpush1.bf16.xpose.msra.mxu0 %v1364
        %1370 = vmatprep.subr.bf16.mxu0 0
        %1371 = vmatpush1.bf16.xpose.msra.mxu0 0
        %1372 = vmatprep.subr.bf16.mxu0 0
        %1373 = vmatpush1.bf16.xpose.msra.mxu0 0
        %1374 = vmatprep.subr.bf16.mxu0 0
        %1375 = vmatpush1.bf16.xpose.msra.mxu0 0
        %1376 = vmatprep.subr.bf16.mxu0 0
        %1377 = vmatpush1.bf16.xpose.msra.mxu0 0
        %1378 = vmatprep.subr.bf16.mxu0 0
        %1379 = vmatpush1.bf16.xpose.msra.mxu0 0
        %1380 = vmatprep.subr.bf16.mxu0 0
        %1381 = vmatpush1.bf16.xpose.msra.mxu0 0
        %1382 = vmatprep.subr.bf16.mxu0 0
        %1383 = vmatpush1.bf16.xpose.msra.mxu0 0
        %1384 = vmatprep.subr.bf16.mxu0 0
        %1385 = vmatpush1.bf16.xpose.msra.mxu0 0
        %1386 = vmatprep.subr.bf16.mxu0 0
        %1387 = vmatpush1.bf16.xpose.msra.mxu0 0
        %1388 = vmatprep.subr.bf16.mxu0 0
        %1389 = vmatpush1.bf16.xpose.msra.mxu0 0
        %1390 = vmatprep.subr.bf16.mxu0 0
        %1391 = vmatpush1.bf16.xpose.msra.mxu0 0
        %1392 = vmatprep.subr.bf16.mxu0 0
        %1393 = vmatpush1.bf16.xpose.msra.mxu0 0
        %1394 = vmatprep.subr.bf16.mxu0 0
        %1395 = vmatpush1.bf16.xpose.msra.mxu0 0
        %1396 = vmatprep.subr.bf16.mxu0 0
        %1397 = vmatpush1.bf16.xpose.msra.mxu0 0
        %1398 = vmatprep.mubr.bf16.mxu0 0
        %1399 = vmatmul.mubr.bf16.gmra.mrb[0].mxu0 %v1355
        %v1400 = vpop.f32.mrb[0].mxu0
        %v1401 = vadd.f32 %v761, %v1400
        %v1402 = vpop.f32.mrb[0].mxu0
        %v1403 = vpop.f32.mrb[0].mxu0
        %v1404 = vadd.f32 %v761, %v1403
        %v1405 = vpop.f32.mrb[0].mxu0
        %1406 = vmatprep.mubr.bf16.mxu0 0
        %1407 = vmatmul.mubr.bf16.gmra.mrb[0].mxu0 %v1358
        %v1408 = vpop.f32.mrb[0].mxu0
        %v1409 = vadd.f32 %v761, %v1408
        %v1410 = vpop.f32.mrb[0].mxu0
        %v1411 = vpop.f32.mrb[0].mxu0
        %v1412 = vadd.f32 %v761, %v1411
        %v1413 = vpop.f32.mrb[0].mxu0
        %1414 = vdwg.mxu0
        %v1415 = vsel %vm763, %v1401, -inf
        %1416 = vmax.xlane.f32.xlu0 %v1415
        %v1417 = vpop.xlane.xlu0 %1416
        %v1418 = vsel %vm763, %v1404, -inf
        %1419 = vmax.xlane.f32.xlu0 %v1418
        %v1420 = vpop.xlane.xlu0 %1419
        %v1421 = vsel %vm763, %v1409, -inf
        %1422 = vmax.xlane.f32.xlu0 %v1421
        %v1423 = vpop.xlane.xlu0 %1422
        %v1424 = vsel %vm763, %v1412, -inf
        %1425 = vmax.xlane.f32.xlu0 %v1424
        %v1426 = vpop.xlane.xlu0 %1425
        %v1427 = vsub.f32 %v1401, %v1417
        %v1428 = vsub.f32 %v1404, %v1420
        %v1429 = vsub.f32 %v1409, %v1423
        %v1430 = vsub.f32 %v1412, %v1426
        %v1431 = vmul.f32 %v1427, 1.442695
        %v1432 = vpow.pop %v1431
        %v1433 = vmul.f32 %v1428, 1.442695
        %v1434 = vpow.pop %v1433
        %v1435 = vmul.f32 %v1429, 1.442695
        %v1436 = vpow.pop %v1435
        %v1437 = vmul.f32 %v1430, 1.442695
        %v1438 = vpow.pop %v1437
        %v1439 = vsel %vm763, %v1432, 0.0
        %1440 = vadd.xlane.f32.xlu0 %v1439
        %v1441 = vpop.xlane.xlu0 %1440
        %v1442 = vsel %vm763, %v1434, 0.0
        %1443 = vadd.xlane.f32.xlu0 %v1442
        %v1444 = vpop.xlane.xlu0 %1443
        %v1445 = vsel %vm763, %v1436, 0.0
        %1446 = vadd.xlane.f32.xlu0 %v1445
        %v1447 = vpop.xlane.xlu0 %1446
        %v1448 = vsel %vm763, %v1438, 0.0
        %1449 = vadd.xlane.f32.xlu0 %v1448
        %v1450 = vpop.xlane.xlu0 %1449
        %v1451 = vrcp.pop %v1441
        %v1452 = vrcp.pop %v1444
        %v1453 = vrcp.pop %v1447
        %v1454 = vrcp.pop %v1450
        %v1455 = vmul.f32 %v1432, %v1451
        %v1456 = vmul.f32 %v1434, %v1452
        %v1457 = vmul.f32 %v1436, %v1453
        %v1458 = vmul.f32 %v1438, %v1454
        %s1459 = scalar_lea.vmem %s416, 96 [#allocation15]
        %1460 = vst.msk [vmem:[%s1459] sm:$0xff] %vm763, %v1455
        %1461 = vst.msk [vmem:[%s1459 + $0x8] sm:$0xff] %vm763, %v1456
        %1462 = vst.msk [vmem:[%s1459 + $0x10] sm:$0xff] %vm763, %v1457
        %1463 = vst.msk [vmem:[%s1459 + $0x18] sm:$0xff] %vm763, %v1458
        %v1464 = vpack.c.bf16 %v1456, %v1455
        %v1465 = vpack.c.bf16 %v1458, %v1457
        %1466 = vrot.lane.b32.xlu0 %v875, 32
        %v1467 = vpop.permute.xlu0 %1466
        %1468 = vrot.lane.b32.xlu0 %v876, 32
        %v1469 = vpop.permute.xlu0 %1468
        %v1473 = vsel %vm763, %v1464, 0
        %v1476 = vsel %vm763, %v1465, 0
        %1478 = vmatprep.subr.bf16.mxu0 0
        %1479 = vmatpush1.bf16.msra.mxu0 %v1467
        %1480 = vmatprep.subr.bf16.mxu0 0
        %1481 = vmatpush1.bf16.msra.mxu0 %v1469
        %1482 = vmatprep.subr.bf16.mxu0 0
        %1483 = vmatpush1.bf16.msra.mxu0 0
        %1484 = vmatprep.subr.bf16.mxu0 0
        %1485 = vmatpush1.bf16.msra.mxu0 0
        %1486 = vmatprep.subr.bf16.mxu0 0
        %1487 = vmatpush1.bf16.msra.mxu0 0
        %1488 = vmatprep.subr.bf16.mxu0 0
        %1489 = vmatpush1.bf16.msra.mxu0 0
        %1490 = vmatprep.subr.bf16.mxu0 0
        %1491 = vmatpush1.bf16.msra.mxu0 0
        %1492 = vmatprep.subr.bf16.mxu0 0
        %1493 = vmatpush1.bf16.msra.mxu0 0
        %1494 = vmatprep.subr.bf16.mxu0 0
        %1495 = vmatpush1.bf16.msra.mxu0 0
        %1496 = vmatprep.subr.bf16.mxu0 0
        %1497 = vmatpush1.bf16.msra.mxu0 0
        %1498 = vmatprep.subr.bf16.mxu0 0
        %1499 = vmatpush1.bf16.msra.mxu0 0
        %1500 = vmatprep.subr.bf16.mxu0 0
        %1501 = vmatpush1.bf16.msra.mxu0 0
        %1502 = vmatprep.subr.bf16.mxu0 0
        %1503 = vmatpush1.bf16.msra.mxu0 0
        %1504 = vmatprep.subr.bf16.mxu0 0
        %1505 = vmatpush1.bf16.msra.mxu0 0
        %1506 = vmatprep.subr.bf16.mxu0 0
        %1507 = vmatpush1.bf16.msra.mxu0 0
        %1508 = vmatprep.subr.bf16.mxu0 0
        %1509 = vmatpush1.bf16.msra.mxu0 0
        %1510 = vmatprep.mubr.bf16.mxu0 0
        %1511 = vmatmul.mubr.bf16.gmra.mrb[0].mxu0 %v1473
        %v1512 = vpop.f32.mrb[0].mxu0
        %v1513 = vadd.f32 0.0, %v1512
        %v1514 = vpop.f32.mrb[0].mxu0
        %v1515 = vpop.f32.mrb[0].mxu0
        %v1516 = vadd.f32 0.0, %v1515
        %v1517 = vpop.f32.mrb[0].mxu0
        %1518 = vmatprep.mubr.bf16.mxu0 0
        %1519 = vmatmul.mubr.bf16.gmra.mrb[0].mxu0 %v1476
        %v1520 = vpop.f32.mrb[0].mxu0
        %v1521 = vadd.f32 0.0, %v1520
        %v1522 = vpop.f32.mrb[0].mxu0
        %v1523 = vpop.f32.mrb[0].mxu0
        %v1524 = vadd.f32 0.0, %v1523
        %v1525 = vpop.f32.mrb[0].mxu0
        %1526 = vdwg.mxu0
        %1531 = vrot.lane.b32.xlu0 %v1513, 96
        %v1532 = vpop.permute.xlu0 %1531
        %1533 = vrot.lane.b32.xlu0 %v1516, 96
        %v1534 = vpop.permute.xlu0 %1533
        %1535 = vrot.lane.b32.xlu0 %v1521, 96
        %v1536 = vpop.permute.xlu0 %1535
        %1537 = vrot.lane.b32.xlu0 %v1524, 96
        %v1538 = vpop.permute.xlu0 %1537
        %vm1543 = vcmask 1048320
        %1544 = vst.msk [vmem:[#allocation2] sm:$0xff] %vm1543, %v1532
        %1545 = vst.msk [vmem:[#allocation2 + $0x8] sm:$0xff] %vm1543, %v1534
        %1546 = vst.msk [vmem:[#allocation2 + $0x10] sm:$0xff] %vm1543, %v1536
        %1547 = vst.msk [vmem:[#allocation2 + $0x18] sm:$0xff] %vm1543, %v1538
        %v1548 = vld [vmem:[#allocation2] sm:$0xff]
        %v1549 = vld [vmem:[#allocation2 + $0x8] sm:$0xff]
        %v1550 = vld [vmem:[#allocation2 + $0x10] sm:$0xff]
        %v1551 = vld [vmem:[#allocation2 + $0x18] sm:$0xff]
        %v1552 = vpack.c.bf16 %v1549, %v1548
        %v1553 = vpack.c.bf16 %v1551, %v1550
        %v1554 = vld [vmem:[#allocation8] sm:$0xf]
        %v1555 = vld [vmem:[#allocation8 + $0x4] sm:$0xf]
        %v1556 = vld [vmem:[#allocation8 + $0x8] sm:$0xf]
        %v1557 = vld [vmem:[#allocation8 + $0xc] sm:$0xf]
        %v1558 = vld [vmem:[#allocation8 + $0x10] sm:$0xf]
        %v1559 = vld [vmem:[#allocation8 + $0x14] sm:$0xf]
        %v1560 = vld [vmem:[#allocation8 + $0x18] sm:$0xf]
        %v1561 = vld [vmem:[#allocation8 + $0x1c] sm:$0xf]
        %v1562 = vld [vmem:[#allocation8 + $0x20] sm:$0xf]
        %v1563 = vld [vmem:[#allocation8 + $0x24] sm:$0xf]
        %v1564 = vld [vmem:[#allocation8 + $0x28] sm:$0xf]
        %v1565 = vld [vmem:[#allocation8 + $0x2c] sm:$0xf]
        %v1566 = vld [vmem:[#allocation8 + $0x30] sm:$0xf]
        %v1567 = vld [vmem:[#allocation8 + $0x34] sm:$0xf]
        %v1568 = vld [vmem:[#allocation8 + $0x38] sm:$0xf]
        %v1569 = vld [vmem:[#allocation8 + $0x3c] sm:$0xf]
        %v1586 = vunpack.c.l.b16 %v1554
        %v1587 = vunpack.c.l.b16 %v1555
        %v1588 = vunpack.c.l.b16 %v1556
        %v1589 = vunpack.c.l.b16 %v1557
        %v1590 = vunpack.c.l.b16 %v1558
        %v1591 = vunpack.c.l.b16 %v1559
        %v1592 = vunpack.c.l.b16 %v1560
        %v1593 = vunpack.c.l.b16 %v1561
        %v1594 = vunpack.c.l.b16 %v1562
        %v1595 = vunpack.c.l.b16 %v1563
        %v1596 = vunpack.c.l.b16 %v1564
        %v1597 = vunpack.c.l.b16 %v1565
        %v1598 = vunpack.c.l.b16 %v1566
        %v1599 = vunpack.c.l.b16 %v1567
        %v1600 = vunpack.c.l.b16 %v1568
        %v1601 = vunpack.c.l.b16 %v1569
        %v1602 = vpack.c.b16 %v1587, %v1586
        %v1603 = vpack.c.b16 %v1589, %v1588
        %v1604 = vpack.c.b16 %v1591, %v1590
        %v1605 = vpack.c.b16 %v1593, %v1592
        %v1606 = vpack.c.b16 %v1595, %v1594
        %v1607 = vpack.c.b16 %v1597, %v1596
        %v1608 = vpack.c.b16 %v1599, %v1598
        %v1609 = vpack.c.b16 %v1601, %v1600
        %1618 = vmatprep.subr.bf16.mxu0 0
        %1619 = vmatpush1.bf16.msra.mxu0 %v1602
        %1620 = vmatprep.subr.bf16.mxu0 0
        %1621 = vmatpush1.bf16.msra.mxu0 %v1603
        %1622 = vmatprep.subr.bf16.mxu0 0
        %1623 = vmatpush1.bf16.msra.mxu0 %v1604
        %1624 = vmatprep.subr.bf16.mxu0 0
        %1625 = vmatpush1.bf16.msra.mxu0 %v1605
        %1626 = vmatprep.subr.bf16.mxu0 0
        %1627 = vmatpush1.bf16.msra.mxu0 %v1606
        %1628 = vmatprep.subr.bf16.mxu0 0
        %1629 = vmatpush1.bf16.msra.mxu0 %v1607
        %1630 = vmatprep.subr.bf16.mxu0 0
        %1631 = vmatpush1.bf16.msra.mxu0 %v1608
        %1632 = vmatprep.subr.bf16.mxu0 0
        %1633 = vmatpush1.bf16.msra.mxu0 %v1609
        %1634 = vmatprep.subr.bf16.mxu0 0
        %1635 = vmatpush1.bf16.msra.mxu0 0
        %1636 = vmatprep.subr.bf16.mxu0 0
        %1637 = vmatpush1.bf16.msra.mxu0 0
        %1638 = vmatprep.subr.bf16.mxu0 0
        %1639 = vmatpush1.bf16.msra.mxu0 0
        %1640 = vmatprep.subr.bf16.mxu0 0
        %1641 = vmatpush1.bf16.msra.mxu0 0
        %1642 = vmatprep.subr.bf16.mxu0 0
        %1643 = vmatpush1.bf16.msra.mxu0 0
        %1644 = vmatprep.subr.bf16.mxu0 0
        %1645 = vmatpush1.bf16.msra.mxu0 0
        %1646 = vmatprep.subr.bf16.mxu0 0
        %1647 = vmatpush1.bf16.msra.mxu0 0
        %1648 = vmatprep.subr.bf16.mxu0 0
        %1649 = vmatpush1.bf16.msra.mxu0 0
        %1650 = vmatprep.mubr.bf16.mxu0 0
        %1651 = vmatmul.mubr.bf16.gmra.mrb[0].mxu0 %v1552
        %v1652 = vpop.f32.mrb[0].mxu0
        %v1653 = vadd.f32 0.0, %v1652
        %v1654 = vpop.f32.mrb[0].mxu0
        %v1655 = vpop.f32.mrb[0].mxu0
        %v1656 = vadd.f32 0.0, %v1655
        %v1657 = vpop.f32.mrb[0].mxu0
        %1658 = vmatprep.mubr.bf16.mxu0 0
        %1659 = vmatmul.mubr.bf16.gmra.mrb[0].mxu0 %v1553
        %v1660 = vpop.f32.mrb[0].mxu0
        %v1661 = vadd.f32 0.0, %v1660
        %v1662 = vpop.f32.mrb[0].mxu0
        %v1663 = vpop.f32.mrb[0].mxu0
        %v1664 = vadd.f32 0.0, %v1663
        %v1665 = vpop.f32.mrb[0].mxu0
        %1666 = vdwg.mxu0
        %v1667 = vadd.f32 %v429, %v1653
        %v1668 = vadd.f32 %v430, %v1656
        %v1669 = vadd.f32 %v431, %v1661
        %v1670 = vadd.f32 %v432, %v1664
        %v1671 = vadd.f32 %v1667, %v425
        %v1672 = vadd.f32 %v1668, %v425
        %v1673 = vadd.f32 %v1669, %v425
        %v1674 = vadd.f32 %v1670, %v425
        %1675 = vadd.xlane.f32.xlu0 %v1671
        %v1676 = vpop.xlane.xlu0 %1675
        %1677 = vadd.xlane.f32.xlu0 %v1672
        %v1678 = vpop.xlane.xlu0 %1677
        %1679 = vadd.xlane.f32.xlu0 %v1673
        %v1680 = vpop.xlane.xlu0 %1679
        %1681 = vadd.xlane.f32.xlu0 %v1674
        %v1682 = vpop.xlane.xlu0 %1681
        %v1683 = vmul.f32 %v1676, %v441
        %v1684 = vmul.f32 %v1678, %v441
        %v1685 = vmul.f32 %v1680, %v441
        %v1686 = vmul.f32 %v1682, %v441
        %v1687 = vsub.f32 %v1671, %v1683
        %v1688 = vsub.f32 %v1672, %v1684
        %v1689 = vsub.f32 %v1673, %v1685
        %v1690 = vsub.f32 %v1674, %v1686
        %v1691 = vmul.f32 %v1687, %v1687
        %v1692 = vmul.f32 %v1688, %v1688
        %v1693 = vmul.f32 %v1689, %v1689
        %v1694 = vmul.f32 %v1690, %v1690
        %1695 = vadd.xlane.f32.xlu0 %v1691
        %v1696 = vpop.xlane.xlu0 %1695
        %1697 = vadd.xlane.f32.xlu0 %v1692
        %v1698 = vpop.xlane.xlu0 %1697
        %1699 = vadd.xlane.f32.xlu0 %v1693
        %v1700 = vpop.xlane.xlu0 %1699
        %1701 = vadd.xlane.f32.xlu0 %v1694
        %v1702 = vpop.xlane.xlu0 %1701
        %v1703 = vmul.f32 %v1696, %v441
        %v1704 = vmul.f32 %v1698, %v441
        %v1705 = vmul.f32 %v1700, %v441
        %v1706 = vmul.f32 %v1702, %v441
        %v1707 = vadd.f32 %v1703, 1e-05
        %v1708 = vadd.f32 %v1704, 1e-05
        %v1709 = vadd.f32 %v1705, 1e-05
        %v1710 = vadd.f32 %v1706, 1e-05
        %v1711 = vrsqrt.pop %v1707
        %v1712 = vrsqrt.pop %v1708
        %v1713 = vrsqrt.pop %v1709
        %v1714 = vrsqrt.pop %v1710
        %v1715 = vmul.f32 %v1711, %v423
        %v1716 = vmul.f32 %v1712, %v423
        %v1717 = vmul.f32 %v1713, %v423
        %v1718 = vmul.f32 %v1714, %v423
        %v1719 = vmul.f32 %v1687, %v1715
        %v1720 = vmul.f32 %v1688, %v1716
        %v1721 = vmul.f32 %v1689, %v1717
        %v1722 = vmul.f32 %v1690, %v1718
        %v1723 = vadd.f32 %v1719, %v424
        %v1724 = vadd.f32 %v1720, %v424
        %v1725 = vadd.f32 %v1721, %v424
        %v1726 = vadd.f32 %v1722, %v424
        %v1727 = vpack.c.bf16 %v1724, %v1723
        %v1728 = vpack.c.bf16 %v1726, %v1725
        %v1729 = vld [vmem:[#allocation9] sm:$0xff]
        %v1730 = vld [vmem:[#allocation9 + $0x8] sm:$0xff]
        %v1731 = vld [vmem:[#allocation9 + $0x10] sm:$0xff]
        %v1732 = vld [vmem:[#allocation9 + $0x18] sm:$0xff]
        %v1733 = vld [vmem:[#allocation9 + $0x20] sm:$0xff]
        %v1734 = vld [vmem:[#allocation9 + $0x28] sm:$0xff]
        %v1735 = vld [vmem:[#allocation9 + $0x30] sm:$0xff]
        %v1736 = vld [vmem:[#allocation9 + $0x38] sm:$0xff]
        %v1737 = vld [vmem:[#allocation9 + $0x40] sm:$0xff]
        %v1738 = vld [vmem:[#allocation9 + $0x48] sm:$0xff]
        %v1739 = vld [vmem:[#allocation9 + $0x50] sm:$0xff]
        %v1740 = vld [vmem:[#allocation9 + $0x58] sm:$0xff]
        %v1741 = vld [vmem:[#allocation9 + $0x60] sm:$0xff]
        %v1742 = vld [vmem:[#allocation9 + $0x68] sm:$0xff]
        %v1743 = vld [vmem:[#allocation9 + $0x70] sm:$0xff]
        %v1744 = vld [vmem:[#allocation9 + $0x78] sm:$0xff]
        %v1745 = vld [vmem:[#allocation9 + $0x80] sm:$0xff]
        %v1746 = vld [vmem:[#allocation9 + $0x88] sm:$0xff]
        %v1747 = vld [vmem:[#allocation9 + $0x90] sm:$0xff]
        %v1748 = vld [vmem:[#allocation9 + $0x98] sm:$0xff]
        %v1749 = vld [vmem:[#allocation9 + $0xa0] sm:$0xff]
        %v1750 = vld [vmem:[#allocation9 + $0xa8] sm:$0xff]
        %v1751 = vld [vmem:[#allocation9 + $0xb0] sm:$0xff]
        %v1752 = vld [vmem:[#allocation9 + $0xb8] sm:$0xff]
        %v1753 = vld [vmem:[#allocation9 + $0xc0] sm:$0xff]
        %v1754 = vld [vmem:[#allocation9 + $0xc8] sm:$0xff]
        %v1755 = vld [vmem:[#allocation9 + $0xd0] sm:$0xff]
        %v1756 = vld [vmem:[#allocation9 + $0xd8] sm:$0xff]
        %v1757 = vld [vmem:[#allocation9 + $0xe0] sm:$0xff]
        %v1758 = vld [vmem:[#allocation9 + $0xe8] sm:$0xff]
        %v1759 = vld [vmem:[#allocation9 + $0xf0] sm:$0xff]
        %v1760 = vld [vmem:[#allocation9 + $0xf8] sm:$0xff]
        %v1762 = vlaneseq
        %v1763 = vshrl.u32 %v1762, 7
        %v1764 = vsub.s32 0, %v1763
        %v1765 = vrot.slane %v428, %v1764
        %v1766 = vlaneseq
        %v1767 = vshrl.u32 %v1766, 7
        %v1768 = vsub.s32 1, %v1767
        %v1769 = vrot.slane %v428, %v1768
        %v1770 = vlaneseq
        %v1771 = vshrl.u32 %v1770, 7
        %v1772 = vsub.s32 2, %v1771
        %v1773 = vrot.slane %v428, %v1772
        %v1774 = vlaneseq
        %v1775 = vshrl.u32 %v1774, 7
        %v1776 = vsub.s32 3, %v1775
        %v1777 = vrot.slane %v428, %v1776
        %v1814 = vunpack.c.l.b16 %v1729
        %v1815 = vunpack.c.h.b16 %v1729
        %v1816 = vunpack.c.l.b16 %v1730
        %v1817 = vunpack.c.h.b16 %v1730
        %v1818 = vunpack.c.l.b16 %v1731
        %v1819 = vunpack.c.h.b16 %v1731
        %v1820 = vunpack.c.l.b16 %v1732
        %v1821 = vunpack.c.h.b16 %v1732
        %v1822 = vunpack.c.l.b16 %v1733
        %v1823 = vunpack.c.h.b16 %v1733
        %v1824 = vunpack.c.l.b16 %v1734
        %v1825 = vunpack.c.h.b16 %v1734
        %v1826 = vunpack.c.l.b16 %v1735
        %v1827 = vunpack.c.h.b16 %v1735
        %v1828 = vunpack.c.l.b16 %v1736
        %v1829 = vunpack.c.h.b16 %v1736
        %v1830 = vunpack.c.l.b16 %v1737
        %v1831 = vunpack.c.h.b16 %v1737
        %v1832 = vunpack.c.l.b16 %v1738
        %v1833 = vunpack.c.h.b16 %v1738
        %v1834 = vunpack.c.l.b16 %v1739
        %v1835 = vunpack.c.h.b16 %v1739
        %v1836 = vunpack.c.l.b16 %v1740
        %v1837 = vunpack.c.h.b16 %v1740
        %v1838 = vunpack.c.l.b16 %v1741
        %v1839 = vunpack.c.h.b16 %v1741
        %v1840 = vunpack.c.l.b16 %v1742
        %v1841 = vunpack.c.h.b16 %v1742
        %v1842 = vunpack.c.l.b16 %v1743
        %v1843 = vunpack.c.h.b16 %v1743
        %v1844 = vunpack.c.l.b16 %v1744
        %v1845 = vunpack.c.h.b16 %v1744
        %v1846 = vunpack.c.l.b16 %v1745
        %v1847 = vunpack.c.h.b16 %v1745
        %v1848 = vunpack.c.l.b16 %v1746
        %v1849 = vunpack.c.h.b16 %v1746
        %v1850 = vunpack.c.l.b16 %v1747
        %v1851 = vunpack.c.h.b16 %v1747
        %v1852 = vunpack.c.l.b16 %v1748
        %v1853 = vunpack.c.h.b16 %v1748
        %v1854 = vunpack.c.l.b16 %v1749
        %v1855 = vunpack.c.h.b16 %v1749
        %v1856 = vunpack.c.l.b16 %v1750
        %v1857 = vunpack.c.h.b16 %v1750
        %v1858 = vunpack.c.l.b16 %v1751
        %v1859 = vunpack.c.h.b16 %v1751
        %v1860 = vunpack.c.l.b16 %v1752
        %v1861 = vunpack.c.h.b16 %v1752
        %v1862 = vunpack.c.l.b16 %v1753
        %v1863 = vunpack.c.h.b16 %v1753
        %v1864 = vunpack.c.l.b16 %v1754
        %v1865 = vunpack.c.h.b16 %v1754
        %v1866 = vunpack.c.l.b16 %v1755
        %v1867 = vunpack.c.h.b16 %v1755
        %v1868 = vunpack.c.l.b16 %v1756
        %v1869 = vunpack.c.h.b16 %v1756
        %v1870 = vunpack.c.l.b16 %v1757
        %v1871 = vunpack.c.h.b16 %v1757
        %v1872 = vunpack.c.l.b16 %v1758
        %v1873 = vunpack.c.h.b16 %v1758
        %v1874 = vunpack.c.l.b16 %v1759
        %v1875 = vunpack.c.h.b16 %v1759
        %v1876 = vunpack.c.l.b16 %v1760
        %v1877 = vunpack.c.h.b16 %v1760
        %v1878 = vpack.c.b16 %v1818, %v1814
        %v1879 = vpack.c.b16 %v1819, %v1815
        %v1880 = vpack.c.b16 %v1820, %v1816
        %v1881 = vpack.c.b16 %v1821, %v1817
        %v1882 = vpack.c.b16 %v1826, %v1822
        %v1883 = vpack.c.b16 %v1827, %v1823
        %v1884 = vpack.c.b16 %v1828, %v1824
        %v1885 = vpack.c.b16 %v1829, %v1825
        %v1886 = vpack.c.b16 %v1834, %v1830
        %v1887 = vpack.c.b16 %v1835, %v1831
        %v1888 = vpack.c.b16 %v1836, %v1832
        %v1889 = vpack.c.b16 %v1837, %v1833
        %v1890 = vpack.c.b16 %v1842, %v1838
        %v1891 = vpack.c.b16 %v1843, %v1839
        %v1892 = vpack.c.b16 %v1844, %v1840
        %v1893 = vpack.c.b16 %v1845, %v1841
        %v1894 = vpack.c.b16 %v1850, %v1846
        %v1895 = vpack.c.b16 %v1851, %v1847
        %v1896 = vpack.c.b16 %v1852, %v1848
        %v1897 = vpack.c.b16 %v1853, %v1849
        %v1898 = vpack.c.b16 %v1858, %v1854
        %v1899 = vpack.c.b16 %v1859, %v1855
        %v1900 = vpack.c.b16 %v1860, %v1856
        %v1901 = vpack.c.b16 %v1861, %v1857
        %v1902 = vpack.c.b16 %v1866, %v1862
        %v1903 = vpack.c.b16 %v1867, %v1863
        %v1904 = vpack.c.b16 %v1868, %v1864
        %v1905 = vpack.c.b16 %v1869, %v1865
        %v1906 = vpack.c.b16 %v1874, %v1870
        %v1907 = vpack.c.b16 %v1875, %v1871
        %v1908 = vpack.c.b16 %v1876, %v1872
        %v1909 = vpack.c.b16 %v1877, %v1873
        %1942 = vmatprep.subr.bf16.mxu0 %v1879
        %1943 = vmatpush1.bf16.msra.mxu0 %v1878
        %1944 = vmatprep.subr.bf16.mxu0 %v1883
        %1945 = vmatpush1.bf16.msra.mxu0 %v1882
        %1946 = vmatprep.subr.bf16.mxu0 %v1887
        %1947 = vmatpush1.bf16.msra.mxu0 %v1886
        %1948 = vmatprep.subr.bf16.mxu0 %v1891
        %1949 = vmatpush1.bf16.msra.mxu0 %v1890
        %1950 = vmatprep.subr.bf16.mxu0 %v1895
        %1951 = vmatpush1.bf16.msra.mxu0 %v1894
        %1952 = vmatprep.subr.bf16.mxu0 %v1899
        %1953 = vmatpush1.bf16.msra.mxu0 %v1898
        %1954 = vmatprep.subr.bf16.mxu0 %v1903
        %1955 = vmatpush1.bf16.msra.mxu0 %v1902
        %1956 = vmatprep.subr.bf16.mxu0 %v1907
        %1957 = vmatpush1.bf16.msra.mxu0 %v1906
        %1958 = vmatprep.subr.bf16.mxu0 0
        %1959 = vmatpush1.bf16.msra.mxu0 0
        %1960 = vmatprep.subr.bf16.mxu0 0
        %1961 = vmatpush1.bf16.msra.mxu0 0
        %1962 = vmatprep.subr.bf16.mxu0 0
        %1963 = vmatpush1.bf16.msra.mxu0 0
        %1964 = vmatprep.subr.bf16.mxu0 0
        %1965 = vmatpush1.bf16.msra.mxu0 0
        %1966 = vmatprep.subr.bf16.mxu0 0
        %1967 = vmatpush1.bf16.msra.mxu0 0
        %1968 = vmatprep.subr.bf16.mxu0 0
        %1969 = vmatpush1.bf16.msra.mxu0 0
        %1970 = vmatprep.subr.bf16.mxu0 0
        %1971 = vmatpush1.bf16.msra.mxu0 0
        %1972 = vmatprep.subr.bf16.mxu0 0
        %1973 = vmatpush1.bf16.msra.mxu0 0
        %1974 = vmatprep.mubr.bf16.mxu0 0
        %1975 = vmatmul.mubr.bf16.gmra.mrb[0].mxu0 %v1727
        %v1976 = vpop.f32.mrb[0].mxu0
        %v1977 = vadd.f32 %v1765, %v1976
        %v1978 = vpop.f32.mrb[0].mxu0
        %v1979 = vadd.f32 %v1769, %v1978
        %v1980 = vpop.f32.mrb[0].mxu0
        %v1981 = vadd.f32 %v1765, %v1980
        %v1982 = vpop.f32.mrb[0].mxu0
        %v1983 = vadd.f32 %v1769, %v1982
        %1984 = vmatprep.mubr.bf16.mxu0 0
        %1985 = vmatmul.mubr.bf16.gmra.mrb[0].mxu0 %v1728
        %v1986 = vpop.f32.mrb[0].mxu0
        %v1987 = vadd.f32 %v1765, %v1986
        %v1988 = vpop.f32.mrb[0].mxu0
        %v1989 = vadd.f32 %v1769, %v1988
        %v1990 = vpop.f32.mrb[0].mxu0
        %v1991 = vadd.f32 %v1765, %v1990
        %v1992 = vpop.f32.mrb[0].mxu0
        %v1993 = vadd.f32 %v1769, %v1992
        %1994 = vdwg.mxu0
        %1995 = vmatprep.subr.bf16.mxu0 %v1881
        %1996 = vmatpush1.bf16.msra.mxu0 %v1880
        %1997 = vmatprep.subr.bf16.mxu0 %v1885
        %1998 = vmatpush1.bf16.msra.mxu0 %v1884
        %1999 = vmatprep.subr.bf16.mxu0 %v1889
        %2000 = vmatpush1.bf16.msra.mxu0 %v1888
        %2001 = vmatprep.subr.bf16.mxu0 %v1893
        %2002 = vmatpush1.bf16.msra.mxu0 %v1892
        %2003 = vmatprep.subr.bf16.mxu0 %v1897
        %2004 = vmatpush1.bf16.msra.mxu0 %v1896
        %2005 = vmatprep.subr.bf16.mxu0 %v1901
        %2006 = vmatpush1.bf16.msra.mxu0 %v1900
        %2007 = vmatprep.subr.bf16.mxu0 %v1905
        %2008 = vmatpush1.bf16.msra.mxu0 %v1904
        %2009 = vmatprep.subr.bf16.mxu0 %v1909
        %2010 = vmatpush1.bf16.msra.mxu0 %v1908
        %2011 = vmatprep.subr.bf16.mxu0 0
        %2012 = vmatpush1.bf16.msra.mxu0 0
        %2013 = vmatprep.subr.bf16.mxu0 0
        %2014 = vmatpush1.bf16.msra.mxu0 0
        %2015 = vmatprep.subr.bf16.mxu0 0
        %2016 = vmatpush1.bf16.msra.mxu0 0
        %2017 = vmatprep.subr.bf16.mxu0 0
        %2018 = vmatpush1.bf16.msra.mxu0 0
        %2019 = vmatprep.subr.bf16.mxu0 0
        %2020 = vmatpush1.bf16.msra.mxu0 0
        %2021 = vmatprep.subr.bf16.mxu0 0
        %2022 = vmatpush1.bf16.msra.mxu0 0
        %2023 = vmatprep.subr.bf16.mxu0 0
        %2024 = vmatpush1.bf16.msra.mxu0 0
        %2025 = vmatprep.subr.bf16.mxu0 0
        %2026 = vmatpush1.bf16.msra.mxu0 0
        %2027 = vmatprep.mubr.bf16.mxu0 0
        %2028 = vmatmul.mubr.bf16.gmra.mrb[0].mxu0 %v1727
        %v2029 = vpop.f32.mrb[0].mxu0
        %v2030 = vadd.f32 %v1773, %v2029
        %v2031 = vpop.f32.mrb[0].mxu0
        %v2032 = vadd.f32 %v1777, %v2031
        %v2033 = vpop.f32.mrb[0].mxu0
        %v2034 = vadd.f32 %v1773, %v2033
        %v2035 = vpop.f32.mrb[0].mxu0
        %v2036 = vadd.f32 %v1777, %v2035
        %2037 = vmatprep.mubr.bf16.mxu0 0
        %2038 = vmatmul.mubr.bf16.gmra.mrb[0].mxu0 %v1728
        %v2039 = vpop.f32.mrb[0].mxu0
        %v2040 = vadd.f32 %v1773, %v2039
        %v2041 = vpop.f32.mrb[0].mxu0
        %v2042 = vadd.f32 %v1777, %v2041
        %v2043 = vpop.f32.mrb[0].mxu0
        %v2044 = vadd.f32 %v1773, %v2043
        %v2045 = vpop.f32.mrb[0].mxu0
        %v2046 = vadd.f32 %v1777, %v2045
        %2047 = vdwg.mxu0
        %v2048 = vmul.f32 %v1977, 0.5
        %v2049 = vmul.f32 %v1979, 0.5
        %v2050 = vmul.f32 %v2030, 0.5
        %v2051 = vmul.f32 %v2032, 0.5
        %v2052 = vmul.f32 %v1981, 0.5
        %v2053 = vmul.f32 %v1983, 0.5
        %v2054 = vmul.f32 %v2034, 0.5
        %v2055 = vmul.f32 %v2036, 0.5
        %v2056 = vmul.f32 %v1987, 0.5
        %v2057 = vmul.f32 %v1989, 0.5
        %v2058 = vmul.f32 %v2040, 0.5
        %v2059 = vmul.f32 %v2042, 0.5
        %v2060 = vmul.f32 %v1991, 0.5
        %v2061 = vmul.f32 %v1993, 0.5
        %v2062 = vmul.f32 %v2044, 0.5
        %v2063 = vmul.f32 %v2046, 0.5
        %v2064 = vmul.f32 %v1977, 0.70710677
        %v2065 = vmul.f32 %v1979, 0.70710677
        %v2066 = vmul.f32 %v2030, 0.70710677
        %v2067 = vmul.f32 %v2032, 0.70710677
        %v2068 = vmul.f32 %v1981, 0.70710677
        %v2069 = vmul.f32 %v1983, 0.70710677
        %v2070 = vmul.f32 %v2034, 0.70710677
        %v2071 = vmul.f32 %v2036, 0.70710677
        %v2072 = vmul.f32 %v1987, 0.70710677
        %v2073 = vmul.f32 %v1989, 0.70710677
        %v2074 = vmul.f32 %v2040, 0.70710677
        %v2075 = vmul.f32 %v2042, 0.70710677
        %v2076 = vmul.f32 %v1991, 0.70710677
        %v2077 = vmul.f32 %v1993, 0.70710677
        %v2078 = vmul.f32 %v2044, 0.70710677
        %v2079 = vmul.f32 %v2046, 0.70710677
        %v2080 = vand.u32 2147483647, %v2064
        %v2081 = vand.u32 2147483647, %v2065
        %v2082 = vand.u32 2147483647, %v2066
        %v2083 = vand.u32 2147483647, %v2067
        %v2084 = vand.u32 2147483647, %v2068
        %v2085 = vand.u32 2147483647, %v2069
        %v2086 = vand.u32 2147483647, %v2070
        %v2087 = vand.u32 2147483647, %v2071
        %v2088 = vand.u32 2147483647, %v2072
        %v2089 = vand.u32 2147483647, %v2073
        %v2090 = vand.u32 2147483647, %v2074
        %v2091 = vand.u32 2147483647, %v2075
        %v2092 = vand.u32 2147483647, %v2076
        %v2093 = vand.u32 2147483647, %v2077
        %v2094 = vand.u32 2147483647, %v2078
        %v2095 = vand.u32 2147483647, %v2079
        %v2096 = vmul.f32 %v2080, 0.3275911
        %v2097 = vmul.f32 %v2081, 0.3275911
        %v2098 = vmul.f32 %v2082, 0.3275911
        %v2099 = vmul.f32 %v2083, 0.3275911
        %v2100 = vmul.f32 %v2084, 0.3275911
        %v2101 = vmul.f32 %v2085, 0.3275911
        %v2102 = vmul.f32 %v2086, 0.3275911
        %v2103 = vmul.f32 %v2087, 0.3275911
        %v2104 = vmul.f32 %v2088, 0.3275911
        %v2105 = vmul.f32 %v2089, 0.3275911
        %v2106 = vmul.f32 %v2090, 0.3275911
        %v2107 = vmul.f32 %v2091, 0.3275911
        %v2108 = vmul.f32 %v2092, 0.3275911
        %v2109 = vmul.f32 %v2093, 0.3275911
        %v2110 = vmul.f32 %v2094, 0.3275911
        %v2111 = vmul.f32 %v2095, 0.3275911
        %v2112 = vadd.f32 %v2096, 1.0
        %v2113 = vadd.f32 %v2097, 1.0
        %v2114 = vadd.f32 %v2098, 1.0
        %v2115 = vadd.f32 %v2099, 1.0
        %v2116 = vadd.f32 %v2100, 1.0
        %v2117 = vadd.f32 %v2101, 1.0
        %v2118 = vadd.f32 %v2102, 1.0
        %v2119 = vadd.f32 %v2103, 1.0
        %v2120 = vadd.f32 %v2104, 1.0
        %v2121 = vadd.f32 %v2105, 1.0
        %v2122 = vadd.f32 %v2106, 1.0
        %v2123 = vadd.f32 %v2107, 1.0
        %v2124 = vadd.f32 %v2108, 1.0
        %v2125 = vadd.f32 %v2109, 1.0
        %v2126 = vadd.f32 %v2110, 1.0
        %v2127 = vadd.f32 %v2111, 1.0
        %v2128 = vrcp.pop %v2112
        %v2129 = vrcp.pop %v2113
        %v2130 = vrcp.pop %v2114
        %v2131 = vrcp.pop %v2115
        %v2132 = vrcp.pop %v2116
        %v2133 = vrcp.pop %v2117
        %v2134 = vrcp.pop %v2118
        %v2135 = vrcp.pop %v2119
        %v2136 = vrcp.pop %v2120
        %v2137 = vrcp.pop %v2121
        %v2138 = vrcp.pop %v2122
        %v2139 = vrcp.pop %v2123
        %v2140 = vrcp.pop %v2124
        %v2141 = vrcp.pop %v2125
        %v2142 = vrcp.pop %v2126
        %v2143 = vrcp.pop %v2127
        %v2144 = vmul.f32 %v2128, 1.0614054
        %v2145 = vmul.f32 %v2129, 1.0614054
        %v2146 = vmul.f32 %v2130, 1.0614054
        %v2147 = vmul.f32 %v2131, 1.0614054
        %v2148 = vmul.f32 %v2132, 1.0614054
        %v2149 = vmul.f32 %v2133, 1.0614054
        %v2150 = vmul.f32 %v2134, 1.0614054
        %v2151 = vmul.f32 %v2135, 1.0614054
        %v2152 = vmul.f32 %v2136, 1.0614054
        %v2153 = vmul.f32 %v2137, 1.0614054
        %v2154 = vmul.f32 %v2138, 1.0614054
        %v2155 = vmul.f32 %v2139, 1.0614054
        %v2156 = vmul.f32 %v2140, 1.0614054
        %v2157 = vmul.f32 %v2141, 1.0614054
        %v2158 = vmul.f32 %v2142, 1.0614054
        %v2159 = vmul.f32 %v2143, 1.0614054
        %v2160 = vadd.f32 %v2144, -1.4531521
        %v2161 = vadd.f32 %v2145, -1.4531521
        %v2162 = vadd.f32 %v2146, -1.4531521
        %v2163 = vadd.f32 %v2147, -1.4531521
        %v2164 = vadd.f32 %v2148, -1.4531521
        %v2165 = vadd.f32 %v2149, -1.4531521
        %v2166 = vadd.f32 %v2150, -1.4531521
        %v2167 = vadd.f32 %v2151, -1.4531521
        %v2168 = vadd.f32 %v2152, -1.4531521
        %v2169 = vadd.f32 %v2153, -1.4531521
        %v2170 = vadd.f32 %v2154, -1.4531521
        %v2171 = vadd.f32 %v2155, -1.4531521
        %v2172 = vadd.f32 %v2156, -1.4531521
        %v2173 = vadd.f32 %v2157, -1.4531521
        %v2174 = vadd.f32 %v2158, -1.4531521
        %v2175 = vadd.f32 %v2159, -1.4531521
        %v2176 = vmul.f32 %v2160, %v2128
        %v2177 = vmul.f32 %v2161, %v2129
        %v2178 = vmul.f32 %v2162, %v2130
        %v2179 = vmul.f32 %v2163, %v2131
        %v2180 = vmul.f32 %v2164, %v2132
        %v2181 = vmul.f32 %v2165, %v2133
        %v2182 = vmul.f32 %v2166, %v2134
        %v2183 = vmul.f32 %v2167, %v2135
        %v2184 = vmul.f32 %v2168, %v2136
        %v2185 = vmul.f32 %v2169, %v2137
        %v2186 = vmul.f32 %v2170, %v2138
        %v2187 = vmul.f32 %v2171, %v2139
        %v2188 = vmul.f32 %v2172, %v2140
        %v2189 = vmul.f32 %v2173, %v2141
        %v2190 = vmul.f32 %v2174, %v2142
        %v2191 = vmul.f32 %v2175, %v2143
        %v2192 = vadd.f32 %v2176, 1.4214138
        %v2193 = vadd.f32 %v2177, 1.4214138
        %v2194 = vadd.f32 %v2178, 1.4214138
        %v2195 = vadd.f32 %v2179, 1.4214138
        %v2196 = vadd.f32 %v2180, 1.4214138
        %v2197 = vadd.f32 %v2181, 1.4214138
        %v2198 = vadd.f32 %v2182, 1.4214138
        %v2199 = vadd.f32 %v2183, 1.4214138
        %v2200 = vadd.f32 %v2184, 1.4214138
        %v2201 = vadd.f32 %v2185, 1.4214138
        %v2202 = vadd.f32 %v2186, 1.4214138
        %v2203 = vadd.f32 %v2187, 1.4214138
        %v2204 = vadd.f32 %v2188, 1.4214138
        %v2205 = vadd.f32 %v2189, 1.4214138
        %v2206 = vadd.f32 %v2190, 1.4214138
        %v2207 = vadd.f32 %v2191, 1.4214138
        %v2208 = vmul.f32 %v2192, %v2128
        %v2209 = vmul.f32 %v2193, %v2129
        %v2210 = vmul.f32 %v2194, %v2130
        %v2211 = vmul.f32 %v2195, %v2131
        %v2212 = vmul.f32 %v2196, %v2132
        %v2213 = vmul.f32 %v2197, %v2133
        %v2214 = vmul.f32 %v2198, %v2134
        %v2215 = vmul.f32 %v2199, %v2135
        %v2216 = vmul.f32 %v2200, %v2136
        %v2217 = vmul.f32 %v2201, %v2137
        %v2218 = vmul.f32 %v2202, %v2138
        %v2219 = vmul.f32 %v2203, %v2139
        %v2220 = vmul.f32 %v2204, %v2140
        %v2221 = vmul.f32 %v2205, %v2141
        %v2222 = vmul.f32 %v2206, %v2142
        %v2223 = vmul.f32 %v2207, %v2143
        %v2224 = vadd.f32 %v2208, -0.28449672
        %v2225 = vadd.f32 %v2209, -0.28449672
        %v2226 = vadd.f32 %v2210, -0.28449672
        %v2227 = vadd.f32 %v2211, -0.28449672
        %v2228 = vadd.f32 %v2212, -0.28449672
        %v2229 = vadd.f32 %v2213, -0.28449672
        %v2230 = vadd.f32 %v2214, -0.28449672
        %v2231 = vadd.f32 %v2215, -0.28449672
        %v2232 = vadd.f32 %v2216, -0.28449672
        %v2233 = vadd.f32 %v2217, -0.28449672
        %v2234 = vadd.f32 %v2218, -0.28449672
        %v2235 = vadd.f32 %v2219, -0.28449672
        %v2236 = vadd.f32 %v2220, -0.28449672
        %v2237 = vadd.f32 %v2221, -0.28449672
        %v2238 = vadd.f32 %v2222, -0.28449672
        %v2239 = vadd.f32 %v2223, -0.28449672
        %v2240 = vmul.f32 %v2224, %v2128
        %v2241 = vmul.f32 %v2225, %v2129
        %v2242 = vmul.f32 %v2226, %v2130
        %v2243 = vmul.f32 %v2227, %v2131
        %v2244 = vmul.f32 %v2228, %v2132
        %v2245 = vmul.f32 %v2229, %v2133
        %v2246 = vmul.f32 %v2230, %v2134
        %v2247 = vmul.f32 %v2231, %v2135
        %v2248 = vmul.f32 %v2232, %v2136
        %v2249 = vmul.f32 %v2233, %v2137
        %v2250 = vmul.f32 %v2234, %v2138
        %v2251 = vmul.f32 %v2235, %v2139
        %v2252 = vmul.f32 %v2236, %v2140
        %v2253 = vmul.f32 %v2237, %v2141
        %v2254 = vmul.f32 %v2238, %v2142
        %v2255 = vmul.f32 %v2239, %v2143
        %v2256 = vadd.f32 %v2240, 0.2548296
        %v2257 = vadd.f32 %v2241, 0.2548296
        %v2258 = vadd.f32 %v2242, 0.2548296
        %v2259 = vadd.f32 %v2243, 0.2548296
        %v2260 = vadd.f32 %v2244, 0.2548296
        %v2261 = vadd.f32 %v2245, 0.2548296
        %v2262 = vadd.f32 %v2246, 0.2548296
        %v2263 = vadd.f32 %v2247, 0.2548296
        %v2264 = vadd.f32 %v2248, 0.2548296
        %v2265 = vadd.f32 %v2249, 0.2548296
        %v2266 = vadd.f32 %v2250, 0.2548296
        %v2267 = vadd.f32 %v2251, 0.2548296
        %v2268 = vadd.f32 %v2252, 0.2548296
        %v2269 = vadd.f32 %v2253, 0.2548296
        %v2270 = vadd.f32 %v2254, 0.2548296
        %v2271 = vadd.f32 %v2255, 0.2548296
        %v2272 = vmul.f32 %v2256, %v2128
        %v2273 = vmul.f32 %v2257, %v2129
        %v2274 = vmul.f32 %v2258, %v2130
        %v2275 = vmul.f32 %v2259, %v2131
        %v2276 = vmul.f32 %v2260, %v2132
        %v2277 = vmul.f32 %v2261, %v2133
        %v2278 = vmul.f32 %v2262, %v2134
        %v2279 = vmul.f32 %v2263, %v2135
        %v2280 = vmul.f32 %v2264, %v2136
        %v2281 = vmul.f32 %v2265, %v2137
        %v2282 = vmul.f32 %v2266, %v2138
        %v2283 = vmul.f32 %v2267, %v2139
        %v2284 = vmul.f32 %v2268, %v2140
        %v2285 = vmul.f32 %v2269, %v2141
        %v2286 = vmul.f32 %v2270, %v2142
        %v2287 = vmul.f32 %v2271, %v2143
        %v2288 = vsub.f32 0.0, %v2080
        %v2289 = vsub.f32 0.0, %v2081
        %v2290 = vsub.f32 0.0, %v2082
        %v2291 = vsub.f32 0.0, %v2083
        %v2292 = vsub.f32 0.0, %v2084
        %v2293 = vsub.f32 0.0, %v2085
        %v2294 = vsub.f32 0.0, %v2086
        %v2295 = vsub.f32 0.0, %v2087
        %v2296 = vsub.f32 0.0, %v2088
        %v2297 = vsub.f32 0.0, %v2089
        %v2298 = vsub.f32 0.0, %v2090
        %v2299 = vsub.f32 0.0, %v2091
        %v2300 = vsub.f32 0.0, %v2092
        %v2301 = vsub.f32 0.0, %v2093
        %v2302 = vsub.f32 0.0, %v2094
        %v2303 = vsub.f32 0.0, %v2095
        %v2304 = vmul.f32 %v2288, %v2080
        %v2305 = vmul.f32 %v2289, %v2081
        %v2306 = vmul.f32 %v2290, %v2082
        %v2307 = vmul.f32 %v2291, %v2083
        %v2308 = vmul.f32 %v2292, %v2084
        %v2309 = vmul.f32 %v2293, %v2085
        %v2310 = vmul.f32 %v2294, %v2086
        %v2311 = vmul.f32 %v2295, %v2087
        %v2312 = vmul.f32 %v2296, %v2088
        %v2313 = vmul.f32 %v2297, %v2089
        %v2314 = vmul.f32 %v2298, %v2090
        %v2315 = vmul.f32 %v2299, %v2091
        %v2316 = vmul.f32 %v2300, %v2092
        %v2317 = vmul.f32 %v2301, %v2093
        %v2318 = vmul.f32 %v2302, %v2094
        %v2319 = vmul.f32 %v2303, %v2095
        %v2320 = vmul.f32 %v2304, 1.442695
        %v2321 = vpow.pop %v2320
        %v2322 = vmul.f32 %v2305, 1.442695
        %v2323 = vpow.pop %v2322
        %v2324 = vmul.f32 %v2306, 1.442695
        %v2325 = vpow.pop %v2324
        %v2326 = vmul.f32 %v2307, 1.442695
        %v2327 = vpow.pop %v2326
        %v2328 = vmul.f32 %v2308, 1.442695
        %v2329 = vpow.pop %v2328
        %v2330 = vmul.f32 %v2309, 1.442695
        %v2331 = vpow.pop %v2330
        %v2332 = vmul.f32 %v2310, 1.442695
        %v2333 = vpow.pop %v2332
        %v2334 = vmul.f32 %v2311, 1.442695
        %v2335 = vpow.pop %v2334
        %v2336 = vmul.f32 %v2312, 1.442695
        %v2337 = vpow.pop %v2336
        %v2338 = vmul.f32 %v2313, 1.442695
        %v2339 = vpow.pop %v2338
        %v2340 = vmul.f32 %v2314, 1.442695
        %v2341 = vpow.pop %v2340
        %v2342 = vmul.f32 %v2315, 1.442695
        %v2343 = vpow.pop %v2342
        %v2344 = vmul.f32 %v2316, 1.442695
        %v2345 = vpow.pop %v2344
        %v2346 = vmul.f32 %v2317, 1.442695
        %v2347 = vpow.pop %v2346
        %v2348 = vmul.f32 %v2318, 1.442695
        %v2349 = vpow.pop %v2348
        %v2350 = vmul.f32 %v2319, 1.442695
        %v2351 = vpow.pop %v2350
        %v2352 = vmul.f32 %v2272, %v2321
        %v2353 = vmul.f32 %v2273, %v2323
        %v2354 = vmul.f32 %v2274, %v2325
        %v2355 = vmul.f32 %v2275, %v2327
        %v2356 = vmul.f32 %v2276, %v2329
        %v2357 = vmul.f32 %v2277, %v2331
        %v2358 = vmul.f32 %v2278, %v2333
        %v2359 = vmul.f32 %v2279, %v2335
        %v2360 = vmul.f32 %v2280, %v2337
        %v2361 = vmul.f32 %v2281, %v2339
        %v2362 = vmul.f32 %v2282, %v2341
        %v2363 = vmul.f32 %v2283, %v2343
        %v2364 = vmul.f32 %v2284, %v2345
        %v2365 = vmul.f32 %v2285, %v2347
        %v2366 = vmul.f32 %v2286, %v2349
        %v2367 = vmul.f32 %v2287, %v2351
        %v2368 = vsub.f32 1.0, %v2352
        %v2369 = vsub.f32 1.0, %v2353
        %v2370 = vsub.f32 1.0, %v2354
        %v2371 = vsub.f32 1.0, %v2355
        %v2372 = vsub.f32 1.0, %v2356
        %v2373 = vsub.f32 1.0, %v2357
        %v2374 = vsub.f32 1.0, %v2358
        %v2375 = vsub.f32 1.0, %v2359
        %v2376 = vsub.f32 1.0, %v2360
        %v2377 = vsub.f32 1.0, %v2361
        %v2378 = vsub.f32 1.0, %v2362
        %v2379 = vsub.f32 1.0, %v2363
        %v2380 = vsub.f32 1.0, %v2364
        %v2381 = vsub.f32 1.0, %v2365
        %v2382 = vsub.f32 1.0, %v2366
        %v2383 = vsub.f32 1.0, %v2367
        %vm2384 = vcmp.ge.f32.partialorder %v2064, 0.0
        %vm2385 = vcmp.ge.f32.partialorder %v2065, 0.0
        %vm2386 = vcmp.ge.f32.partialorder %v2066, 0.0
        %vm2387 = vcmp.ge.f32.partialorder %v2067, 0.0
        %vm2388 = vcmp.ge.f32.partialorder %v2068, 0.0
        %vm2389 = vcmp.ge.f32.partialorder %v2069, 0.0
        %vm2390 = vcmp.ge.f32.partialorder %v2070, 0.0
        %vm2391 = vcmp.ge.f32.partialorder %v2071, 0.0
        %vm2392 = vcmp.ge.f32.partialorder %v2072, 0.0
        %vm2393 = vcmp.ge.f32.partialorder %v2073, 0.0
        %vm2394 = vcmp.ge.f32.partialorder %v2074, 0.0
        %vm2395 = vcmp.ge.f32.partialorder %v2075, 0.0
        %vm2396 = vcmp.ge.f32.partialorder %v2076, 0.0
        %vm2397 = vcmp.ge.f32.partialorder %v2077, 0.0
        %vm2398 = vcmp.ge.f32.partialorder %v2078, 0.0
        %vm2399 = vcmp.ge.f32.partialorder %v2079, 0.0
        %v2400 = vsub.f32 0.0, %v2368
        %v2401 = vsub.f32 0.0, %v2369
        %v2402 = vsub.f32 0.0, %v2370
        %v2403 = vsub.f32 0.0, %v2371
        %v2404 = vsub.f32 0.0, %v2372
        %v2405 = vsub.f32 0.0, %v2373
        %v2406 = vsub.f32 0.0, %v2374
        %v2407 = vsub.f32 0.0, %v2375
        %v2408 = vsub.f32 0.0, %v2376
        %v2409 = vsub.f32 0.0, %v2377
        %v2410 = vsub.f32 0.0, %v2378
        %v2411 = vsub.f32 0.0, %v2379
        %v2412 = vsub.f32 0.0, %v2380
        %v2413 = vsub.f32 0.0, %v2381
        %v2414 = vsub.f32 0.0, %v2382
        %v2415 = vsub.f32 0.0, %v2383
        %v2416 = vsel %vm2384, %v2368, %v2400
        %v2417 = vsel %vm2385, %v2369, %v2401
        %v2418 = vsel %vm2386, %v2370, %v2402
        %v2419 = vsel %vm2387, %v2371, %v2403
        %v2420 = vsel %vm2388, %v2372, %v2404
        %v2421 = vsel %vm2389, %v2373, %v2405
        %v2422 = vsel %vm2390, %v2374, %v2406
        %v2423 = vsel %vm2391, %v2375, %v2407
        %v2424 = vsel %vm2392, %v2376, %v2408
        %v2425 = vsel %vm2393, %v2377, %v2409
        %v2426 = vsel %vm2394, %v2378, %v2410
        %v2427 = vsel %vm2395, %v2379, %v2411
        %v2428 = vsel %vm2396, %v2380, %v2412
        %v2429 = vsel %vm2397, %v2381, %v2413
        %v2430 = vsel %vm2398, %v2382, %v2414
        %v2431 = vsel %vm2399, %v2383, %v2415
        %v2432 = vadd.f32 %v2416, 1.0
        %v2433 = vadd.f32 %v2417, 1.0
        %v2434 = vadd.f32 %v2418, 1.0
        %v2435 = vadd.f32 %v2419, 1.0
        %v2436 = vadd.f32 %v2420, 1.0
        %v2437 = vadd.f32 %v2421, 1.0
        %v2438 = vadd.f32 %v2422, 1.0
        %v2439 = vadd.f32 %v2423, 1.0
        %v2440 = vadd.f32 %v2424, 1.0
        %v2441 = vadd.f32 %v2425, 1.0
        %v2442 = vadd.f32 %v2426, 1.0
        %v2443 = vadd.f32 %v2427, 1.0
        %v2444 = vadd.f32 %v2428, 1.0
        %v2445 = vadd.f32 %v2429, 1.0
        %v2446 = vadd.f32 %v2430, 1.0
        %v2447 = vadd.f32 %v2431, 1.0
        %v2448 = vmul.f32 %v2048, %v2432
        %v2449 = vmul.f32 %v2049, %v2433
        %v2450 = vmul.f32 %v2050, %v2434
        %v2451 = vmul.f32 %v2051, %v2435
        %v2452 = vmul.f32 %v2052, %v2436
        %v2453 = vmul.f32 %v2053, %v2437
        %v2454 = vmul.f32 %v2054, %v2438
        %v2455 = vmul.f32 %v2055, %v2439
        %v2456 = vmul.f32 %v2056, %v2440
        %v2457 = vmul.f32 %v2057, %v2441
        %v2458 = vmul.f32 %v2058, %v2442
        %v2459 = vmul.f32 %v2059, %v2443
        %v2460 = vmul.f32 %v2060, %v2444
        %v2461 = vmul.f32 %v2061, %v2445
        %v2462 = vmul.f32 %v2062, %v2446
        %v2463 = vmul.f32 %v2063, %v2447
        %v2464 = vpack.c.bf16 %v2452, %v2448
        %v2465 = vpack.c.bf16 %v2453, %v2449
        %v2466 = vpack.c.bf16 %v2454, %v2450
        %v2467 = vpack.c.bf16 %v2455, %v2451
        %v2468 = vpack.c.bf16 %v2460, %v2456
        %v2469 = vpack.c.bf16 %v2461, %v2457
        %v2470 = vpack.c.bf16 %v2462, %v2458
        %v2471 = vpack.c.bf16 %v2463, %v2459
        %v2472 = vld [vmem:[#allocation11] sm:$0xf]
        %v2473 = vld [vmem:[#allocation11 + $0x4] sm:$0xf]
        %v2474 = vld [vmem:[#allocation11 + $0x8] sm:$0xf]
        %v2475 = vld [vmem:[#allocation11 + $0xc] sm:$0xf]
        %v2476 = vld [vmem:[#allocation11 + $0x10] sm:$0xf]
        %v2477 = vld [vmem:[#allocation11 + $0x14] sm:$0xf]
        %v2478 = vld [vmem:[#allocation11 + $0x18] sm:$0xf]
        %v2479 = vld [vmem:[#allocation11 + $0x1c] sm:$0xf]
        %v2480 = vld [vmem:[#allocation11 + $0x20] sm:$0xf]
        %v2481 = vld [vmem:[#allocation11 + $0x24] sm:$0xf]
        %v2482 = vld [vmem:[#allocation11 + $0x28] sm:$0xf]
        %v2483 = vld [vmem:[#allocation11 + $0x2c] sm:$0xf]
        %v2484 = vld [vmem:[#allocation11 + $0x30] sm:$0xf]
        %v2485 = vld [vmem:[#allocation11 + $0x34] sm:$0xf]
        %v2486 = vld [vmem:[#allocation11 + $0x38] sm:$0xf]
        %v2487 = vld [vmem:[#allocation11 + $0x3c] sm:$0xf]
        %v2488 = vld [vmem:[#allocation11 + $0x40] sm:$0xf]
        %v2489 = vld [vmem:[#allocation11 + $0x44] sm:$0xf]
        %v2490 = vld [vmem:[#allocation11 + $0x48] sm:$0xf]
        %v2491 = vld [vmem:[#allocation11 + $0x4c] sm:$0xf]
        %v2492 = vld [vmem:[#allocation11 + $0x50] sm:$0xf]
        %v2493 = vld [vmem:[#allocation11 + $0x54] sm:$0xf]
        %v2494 = vld [vmem:[#allocation11 + $0x58] sm:$0xf]
        %v2495 = vld [vmem:[#allocation11 + $0x5c] sm:$0xf]
        %v2496 = vld [vmem:[#allocation11 + $0x60] sm:$0xf]
        %v2497 = vld [vmem:[#allocation11 + $0x64] sm:$0xf]
        %v2498 = vld [vmem:[#allocation11 + $0x68] sm:$0xf]
        %v2499 = vld [vmem:[#allocation11 + $0x6c] sm:$0xf]
        %v2500 = vld [vmem:[#allocation11 + $0x70] sm:$0xf]
        %v2501 = vld [vmem:[#allocation11 + $0x74] sm:$0xf]
        %v2502 = vld [vmem:[#allocation11 + $0x78] sm:$0xf]
        %v2503 = vld [vmem:[#allocation11 + $0x7c] sm:$0xf]
        %v2504 = vld [vmem:[#allocation11 + $0x80] sm:$0xf]
        %v2505 = vld [vmem:[#allocation11 + $0x84] sm:$0xf]
        %v2506 = vld [vmem:[#allocation11 + $0x88] sm:$0xf]
        %v2507 = vld [vmem:[#allocation11 + $0x8c] sm:$0xf]
        %v2508 = vld [vmem:[#allocation11 + $0x90] sm:$0xf]
        %v2509 = vld [vmem:[#allocation11 + $0x94] sm:$0xf]
        %v2510 = vld [vmem:[#allocation11 + $0x98] sm:$0xf]
        %v2511 = vld [vmem:[#allocation11 + $0x9c] sm:$0xf]
        %v2512 = vld [vmem:[#allocation11 + $0xa0] sm:$0xf]
        %v2513 = vld [vmem:[#allocation11 + $0xa4] sm:$0xf]
        %v2514 = vld [vmem:[#allocation11 + $0xa8] sm:$0xf]
        %v2515 = vld [vmem:[#allocation11 + $0xac] sm:$0xf]
        %v2516 = vld [vmem:[#allocation11 + $0xb0] sm:$0xf]
        %v2517 = vld [vmem:[#allocation11 + $0xb4] sm:$0xf]
        %v2518 = vld [vmem:[#allocation11 + $0xb8] sm:$0xf]
        %v2519 = vld [vmem:[#allocation11 + $0xbc] sm:$0xf]
        %v2520 = vld [vmem:[#allocation11 + $0xc0] sm:$0xf]
        %v2521 = vld [vmem:[#allocation11 + $0xc4] sm:$0xf]
        %v2522 = vld [vmem:[#allocation11 + $0xc8] sm:$0xf]
        %v2523 = vld [vmem:[#allocation11 + $0xcc] sm:$0xf]
        %v2524 = vld [vmem:[#allocation11 + $0xd0] sm:$0xf]
        %v2525 = vld [vmem:[#allocation11 + $0xd4] sm:$0xf]
        %v2526 = vld [vmem:[#allocation11 + $0xd8] sm:$0xf]
        %v2527 = vld [vmem:[#allocation11 + $0xdc] sm:$0xf]
        %v2528 = vld [vmem:[#allocation11 + $0xe0] sm:$0xf]
        %v2529 = vld [vmem:[#allocation11 + $0xe4] sm:$0xf]
        %v2530 = vld [vmem:[#allocation11 + $0xe8] sm:$0xf]
        %v2531 = vld [vmem:[#allocation11 + $0xec] sm:$0xf]
        %v2532 = vld [vmem:[#allocation11 + $0xf0] sm:$0xf]
        %v2533 = vld [vmem:[#allocation11 + $0xf4] sm:$0xf]
        %v2534 = vld [vmem:[#allocation11 + $0xf8] sm:$0xf]
        %v2535 = vld [vmem:[#allocation11 + $0xfc] sm:$0xf]
        %v2600 = vunpack.c.l.b16 %v2472
        %v2601 = vunpack.c.l.b16 %v2473
        %v2602 = vunpack.c.l.b16 %v2474
        %v2603 = vunpack.c.l.b16 %v2475
        %v2604 = vunpack.c.l.b16 %v2476
        %v2605 = vunpack.c.l.b16 %v2477
        %v2606 = vunpack.c.l.b16 %v2478
        %v2607 = vunpack.c.l.b16 %v2479
        %v2608 = vunpack.c.l.b16 %v2480
        %v2609 = vunpack.c.l.b16 %v2481
        %v2610 = vunpack.c.l.b16 %v2482
        %v2611 = vunpack.c.l.b16 %v2483
        %v2612 = vunpack.c.l.b16 %v2484
        %v2613 = vunpack.c.l.b16 %v2485
        %v2614 = vunpack.c.l.b16 %v2486
        %v2615 = vunpack.c.l.b16 %v2487
        %v2616 = vunpack.c.l.b16 %v2488
        %v2617 = vunpack.c.l.b16 %v2489
        %v2618 = vunpack.c.l.b16 %v2490
        %v2619 = vunpack.c.l.b16 %v2491
        %v2620 = vunpack.c.l.b16 %v2492
        %v2621 = vunpack.c.l.b16 %v2493
        %v2622 = vunpack.c.l.b16 %v2494
        %v2623 = vunpack.c.l.b16 %v2495
        %v2624 = vunpack.c.l.b16 %v2496
        %v2625 = vunpack.c.l.b16 %v2497
        %v2626 = vunpack.c.l.b16 %v2498
        %v2627 = vunpack.c.l.b16 %v2499
        %v2628 = vunpack.c.l.b16 %v2500
        %v2629 = vunpack.c.l.b16 %v2501
        %v2630 = vunpack.c.l.b16 %v2502
        %v2631 = vunpack.c.l.b16 %v2503
        %v2632 = vunpack.c.l.b16 %v2504
        %v2633 = vunpack.c.l.b16 %v2505
        %v2634 = vunpack.c.l.b16 %v2506
        %v2635 = vunpack.c.l.b16 %v2507
        %v2636 = vunpack.c.l.b16 %v2508
        %v2637 = vunpack.c.l.b16 %v2509
        %v2638 = vunpack.c.l.b16 %v2510
        %v2639 = vunpack.c.l.b16 %v2511
        %v2640 = vunpack.c.l.b16 %v2512
        %v2641 = vunpack.c.l.b16 %v2513
        %v2642 = vunpack.c.l.b16 %v2514
        %v2643 = vunpack.c.l.b16 %v2515
        %v2644 = vunpack.c.l.b16 %v2516
        %v2645 = vunpack.c.l.b16 %v2517
        %v2646 = vunpack.c.l.b16 %v2518
        %v2647 = vunpack.c.l.b16 %v2519
        %v2648 = vunpack.c.l.b16 %v2520
        %v2649 = vunpack.c.l.b16 %v2521
        %v2650 = vunpack.c.l.b16 %v2522
        %v2651 = vunpack.c.l.b16 %v2523
        %v2652 = vunpack.c.l.b16 %v2524
        %v2653 = vunpack.c.l.b16 %v2525
        %v2654 = vunpack.c.l.b16 %v2526
        %v2655 = vunpack.c.l.b16 %v2527
        %v2656 = vunpack.c.l.b16 %v2528
        %v2657 = vunpack.c.l.b16 %v2529
        %v2658 = vunpack.c.l.b16 %v2530
        %v2659 = vunpack.c.l.b16 %v2531
        %v2660 = vunpack.c.l.b16 %v2532
        %v2661 = vunpack.c.l.b16 %v2533
        %v2662 = vunpack.c.l.b16 %v2534
        %v2663 = vunpack.c.l.b16 %v2535
        %v2664 = vpack.c.b16 %v2601, %v2600
        %v2665 = vpack.c.b16 %v2603, %v2602
        %v2666 = vpack.c.b16 %v2605, %v2604
        %v2667 = vpack.c.b16 %v2607, %v2606
        %v2668 = vpack.c.b16 %v2609, %v2608
        %v2669 = vpack.c.b16 %v2611, %v2610
        %v2670 = vpack.c.b16 %v2613, %v2612
        %v2671 = vpack.c.b16 %v2615, %v2614
        %v2672 = vpack.c.b16 %v2617, %v2616
        %v2673 = vpack.c.b16 %v2619, %v2618
        %v2674 = vpack.c.b16 %v2621, %v2620
        %v2675 = vpack.c.b16 %v2623, %v2622
        %v2676 = vpack.c.b16 %v2625, %v2624
        %v2677 = vpack.c.b16 %v2627, %v2626
        %v2678 = vpack.c.b16 %v2629, %v2628
        %v2679 = vpack.c.b16 %v2631, %v2630
        %v2680 = vpack.c.b16 %v2633, %v2632
        %v2681 = vpack.c.b16 %v2635, %v2634
        %v2682 = vpack.c.b16 %v2637, %v2636
        %v2683 = vpack.c.b16 %v2639, %v2638
        %v2684 = vpack.c.b16 %v2641, %v2640
        %v2685 = vpack.c.b16 %v2643, %v2642
        %v2686 = vpack.c.b16 %v2645, %v2644
        %v2687 = vpack.c.b16 %v2647, %v2646
        %v2688 = vpack.c.b16 %v2649, %v2648
        %v2689 = vpack.c.b16 %v2651, %v2650
        %v2690 = vpack.c.b16 %v2653, %v2652
        %v2691 = vpack.c.b16 %v2655, %v2654
        %v2692 = vpack.c.b16 %v2657, %v2656
        %v2693 = vpack.c.b16 %v2659, %v2658
        %v2694 = vpack.c.b16 %v2661, %v2660
        %v2695 = vpack.c.b16 %v2663, %v2662
        %2728 = vmatprep.subr.bf16.mxu0 0
        %2729 = vmatpush1.bf16.msra.mxu0 %v2664
        %2730 = vmatprep.subr.bf16.mxu0 0
        %2731 = vmatpush1.bf16.msra.mxu0 %v2665
        %2732 = vmatprep.subr.bf16.mxu0 0
        %2733 = vmatpush1.bf16.msra.mxu0 %v2666
        %2734 = vmatprep.subr.bf16.mxu0 0
        %2735 = vmatpush1.bf16.msra.mxu0 %v2667
        %2736 = vmatprep.subr.bf16.mxu0 0
        %2737 = vmatpush1.bf16.msra.mxu0 %v2668
        %2738 = vmatprep.subr.bf16.mxu0 0
        %2739 = vmatpush1.bf16.msra.mxu0 %v2669
        %2740 = vmatprep.subr.bf16.mxu0 0
        %2741 = vmatpush1.bf16.msra.mxu0 %v2670
        %2742 = vmatprep.subr.bf16.mxu0 0
        %2743 = vmatpush1.bf16.msra.mxu0 %v2671
        %2744 = vmatprep.subr.bf16.mxu0 0
        %2745 = vmatpush1.bf16.msra.mxu0 %v2672
        %2746 = vmatprep.subr.bf16.mxu0 0
        %2747 = vmatpush1.bf16.msra.mxu0 %v2673
        %2748 = vmatprep.subr.bf16.mxu0 0
        %2749 = vmatpush1.bf16.msra.mxu0 %v2674
        %2750 = vmatprep.subr.bf16.mxu0 0
        %2751 = vmatpush1.bf16.msra.mxu0 %v2675
        %2752 = vmatprep.subr.bf16.mxu0 0
        %2753 = vmatpush1.bf16.msra.mxu0 %v2676
        %2754 = vmatprep.subr.bf16.mxu0 0
        %2755 = vmatpush1.bf16.msra.mxu0 %v2677
        %2756 = vmatprep.subr.bf16.mxu0 0
        %2757 = vmatpush1.bf16.msra.mxu0 %v2678
        %2758 = vmatprep.subr.bf16.mxu0 0
        %2759 = vmatpush1.bf16.msra.mxu0 %v2679
        %2760 = vmatprep.mubr.bf16.mxu0 %v2465
        %2761 = vmatmul.mubr.bf16.gmra.mrb[0].mxu0 %v2464
        %v2762 = vpop.f32.mrb[0].mxu0
        %v2763 = vadd.f32 %v426, %v2762
        %v2764 = vpop.f32.mrb[0].mxu0
        %v2765 = vpop.f32.mrb[0].mxu0
        %v2766 = vadd.f32 %v426, %v2765
        %v2767 = vpop.f32.mrb[0].mxu0
        %2768 = vmatprep.mubr.bf16.mxu0 %v2469
        %2769 = vmatmul.mubr.bf16.gmra.mrb[0].mxu0 %v2468
        %v2770 = vpop.f32.mrb[0].mxu0
        %v2771 = vadd.f32 %v426, %v2770
        %v2772 = vpop.f32.mrb[0].mxu0
        %v2773 = vpop.f32.mrb[0].mxu0
        %v2774 = vadd.f32 %v426, %v2773
        %v2775 = vpop.f32.mrb[0].mxu0
        %2776 = vdwg.mxu0
        %2777 = vmatprep.subr.bf16.mxu0 0
        %2778 = vmatpush1.bf16.msra.mxu0 %v2680
        %2779 = vmatprep.subr.bf16.mxu0 0
        %2780 = vmatpush1.bf16.msra.mxu0 %v2681
        %2781 = vmatprep.subr.bf16.mxu0 0
        %2782 = vmatpush1.bf16.msra.mxu0 %v2682
        %2783 = vmatprep.subr.bf16.mxu0 0
        %2784 = vmatpush1.bf16.msra.mxu0 %v2683
        %2785 = vmatprep.subr.bf16.mxu0 0
        %2786 = vmatpush1.bf16.msra.mxu0 %v2684
        %2787 = vmatprep.subr.bf16.mxu0 0
        %2788 = vmatpush1.bf16.msra.mxu0 %v2685
        %2789 = vmatprep.subr.bf16.mxu0 0
        %2790 = vmatpush1.bf16.msra.mxu0 %v2686
        %2791 = vmatprep.subr.bf16.mxu0 0
        %2792 = vmatpush1.bf16.msra.mxu0 %v2687
        %2793 = vmatprep.subr.bf16.mxu0 0
        %2794 = vmatpush1.bf16.msra.mxu0 %v2688
        %2795 = vmatprep.subr.bf16.mxu0 0
        %2796 = vmatpush1.bf16.msra.mxu0 %v2689
        %2797 = vmatprep.subr.bf16.mxu0 0
        %2798 = vmatpush1.bf16.msra.mxu0 %v2690
        %2799 = vmatprep.subr.bf16.mxu0 0
        %2800 = vmatpush1.bf16.msra.mxu0 %v2691
        %2801 = vmatprep.subr.bf16.mxu0 0
        %2802 = vmatpush1.bf16.msra.mxu0 %v2692
        %2803 = vmatprep.subr.bf16.mxu0 0
        %2804 = vmatpush1.bf16.msra.mxu0 %v2693
        %2805 = vmatprep.subr.bf16.mxu0 0
        %2806 = vmatpush1.bf16.msra.mxu0 %v2694
        %2807 = vmatprep.subr.bf16.mxu0 0
        %2808 = vmatpush1.bf16.msra.mxu0 %v2695
        %2809 = vmatprep.mubr.bf16.mxu0 %v2467
        %2810 = vmatmul.mubr.bf16.gmra.mrb[0].mxu0 %v2466
        %v2811 = vpop.f32.mrb[0].mxu0
        %v2812 = vadd.f32 %v2763, %v2811
        %v2813 = vpop.f32.mrb[0].mxu0
        %v2814 = vpop.f32.mrb[0].mxu0
        %v2815 = vadd.f32 %v2766, %v2814
        %v2816 = vpop.f32.mrb[0].mxu0
        %2817 = vmatprep.mubr.bf16.mxu0 %v2471
        %2818 = vmatmul.mubr.bf16.gmra.mrb[0].mxu0 %v2470
        %v2819 = vpop.f32.mrb[0].mxu0
        %v2820 = vadd.f32 %v2771, %v2819
        %v2821 = vpop.f32.mrb[0].mxu0
        %v2822 = vpop.f32.mrb[0].mxu0
        %v2823 = vadd.f32 %v2774, %v2822
        %v2824 = vpop.f32.mrb[0].mxu0
        %2825 = vdwg.mxu0
        %v2826 = vadd.f32 %v1671, %v2812
        %v2827 = vadd.f32 %v1672, %v2815
        %v2828 = vadd.f32 %v1673, %v2820
        %v2829 = vadd.f32 %v1674, %v2823
        %2830 = vst [vmem:[%s409] sm:$0xff] %v2826
        %2831 = vst [vmem:[%s409 + $0x8] sm:$0xff] %v2827
        %2832 = vst [vmem:[%s409 + $0x10] sm:$0xff] %v2828
        %2833 = vst [vmem:[%s409 + $0x18] sm:$0xff] %v2829
        %s2834 = sand.u32 %s197, 1
        %s2835 = scalar_lea.sflag [#allocation5], %s2834
        %s2836 = sand.u32 %s197, 1
        %s2837 = smul.addr %s2836, 32
        %s2838 = scalar_lea.vmem [#allocation14], %s2837
        %s2839 = sand.u32 %s223, 1
        %s2840 = scalar_lea.sflag [#allocation16], %s2839
        %s2841 = sand.u32 %s223, 1
        %s2842 = smul.addr %s2841, 128
        %s2843 = scalar_lea.vmem [#allocation15], %s2842
        // Predicated region
        $region73: #{tpu_custom_call.1} parent=47 // pred_check
          %p2844 = pneg %p207
        $region74: #{tpu_custom_call.1} parent=47 // pred_check_branch
          %2846 = sbr.rel (%p2844) target = $region76
        $region75: #{tpu_custom_call.1} parent=47 // pred_region
          %s2848 = ssub.s32 512, 512
          %2849 = vsyncadd %s2835, %s2848
          %s2850 = smul.addr %s32, 4
          %s2851 = smul.addr %s2850, 128
          %s2852 = scalar_lea.hbm %s7, %s2851
          %s2853 = sshll.u32 %s2838, 4
          %s2854 = int_to_ptr.vmem [resolvable:$true] %s2853
          %2859 = dma.vmem_to_hbm [thread:$0]  %s2854, 512, %s2852, %s2835, 128, 128, 8
        $region76: #{tpu_custom_call.1} parent=47 // pred_fallthru
          _
        // Predicated region
        $region77: #{tpu_custom_call.1} parent=47 // pred_check
          %p2860 = pneg %p233
        $region78: #{tpu_custom_call.1} parent=47 // pred_check_branch
          %2862 = sbr.rel (%p2860) target = $region80
        $region79: #{tpu_custom_call.1} parent=47 // pred_region
          %s2864 = ssub.s32 2048, 2048
          %2865 = vsyncadd %s2840, %s2864
          %s2866 = smul.addr %s32, 16
          %s2867 = smul.addr %s2866, 128
          %s2868 = scalar_lea.hbm %s8, %s2867
          %s2869 = sshll.u32 %s2843, 4
          %s2870 = int_to_ptr.vmem [resolvable:$true] %s2869
          %2875 = dma.vmem_to_hbm [thread:$0]  %s2870, 2048, %s2868, %s2840, 128, 128, 8
        $region80: #{tpu_custom_call.1} parent=47 // pred_fallthru
          _
      $region48: #{tpu_custom_call.1} parent=5 // pred_fallthru
        _
      %p2876 = scmp.le.s32.totalorder 2, %s27
      // Predicated region
      $region81: #{tpu_custom_call.1} parent=5 // pred_check
        %p2877 = pneg %p2876
      $region82: #{tpu_custom_call.1} parent=5 // pred_check_branch
        %2879 = sbr.rel (%p2877) target = $region84
      $region83: #{tpu_custom_call.1} parent=5 // pred_region
        %s2880 = ssub.s32 %s27, 2
        // Predicated region
        $region85: #{tpu_custom_call.1} parent=83 // pred_check
          %p2881 = pneg %p213
        $region86: #{tpu_custom_call.1} parent=83 // pred_check_branch
          %2883 = sbr.rel (%p2881) target = $region88
        $region87: #{tpu_custom_call.1} parent=83 // pred_region
          %s2884 = sand.u32 %s198, 1
          %s2885 = scalar_lea.sflag [#allocation5], %s2884
          %s2886 = sand.u32 %s198, 1
          %s2887 = smul.addr %s2886, 32
          %s2888 = scalar_lea.vmem [#allocation14], %s2887
          %2889 = dma.done %s2885, 512
        $region88: #{tpu_custom_call.1} parent=83 // pred_fallthru
          _
        // Predicated region
        $region89: #{tpu_custom_call.1} parent=83 // pred_check
          %p2890 = pneg %p239
        $region90: #{tpu_custom_call.1} parent=83 // pred_check_branch
          %2892 = sbr.rel (%p2890) target = $region92
        $region91: #{tpu_custom_call.1} parent=83 // pred_region
          %s2893 = sand.u32 %s224, 1
          %s2894 = scalar_lea.sflag [#allocation16], %s2893
          %s2895 = sand.u32 %s224, 1
          %s2896 = smul.addr %s2895, 128
          %s2897 = scalar_lea.vmem [#allocation15], %s2896
          %2898 = dma.done %s2894, 2048
        $region92: #{tpu_custom_call.1} parent=83 // pred_fallthru
          _
      $region84: #{tpu_custom_call.1} parent=5 // pred_fallthru
        _
    $region6: #{tpu_custom_call.1} parent=1 // loop_footer
      %s31 = sadd.s32 1, %s27
    $region7: #{tpu_custom_call.1} parent=1 // loop_footer_branch
      %26 = sbr.rel target = $region3
    $region8: #{tpu_custom_call.1} parent=1 // loop_exit
      _
    %2899 = vsyncpa [#allocation4], 1
    %s2900 = scalar_lea.sflag [#allocation4], 1
    %2901 = vsyncpa %s2900, 1
    %2902 = vsyncpa [#allocation7], 1
    %2903 = vsyncpa [#allocation10], 1
    %2904 = vsyncpa [#allocation13], 1
    %2905 = vsyncpa [#allocation5], 1
    %s2906 = scalar_lea.sflag [#allocation5], 1
    %2907 = vsyncpa %s2906, 1
    %2908 = vsyncpa [#allocation16], 1
    %s2909 = scalar_lea.sflag [#allocation16], 1
    %2910 = vsyncpa %s2909, 1

</llo_original>
